<compile_context>
chip_gen: v5e
topology: v5e:2x2
jax: 0.10.0
libtpu: 0.0.40
codegen_flags: <defaults>
</compile_context>

<pallas_src>
import functools

import jax
import jax.numpy as jnp
from jax.experimental import pallas as pl
from jax.experimental.pallas import tpu as pltpu


# --------------------------------------------------------------------------
# Packed-parameter layout (static, derived from dims only)
# --------------------------------------------------------------------------
def _round_up(n, m):
    return ((n + m - 1) // m) * m


def _decoder_layout(input_dim, hidden_dim, n_features, seq_len):
    """Row/column layout of the single packed (rows, pack_w) f32 buffer."""
    D, H, F, S = input_dim, hidden_dim, n_features, seq_len
    g1 = _round_up(D, 128)          # per-gate lane stride, layer 1
    g2 = _round_up(H, 128)          # per-gate lane stride, layer 2
    pack_w = max(4 * g1, 4 * g2, _round_up(max(F, S * F), 128))
    r_wih1 = 0
    r_whh1 = r_wih1 + _round_up(D, 8)
    r_b1 = r_whh1 + _round_up(D, 8)
    r_w2f = r_b1 + 8
    r_b2 = r_w2f + _round_up(D + H, 8)
    r_wout = r_b2 + 8
    r_bout = r_wout + _round_up(H, 8)
    n_rows = _round_up(r_bout + 1, 8)
    rows = (r_wih1, r_whh1, r_b1, r_w2f, r_b2, r_wout, r_bout)
    return g1, g2, pack_w, rows, n_rows


def pack_decoder_params(params, *, seq_len, n_features, input_dim):
    """Pack all decoder weights/biases into one (rows, pack_w) f32 buffer.

    Gate weights are padded so each gate occupies a 128-lane-aligned slot;
    layer-2's W_ih / W_hh are pre-fused (stacked along the contraction dim);
    the output bias is pre-tiled to the (S*F) lane layout of the kernel output.
    Call once, outside jit.
    """
    hidden_dim = 2 * input_dim
    D, H, F, S = input_dim, hidden_dim, n_features, seq_len
    wih1, whh1, b1, wih2, whh2, b2, wout, bout = params
    g1, g2, pack_w, rows, n_rows = _decoder_layout(D, H, F, S)
    r_wih1, r_whh1, r_b1, r_w2f, r_b2, r_wout, r_bout = rows

    def pad_gates(w, hd, g):
        # (in, 4*hd) -> (in, 4*g): each gate padded out to g lanes.
        n_in = w.shape[0]
        w4 = w.reshape(n_in, 4, hd)
        w4 = jnp.pad(w4, ((0, 0), (0, 0), (0, g - hd)))
        return w4.reshape(n_in, 4 * g)

    w2f = jnp.concatenate([wih2, whh2], axis=0)       # (D+H, 4H) fused layer-2

    buf = jnp.zeros((n_rows, pack_w), jnp.float32)

    def put(buf, r, block):
        return buf.at[r:r + block.shape[0], :block.shape[1]].set(block)

    buf = put(buf, r_wih1, pad_gates(wih1, D, g1))
    buf = put(buf, r_whh1, pad_gates(whh1, D, g1))
    buf = put(buf, r_b1, pad_gates(b1, D, g1))
    buf = put(buf, r_w2f, pad_gates(w2f, H, g2))
    buf = put(buf, r_b2, pad_gates(b2, H, g2))
    buf = put(buf, r_wout, wout)
    buf = put(buf, r_bout, jnp.tile(bout, (1, S)))    # matches (S, F) lane order
    return buf


# --------------------------------------------------------------------------
# Kernel: full decoder forward for one batch tile.
# --------------------------------------------------------------------------
def decoder_kernel(x_ref, pk_ref, y_ref, *,
                   seq_len, n_features, input_dim, hidden_dim,
                   gate_w1, gate_w2, rows):
    bt = x_ref.shape[0]
    D, H, F, S = input_dim, hidden_dim, n_features, seq_len
    G1, G2 = gate_w1, gate_w2
    r_wih1, r_whh1, r_b1, r_w2f, r_b2, r_wout, r_bout = rows

    # Static sub-views of the single packed parameter buffer (one DMA total;
    # all row offsets are multiples of 8, all lane offsets are 0).
    wih1 = pk_ref[pl.ds(r_wih1, D), pl.ds(0, 4 * G1)]        # (D, 4*G1)
    whh1 = pk_ref[pl.ds(r_whh1, D), pl.ds(0, 4 * G1)]        # (D, 4*G1)
    b1 = pk_ref[pl.ds(r_b1, 1), pl.ds(0, 4 * G1)]            # (1, 4*G1)
    w2f = pk_ref[pl.ds(r_w2f, D + H), pl.ds(0, 4 * G2)]      # (D+H, 4*G2) fused
    b2 = pk_ref[pl.ds(r_b2, 1), pl.ds(0, 4 * G2)]            # (1, 4*G2)
    wout = pk_ref[pl.ds(r_wout, H), pl.ds(0, F)]             # (H, F)
    bout = pk_ref[pl.ds(r_bout, 1), pl.ds(0, S * F)]         # (1, S*F), pre-tiled

    # Layer-1 input projection is time-invariant (same x every step): compute
    # once, with b1 folded in.
    xp1 = jnp.dot(x_ref[...], wih1,
                  preferred_element_type=jnp.float32) + b1   # (bt, 4*G1)
    # Hoist the layer-2 bias broadcast (JAX does not CSE broadcast_in_dim;
    # the unrolled loop would otherwise emit S copies).
    b2b = jnp.broadcast_to(b2, (bt, 4 * G2))

    def lstm_cell(pre, c, hd, g):
        # PyTorch gate order [i, f, g, o]; every gate starts at a 128-lane
        # aligned offset, so the cell math is plain full-vreg VPU work.
        i = jax.nn.sigmoid(pre[:, 0 * g:0 * g + hd])
        f = jax.nn.sigmoid(pre[:, 1 * g:1 * g + hd])
        gg = jnp.tanh(pre[:, 2 * g:2 * g + hd])
        o = jax.nn.sigmoid(pre[:, 3 * g:3 * g + hd])
        c_new = f * c + i * gg
        return o * jnp.tanh(c_new), c_new

    h1 = jnp.zeros((bt, D), jnp.float32)
    c1 = jnp.zeros((bt, D), jnp.float32)
    h2 = jnp.zeros((bt, H), jnp.float32)
    c2 = jnp.zeros((bt, H), jnp.float32)

    ys = []
    # Fully unrolled time recurrence: short static trip count.  (If seq_len
    # ever grows past ~16, switch to lax.fori_loop(..., unroll=k).)
    for _ in range(S):
        pre1 = xp1 + jnp.dot(h1, whh1, preferred_element_type=jnp.float32)
        h1, c1 = lstm_cell(pre1, c1, D, G1)

        # Layer-2 input + recurrent matmuls fused into one MXU op per step.
        hcat = jnp.concatenate([h1, h2], axis=1)             # (bt, D+H)
        pre2 = jnp.dot(hcat, w2f,
                       preferred_element_type=jnp.float32) + b2b
        h2, c2 = lstm_cell(pre2, c2, H, G2)

        # Per-step output Linear: off the recurrence chain (hides under MXU
        # slack); removes the h2-history VMEM scratch/round trip entirely.
        ys.append(jnp.dot(h2, wout, preferred_element_type=jnp.float32))

    # Single lane-dense store in (bt, S*F) layout (no trailing dim of 1).
    y_ref[...] = jnp.concatenate(ys, axis=1) + bout


# --------------------------------------------------------------------------
# Wrapper
# --------------------------------------------------------------------------
def decoder_forward(x, packed, *, seq_len, n_features, input_dim):
    hidden_dim = 2 * input_dim
    D, H, F, S = input_dim, hidden_dim, n_features, seq_len
    g1, g2, pack_w, rows, n_rows = _decoder_layout(D, H, F, S)
    assert packed.shape == (n_rows, pack_w), packed.shape

    B = x.shape[0]
    bp = B * F
    # torch's unsqueeze/repeat/reshape yields a time-invariant input whose
    # row p equals x[p // n_features]; pass just the (B*F, D) matrix.
    x_rep = jnp.repeat(x, F, axis=0)                         # (bp, D)

    # Batch tile: whole batch at these sizes; becomes a real "parallel" grid
    # axis (megacore sharding on v7x) once bp grows.
    bt = bp if bp <= 256 else 256
    grid = (pl.cdiv(bp, bt),)

    kernel = functools.partial(decoder_kernel,
                               seq_len=S, n_features=F,
                               input_dim=D, hidden_dim=H,
                               gate_w1=g1, gate_w2=g2, rows=rows)

    y2d = pl.pallas_call(
        kernel,
        out_shape=jax.ShapeDtypeStruct((bp, S * F), jnp.float32),
        grid_spec=pltpu.PrefetchScalarGridSpec(
            num_scalar_prefetch=0,
            grid=grid,
            in_specs=[
                pl.BlockSpec((bt, D), lambda i: (i, 0)),
                # Packed weights: one full-array block, constant index map ->
                # resident across batch-tile iterations (single DMA).
                pl.BlockSpec((n_rows, pack_w), lambda i: (0, 0)),
            ],
            out_specs=pl.BlockSpec((bt, S * F), lambda i: (i, 0)),
        ),
        compiler_params=pltpu.CompilerParams(
            dimension_semantics=("parallel",),
            # Conservative, explicit budget (safe on v5e/v6e's 128 MiB and
            # v7x's 64 MiB per-TC VMEM); usage here is < 1 MiB.
            vmem_limit_bytes=32 * 1024 * 1024,
        ),
    )(x_rep, packed)

    return y2d.reshape(bp, S, F)


# --------------------------------------------------------------------------
# Pure-JAX reference (original tiled / time-major semantics of the module, so
# the hoists / fusion / packing in the kernel are validated against the spec).
# --------------------------------------------------------------------------
def _lstm_ref(x_tm, wih, whh, b, H):
    B = x_tm.shape[1]

    def step(carry, x_t):
        h, c = carry
        gates = x_t @ wih + h @ whh + b
        i = jax.nn.sigmoid(gates[:, :H])
        f = jax.nn.sigmoid(gates[:, H:2 * H])
        g = jnp.tanh(gates[:, 2 * H:3 * H])
        o = jax.nn.sigmoid(gates[:, 3 * H:])
        c = f * c + i * g
        h = o * jnp.tanh(c)
        return (h, c), h

    init = (jnp.zeros((B, H), jnp.float32), jnp.zeros((B, H), jnp.float32))
    _, hs = jax.lax.scan(step, init, x_tm)
    return hs


def decoder_reference(x, params, *, seq_len, n_features, input_dim):
    hidden_dim = 2 * input_dim
    (wih1, whh1, b1, wih2, whh2, b2, wout, bout) = params
    xr = jnp.tile(x[:, None, :], (1, seq_len, n_features))   # (B, S, D*F)
    xr = xr.reshape((-1, seq_len, input_dim))                # (B*F, S, D)
    x_tm = jnp.transpose(xr, (1, 0, 2))                      # (S, B*F, D)
    h1 = _lstm_ref(x_tm, wih1, whh1, b1[0], input_dim)
    h2 = _lstm_ref(h1, wih2, whh2, b2[0], hidden_dim)
    y = h2 @ wout + bout[0]                                  # (S, B*F, F)
    return jnp.transpose(y, (1, 0, 2))                       # (B*F, S, F)


# --------------------------------------------------------------------------
# Main
# --------------------------------------------------------------------------
def _make_params(key, input_dim, n_features):
    hidden_dim = 2 * input_dim
    ks = jax.random.split(key, 8)
    s1 = input_dim ** -0.5
    s2 = hidden_dim ** -0.5

    def u(k, shape, s):
        return jax.random.uniform(k, shape, jnp.float32, -s, s)

    # Weights stored pre-transposed ((in, 4*hidden) so the kernel does x @ W,
    # i.e. PyTorch W_ih.T / W_hh.T); biases are b_ih + b_hh folded into one
    # (1, 4*hidden) row; output layer likewise W_out.T and a (1, F) bias.
    return (
        u(ks[0], (input_dim, 4 * input_dim), s1),        # W_ih1^T
        u(ks[1], (input_dim, 4 * input_dim), s1),        # W_hh1^T
        u(ks[2], (1, 4 * input_dim), s1),                # b1 (ih+hh)
        u(ks[3], (input_dim, 4 * hidden_dim), s2),       # W_ih2^T
        u(ks[4], (hidden_dim, 4 * hidden_dim), s2),      # W_hh2^T
        u(ks[5], (1, 4 * hidden_dim), s2),               # b2 (ih+hh)
        u(ks[6], (hidden_dim, n_features), s2),          # W_out^T
        u(ks[7], (1, n_features), s2),                   # b_out
    )


if __name__ == "__main__":
    key = jax.random.PRNGKey(0)

    configs = [
        dict(B=2, seq_len=8, n_features=1, input_dim=32),
        dict(B=2, seq_len=8, n_features=2, input_dim=32),  # covers F > 1 path
    ]

    for idx, cfg in enumerate(configs):
        B, S = cfg["B"], cfg["seq_len"]
        F, D = cfg["n_features"], cfg["input_dim"]

        k_p, k_x = jax.random.split(jax.random.fold_in(key, idx))
        params = _make_params(k_p, D, F)
        x = jax.random.normal(k_x, (B, D), jnp.float32)

        packed = pack_decoder_params(params, seq_len=S, n_features=F,
                                     input_dim=D)

        fwd = jax.jit(functools.partial(decoder_forward, seq_len=S,
                                        n_features=F, input_dim=D))
        out = jax.block_until_ready(fwd(x, packed))

        ref = decoder_reference(x, params, seq_len=S, n_features=F,
                                input_dim=D)
        assert out.shape == (B * F, S, F), out.shape
        assert jnp.allclose(out, ref, atol=2e-5, rtol=2e-5), \
            float(jnp.max(jnp.abs(out - ref)))

    print("KERNEL_OK")
</pallas_src>

<mosaic_0001>
module attributes {stable_mosaic.version = 11 : i64} {
  func.func @decoder_kernel(%arg0: i32, %arg1: memref<2x32xf32, #tpu.memory_space<vmem>>, %arg2: memref<248x512xf32, #tpu.memory_space<vmem>>, %arg3: memref<2x8xf32, #tpu.memory_space<vmem>>) attributes {dimension_semantics = [#tpu.dimension_semantics<parallel>], iteration_bounds = array<i64: 1>, scalar_prefetch = 0 : i64, scratch_operands = 0 : i64, tpu.core_type = #tpu.core_type<tc>, window_params = [{transform_indices = @transform_0, window_bounds = array<i64: 2, 32>}, {pipeline_mode = #tpu.pipeline_mode<synchronous>, transform_indices = @transform_1, window_bounds = array<i64: 248, 512>}, {transform_indices = @transform_2, window_bounds = array<i64: 2, 8>}]} {
    %c0 = arith.constant 0 : index
    %c0_0 = arith.constant 0 : index
    %0 = vector.load %arg2[%c0, %c0_0] : memref<248x512xf32, #tpu.memory_space<vmem>>, vector<32x512xf32>
    %c32 = arith.constant 32 : index
    %c0_1 = arith.constant 0 : index
    %1 = vector.load %arg2[%c32, %c0_1] : memref<248x512xf32, #tpu.memory_space<vmem>>, vector<32x512xf32>
    %c64 = arith.constant 64 : index
    %c0_2 = arith.constant 0 : index
    %2 = vector.load %arg2[%c64, %c0_2] : memref<248x512xf32, #tpu.memory_space<vmem>>, vector<1x512xf32>
    %c72 = arith.constant 72 : index
    %c0_3 = arith.constant 0 : index
    %3 = vector.load %arg2[%c72, %c0_3] : memref<248x512xf32, #tpu.memory_space<vmem>>, vector<96x512xf32>
    %c168 = arith.constant 168 : index
    %c0_4 = arith.constant 0 : index
    %4 = vector.load %arg2[%c168, %c0_4] : memref<248x512xf32, #tpu.memory_space<vmem>>, vector<1x512xf32>
    %c176 = arith.constant 176 : index
    %c0_5 = arith.constant 0 : index
    %5 = vector.load %arg2[%c176, %c0_5] : memref<248x512xf32, #tpu.memory_space<vmem>>, vector<64x1xf32>
    %c240 = arith.constant 240 : index
    %c0_6 = arith.constant 0 : index
    %6 = vector.load %arg2[%c240, %c0_6] : memref<248x512xf32, #tpu.memory_space<vmem>>, vector<1x8xf32>
    %c0_7 = arith.constant 0 : index
    %c0_8 = arith.constant 0 : index
    %7 = vector.load %arg1[%c0_7, %c0_8] : memref<2x32xf32, #tpu.memory_space<vmem>>, vector<2x32xf32>
    %cst = arith.constant dense<0.000000e+00> : vector<2x512xf32>
    %8 = tpu.matmul %7, %0, %cst {dimension_numbers = #tpu.dot_dimension_numbers<[1], [0], [0], [1], [0, 0, 1, 1], [], []>} : vector<2x32xf32>, vector<32x512xf32>, vector<2x512xf32> -> vector<2x512xf32>
    %9 = vector.broadcast %2 : vector<1x512xf32> to vector<2x512xf32>
    %10 = arith.addf %8, %9 : vector<2x512xf32>
    %11 = vector.shape_cast %4 : vector<1x512xf32> to vector<1x512xf32>
    %12 = vector.broadcast %11 : vector<1x512xf32> to vector<2x512xf32>
    %cst_9 = arith.constant 0.000000e+00 : f32
    %13 = vector.broadcast %cst_9 : f32 to vector<2x32xf32>
    %cst_10 = arith.constant 0.000000e+00 : f32
    %14 = vector.broadcast %cst_10 : f32 to vector<2x32xf32>
    %cst_11 = arith.constant 0.000000e+00 : f32
    %15 = vector.broadcast %cst_11 : f32 to vector<2x64xf32>
    %cst_12 = arith.constant 0.000000e+00 : f32
    %16 = vector.broadcast %cst_12 : f32 to vector<2x64xf32>
    %cst_13 = arith.constant dense<0.000000e+00> : vector<2x512xf32>
    %17 = tpu.matmul %13, %1, %cst_13 {dimension_numbers = #tpu.dot_dimension_numbers<[1], [0], [0], [1], [0, 0, 1, 1], [], []>} : vector<2x32xf32>, vector<32x512xf32>, vector<2x512xf32> -> vector<2x512xf32>
    %18 = arith.addf %10, %17 : vector<2x512xf32>
    %19 = vector.extract_strided_slice %18 {offsets = [0, 0], sizes = [2, 32], strides = [1, 1]} : vector<2x512xf32> to vector<2x32xf32>
    %20 = arith.negf %19 : vector<2x32xf32>
    %21 = math.exp %20 : vector<2x32xf32>
    %cst_14 = arith.constant 1.000000e+00 : f32
    %22 = vector.broadcast %cst_14 : f32 to vector<2x32xf32>
    %23 = arith.addf %22, %21 : vector<2x32xf32>
    %24 = arith.divf %22, %23 : vector<2x32xf32>
    %25 = vector.extract_strided_slice %18 {offsets = [0, 128], sizes = [2, 32], strides = [1, 1]} : vector<2x512xf32> to vector<2x32xf32>
    %26 = arith.negf %25 : vector<2x32xf32>
    %27 = math.exp %26 : vector<2x32xf32>
    %cst_15 = arith.constant 1.000000e+00 : f32
    %28 = vector.broadcast %cst_15 : f32 to vector<2x32xf32>
    %29 = arith.addf %28, %27 : vector<2x32xf32>
    %30 = arith.divf %28, %29 : vector<2x32xf32>
    %31 = vector.extract_strided_slice %18 {offsets = [0, 256], sizes = [2, 32], strides = [1, 1]} : vector<2x512xf32> to vector<2x32xf32>
    %32 = math.tanh %31 : vector<2x32xf32>
    %33 = vector.extract_strided_slice %18 {offsets = [0, 384], sizes = [2, 32], strides = [1, 1]} : vector<2x512xf32> to vector<2x32xf32>
    %34 = arith.negf %33 : vector<2x32xf32>
    %35 = math.exp %34 : vector<2x32xf32>
    %cst_16 = arith.constant 1.000000e+00 : f32
    %36 = vector.broadcast %cst_16 : f32 to vector<2x32xf32>
    %37 = arith.addf %36, %35 : vector<2x32xf32>
    %38 = arith.divf %36, %37 : vector<2x32xf32>
    %39 = arith.mulf %30, %14 : vector<2x32xf32>
    %40 = arith.mulf %24, %32 : vector<2x32xf32>
    %41 = arith.addf %39, %40 : vector<2x32xf32>
    %42 = math.tanh %41 : vector<2x32xf32>
    %43 = arith.mulf %38, %42 : vector<2x32xf32>
    %44 = tpu.concatenate %43, %15 in 1 : vector<2x32xf32>, vector<2x64xf32> -> vector<2x96xf32>
    %cst_17 = arith.constant dense<0.000000e+00> : vector<2x512xf32>
    %45 = tpu.matmul %44, %3, %cst_17 {dimension_numbers = #tpu.dot_dimension_numbers<[1], [0], [0], [1], [0, 0, 1, 1], [], []>} : vector<2x96xf32>, vector<96x512xf32>, vector<2x512xf32> -> vector<2x512xf32>
    %46 = arith.addf %45, %12 : vector<2x512xf32>
    %47 = vector.extract_strided_slice %46 {offsets = [0, 0], sizes = [2, 64], strides = [1, 1]} : vector<2x512xf32> to vector<2x64xf32>
    %48 = arith.negf %47 : vector<2x64xf32>
    %49 = math.exp %48 : vector<2x64xf32>
    %cst_18 = arith.constant 1.000000e+00 : f32
    %50 = vector.broadcast %cst_18 : f32 to vector<2x64xf32>
    %51 = arith.addf %50, %49 : vector<2x64xf32>
    %52 = arith.divf %50, %51 : vector<2x64xf32>
    %53 = vector.extract_strided_slice %46 {offsets = [0, 128], sizes = [2, 64], strides = [1, 1]} : vector<2x512xf32> to vector<2x64xf32>
    %54 = arith.negf %53 : vector<2x64xf32>
    %55 = math.exp %54 : vector<2x64xf32>
    %cst_19 = arith.constant 1.000000e+00 : f32
    %56 = vector.broadcast %cst_19 : f32 to vector<2x64xf32>
    %57 = arith.addf %56, %55 : vector<2x64xf32>
    %58 = arith.divf %56, %57 : vector<2x64xf32>
    %59 = vector.extract_strided_slice %46 {offsets = [0, 256], sizes = [2, 64], strides = [1, 1]} : vector<2x512xf32> to vector<2x64xf32>
    %60 = math.tanh %59 : vector<2x64xf32>
    %61 = vector.extract_strided_slice %46 {offsets = [0, 384], sizes = [2, 64], strides = [1, 1]} : vector<2x512xf32> to vector<2x64xf32>
    %62 = arith.negf %61 : vector<2x64xf32>
    %63 = math.exp %62 : vector<2x64xf32>
    %cst_20 = arith.constant 1.000000e+00 : f32
    %64 = vector.broadcast %cst_20 : f32 to vector<2x64xf32>
    %65 = arith.addf %64, %63 : vector<2x64xf32>
    %66 = arith.divf %64, %65 : vector<2x64xf32>
    %67 = arith.mulf %58, %16 : vector<2x64xf32>
    %68 = arith.mulf %52, %60 : vector<2x64xf32>
    %69 = arith.addf %67, %68 : vector<2x64xf32>
    %70 = math.tanh %69 : vector<2x64xf32>
    %71 = arith.mulf %66, %70 : vector<2x64xf32>
    %cst_21 = arith.constant dense<0.000000e+00> : vector<2x1xf32>
    %72 = tpu.matmul %71, %5, %cst_21 {dimension_numbers = #tpu.dot_dimension_numbers<[1], [0], [0], [1], [0, 0, 1, 1], [], []>} : vector<2x64xf32>, vector<64x1xf32>, vector<2x1xf32> -> vector<2x1xf32>
    %cst_22 = arith.constant dense<0.000000e+00> : vector<2x512xf32>
    %73 = tpu.matmul %43, %1, %cst_22 {dimension_numbers = #tpu.dot_dimension_numbers<[1], [0], [0], [1], [0, 0, 1, 1], [], []>} : vector<2x32xf32>, vector<32x512xf32>, vector<2x512xf32> -> vector<2x512xf32>
    %74 = arith.addf %10, %73 : vector<2x512xf32>
    %75 = vector.extract_strided_slice %74 {offsets = [0, 0], sizes = [2, 32], strides = [1, 1]} : vector<2x512xf32> to vector<2x32xf32>
    %76 = arith.negf %75 : vector<2x32xf32>
    %77 = math.exp %76 : vector<2x32xf32>
    %cst_23 = arith.constant 1.000000e+00 : f32
    %78 = vector.broadcast %cst_23 : f32 to vector<2x32xf32>
    %79 = arith.addf %78, %77 : vector<2x32xf32>
    %80 = arith.divf %78, %79 : vector<2x32xf32>
    %81 = vector.extract_strided_slice %74 {offsets = [0, 128], sizes = [2, 32], strides = [1, 1]} : vector<2x512xf32> to vector<2x32xf32>
    %82 = arith.negf %81 : vector<2x32xf32>
    %83 = math.exp %82 : vector<2x32xf32>
    %cst_24 = arith.constant 1.000000e+00 : f32
    %84 = vector.broadcast %cst_24 : f32 to vector<2x32xf32>
    %85 = arith.addf %84, %83 : vector<2x32xf32>
    %86 = arith.divf %84, %85 : vector<2x32xf32>
    %87 = vector.extract_strided_slice %74 {offsets = [0, 256], sizes = [2, 32], strides = [1, 1]} : vector<2x512xf32> to vector<2x32xf32>
    %88 = math.tanh %87 : vector<2x32xf32>
    %89 = vector.extract_strided_slice %74 {offsets = [0, 384], sizes = [2, 32], strides = [1, 1]} : vector<2x512xf32> to vector<2x32xf32>
    %90 = arith.negf %89 : vector<2x32xf32>
    %91 = math.exp %90 : vector<2x32xf32>
    %cst_25 = arith.constant 1.000000e+00 : f32
    %92 = vector.broadcast %cst_25 : f32 to vector<2x32xf32>
    %93 = arith.addf %92, %91 : vector<2x32xf32>
    %94 = arith.divf %92, %93 : vector<2x32xf32>
    %95 = arith.mulf %86, %41 : vector<2x32xf32>
    %96 = arith.mulf %80, %88 : vector<2x32xf32>
    %97 = arith.addf %95, %96 : vector<2x32xf32>
    %98 = math.tanh %97 : vector<2x32xf32>
    %99 = arith.mulf %94, %98 : vector<2x32xf32>
    %100 = tpu.concatenate %99, %71 in 1 : vector<2x32xf32>, vector<2x64xf32> -> vector<2x96xf32>
    %cst_26 = arith.constant dense<0.000000e+00> : vector<2x512xf32>
    %101 = tpu.matmul %100, %3, %cst_26 {dimension_numbers = #tpu.dot_dimension_numbers<[1], [0], [0], [1], [0, 0, 1, 1], [], []>} : vector<2x96xf32>, vector<96x512xf32>, vector<2x512xf32> -> vector<2x512xf32>
    %102 = arith.addf %101, %12 : vector<2x512xf32>
    %103 = vector.extract_strided_slice %102 {offsets = [0, 0], sizes = [2, 64], strides = [1, 1]} : vector<2x512xf32> to vector<2x64xf32>
    %104 = arith.negf %103 : vector<2x64xf32>
    %105 = math.exp %104 : vector<2x64xf32>
    %cst_27 = arith.constant 1.000000e+00 : f32
    %106 = vector.broadcast %cst_27 : f32 to vector<2x64xf32>
    %107 = arith.addf %106, %105 : vector<2x64xf32>
    %108 = arith.divf %106, %107 : vector<2x64xf32>
    %109 = vector.extract_strided_slice %102 {offsets = [0, 128], sizes = [2, 64], strides = [1, 1]} : vector<2x512xf32> to vector<2x64xf32>
    %110 = arith.negf %109 : vector<2x64xf32>
    %111 = math.exp %110 : vector<2x64xf32>
    %cst_28 = arith.constant 1.000000e+00 : f32
    %112 = vector.broadcast %cst_28 : f32 to vector<2x64xf32>
    %113 = arith.addf %112, %111 : vector<2x64xf32>
    %114 = arith.divf %112, %113 : vector<2x64xf32>
    %115 = vector.extract_strided_slice %102 {offsets = [0, 256], sizes = [2, 64], strides = [1, 1]} : vector<2x512xf32> to vector<2x64xf32>
    %116 = math.tanh %115 : vector<2x64xf32>
    %117 = vector.extract_strided_slice %102 {offsets = [0, 384], sizes = [2, 64], strides = [1, 1]} : vector<2x512xf32> to vector<2x64xf32>
    %118 = arith.negf %117 : vector<2x64xf32>
    %119 = math.exp %118 : vector<2x64xf32>
    %cst_29 = arith.constant 1.000000e+00 : f32
    %120 = vector.broadcast %cst_29 : f32 to vector<2x64xf32>
    %121 = arith.addf %120, %119 : vector<2x64xf32>
    %122 = arith.divf %120, %121 : vector<2x64xf32>
    %123 = arith.mulf %114, %69 : vector<2x64xf32>
    %124 = arith.mulf %108, %116 : vector<2x64xf32>
    %125 = arith.addf %123, %124 : vector<2x64xf32>
    %126 = math.tanh %125 : vector<2x64xf32>
    %127 = arith.mulf %122, %126 : vector<2x64xf32>
    %cst_30 = arith.constant dense<0.000000e+00> : vector<2x1xf32>
    %128 = tpu.matmul %127, %5, %cst_30 {dimension_numbers = #tpu.dot_dimension_numbers<[1], [0], [0], [1], [0, 0, 1, 1], [], []>} : vector<2x64xf32>, vector<64x1xf32>, vector<2x1xf32> -> vector<2x1xf32>
    %cst_31 = arith.constant dense<0.000000e+00> : vector<2x512xf32>
    %129 = tpu.matmul %99, %1, %cst_31 {dimension_numbers = #tpu.dot_dimension_numbers<[1], [0], [0], [1], [0, 0, 1, 1], [], []>} : vector<2x32xf32>, vector<32x512xf32>, vector<2x512xf32> -> vector<2x512xf32>
    %130 = arith.addf %10, %129 : vector<2x512xf32>
    %131 = vector.extract_strided_slice %130 {offsets = [0, 0], sizes = [2, 32], strides = [1, 1]} : vector<2x512xf32> to vector<2x32xf32>
    %132 = arith.negf %131 : vector<2x32xf32>
    %133 = math.exp %132 : vector<2x32xf32>
    %cst_32 = arith.constant 1.000000e+00 : f32
    %134 = vector.broadcast %cst_32 : f32 to vector<2x32xf32>
    %135 = arith.addf %134, %133 : vector<2x32xf32>
    %136 = arith.divf %134, %135 : vector<2x32xf32>
    %137 = vector.extract_strided_slice %130 {offsets = [0, 128], sizes = [2, 32], strides = [1, 1]} : vector<2x512xf32> to vector<2x32xf32>
    %138 = arith.negf %137 : vector<2x32xf32>
    %139 = math.exp %138 : vector<2x32xf32>
    %cst_33 = arith.constant 1.000000e+00 : f32
    %140 = vector.broadcast %cst_33 : f32 to vector<2x32xf32>
    %141 = arith.addf %140, %139 : vector<2x32xf32>
    %142 = arith.divf %140, %141 : vector<2x32xf32>
    %143 = vector.extract_strided_slice %130 {offsets = [0, 256], sizes = [2, 32], strides = [1, 1]} : vector<2x512xf32> to vector<2x32xf32>
    %144 = math.tanh %143 : vector<2x32xf32>
    %145 = vector.extract_strided_slice %130 {offsets = [0, 384], sizes = [2, 32], strides = [1, 1]} : vector<2x512xf32> to vector<2x32xf32>
    %146 = arith.negf %145 : vector<2x32xf32>
    %147 = math.exp %146 : vector<2x32xf32>
    %cst_34 = arith.constant 1.000000e+00 : f32
    %148 = vector.broadcast %cst_34 : f32 to vector<2x32xf32>
    %149 = arith.addf %148, %147 : vector<2x32xf32>
    %150 = arith.divf %148, %149 : vector<2x32xf32>
    %151 = arith.mulf %142, %97 : vector<2x32xf32>
    %152 = arith.mulf %136, %144 : vector<2x32xf32>
    %153 = arith.addf %151, %152 : vector<2x32xf32>
    %154 = math.tanh %153 : vector<2x32xf32>
    %155 = arith.mulf %150, %154 : vector<2x32xf32>
    %156 = tpu.concatenate %155, %127 in 1 : vector<2x32xf32>, vector<2x64xf32> -> vector<2x96xf32>
    %cst_35 = arith.constant dense<0.000000e+00> : vector<2x512xf32>
    %157 = tpu.matmul %156, %3, %cst_35 {dimension_numbers = #tpu.dot_dimension_numbers<[1], [0], [0], [1], [0, 0, 1, 1], [], []>} : vector<2x96xf32>, vector<96x512xf32>, vector<2x512xf32> -> vector<2x512xf32>
    %158 = arith.addf %157, %12 : vector<2x512xf32>
    %159 = vector.extract_strided_slice %158 {offsets = [0, 0], sizes = [2, 64], strides = [1, 1]} : vector<2x512xf32> to vector<2x64xf32>
    %160 = arith.negf %159 : vector<2x64xf32>
    %161 = math.exp %160 : vector<2x64xf32>
    %cst_36 = arith.constant 1.000000e+00 : f32
    %162 = vector.broadcast %cst_36 : f32 to vector<2x64xf32>
    %163 = arith.addf %162, %161 : vector<2x64xf32>
    %164 = arith.divf %162, %163 : vector<2x64xf32>
    %165 = vector.extract_strided_slice %158 {offsets = [0, 128], sizes = [2, 64], strides = [1, 1]} : vector<2x512xf32> to vector<2x64xf32>
    %166 = arith.negf %165 : vector<2x64xf32>
    %167 = math.exp %166 : vector<2x64xf32>
    %cst_37 = arith.constant 1.000000e+00 : f32
    %168 = vector.broadcast %cst_37 : f32 to vector<2x64xf32>
    %169 = arith.addf %168, %167 : vector<2x64xf32>
    %170 = arith.divf %168, %169 : vector<2x64xf32>
    %171 = vector.extract_strided_slice %158 {offsets = [0, 256], sizes = [2, 64], strides = [1, 1]} : vector<2x512xf32> to vector<2x64xf32>
    %172 = math.tanh %171 : vector<2x64xf32>
    %173 = vector.extract_strided_slice %158 {offsets = [0, 384], sizes = [2, 64], strides = [1, 1]} : vector<2x512xf32> to vector<2x64xf32>
    %174 = arith.negf %173 : vector<2x64xf32>
    %175 = math.exp %174 : vector<2x64xf32>
    %cst_38 = arith.constant 1.000000e+00 : f32
    %176 = vector.broadcast %cst_38 : f32 to vector<2x64xf32>
    %177 = arith.addf %176, %175 : vector<2x64xf32>
    %178 = arith.divf %176, %177 : vector<2x64xf32>
    %179 = arith.mulf %170, %125 : vector<2x64xf32>
    %180 = arith.mulf %164, %172 : vector<2x64xf32>
    %181 = arith.addf %179, %180 : vector<2x64xf32>
    %182 = math.tanh %181 : vector<2x64xf32>
    %183 = arith.mulf %178, %182 : vector<2x64xf32>
    %cst_39 = arith.constant dense<0.000000e+00> : vector<2x1xf32>
    %184 = tpu.matmul %183, %5, %cst_39 {dimension_numbers = #tpu.dot_dimension_numbers<[1], [0], [0], [1], [0, 0, 1, 1], [], []>} : vector<2x64xf32>, vector<64x1xf32>, vector<2x1xf32> -> vector<2x1xf32>
    %cst_40 = arith.constant dense<0.000000e+00> : vector<2x512xf32>
    %185 = tpu.matmul %155, %1, %cst_40 {dimension_numbers = #tpu.dot_dimension_numbers<[1], [0], [0], [1], [0, 0, 1, 1], [], []>} : vector<2x32xf32>, vector<32x512xf32>, vector<2x512xf32> -> vector<2x512xf32>
    %186 = arith.addf %10, %185 : vector<2x512xf32>
    %187 = vector.extract_strided_slice %186 {offsets = [0, 0], sizes = [2, 32], strides = [1, 1]} : vector<2x512xf32> to vector<2x32xf32>
    %188 = arith.negf %187 : vector<2x32xf32>
    %189 = math.exp %188 : vector<2x32xf32>
    %cst_41 = arith.constant 1.000000e+00 : f32
    %190 = vector.broadcast %cst_41 : f32 to vector<2x32xf32>
    %191 = arith.addf %190, %189 : vector<2x32xf32>
    %192 = arith.divf %190, %191 : vector<2x32xf32>
    %193 = vector.extract_strided_slice %186 {offsets = [0, 128], sizes = [2, 32], strides = [1, 1]} : vector<2x512xf32> to vector<2x32xf32>
    %194 = arith.negf %193 : vector<2x32xf32>
    %195 = math.exp %194 : vector<2x32xf32>
    %cst_42 = arith.constant 1.000000e+00 : f32
    %196 = vector.broadcast %cst_42 : f32 to vector<2x32xf32>
    %197 = arith.addf %196, %195 : vector<2x32xf32>
    %198 = arith.divf %196, %197 : vector<2x32xf32>
    %199 = vector.extract_strided_slice %186 {offsets = [0, 256], sizes = [2, 32], strides = [1, 1]} : vector<2x512xf32> to vector<2x32xf32>
    %200 = math.tanh %199 : vector<2x32xf32>
    %201 = vector.extract_strided_slice %186 {offsets = [0, 384], sizes = [2, 32], strides = [1, 1]} : vector<2x512xf32> to vector<2x32xf32>
    %202 = arith.negf %201 : vector<2x32xf32>
    %203 = math.exp %202 : vector<2x32xf32>
    %cst_43 = arith.constant 1.000000e+00 : f32
    %204 = vector.broadcast %cst_43 : f32 to vector<2x32xf32>
    %205 = arith.addf %204, %203 : vector<2x32xf32>
    %206 = arith.divf %204, %205 : vector<2x32xf32>
    %207 = arith.mulf %198, %153 : vector<2x32xf32>
    %208 = arith.mulf %192, %200 : vector<2x32xf32>
    %209 = arith.addf %207, %208 : vector<2x32xf32>
    %210 = math.tanh %209 : vector<2x32xf32>
    %211 = arith.mulf %206, %210 : vector<2x32xf32>
    %212 = tpu.concatenate %211, %183 in 1 : vector<2x32xf32>, vector<2x64xf32> -> vector<2x96xf32>
    %cst_44 = arith.constant dense<0.000000e+00> : vector<2x512xf32>
    %213 = tpu.matmul %212, %3, %cst_44 {dimension_numbers = #tpu.dot_dimension_numbers<[1], [0], [0], [1], [0, 0, 1, 1], [], []>} : vector<2x96xf32>, vector<96x512xf32>, vector<2x512xf32> -> vector<2x512xf32>
    %214 = arith.addf %213, %12 : vector<2x512xf32>
    %215 = vector.extract_strided_slice %214 {offsets = [0, 0], sizes = [2, 64], strides = [1, 1]} : vector<2x512xf32> to vector<2x64xf32>
    %216 = arith.negf %215 : vector<2x64xf32>
    %217 = math.exp %216 : vector<2x64xf32>
    %cst_45 = arith.constant 1.000000e+00 : f32
    %218 = vector.broadcast %cst_45 : f32 to vector<2x64xf32>
    %219 = arith.addf %218, %217 : vector<2x64xf32>
    %220 = arith.divf %218, %219 : vector<2x64xf32>
    %221 = vector.extract_strided_slice %214 {offsets = [0, 128], sizes = [2, 64], strides = [1, 1]} : vector<2x512xf32> to vector<2x64xf32>
    %222 = arith.negf %221 : vector<2x64xf32>
    %223 = math.exp %222 : vector<2x64xf32>
    %cst_46 = arith.constant 1.000000e+00 : f32
    %224 = vector.broadcast %cst_46 : f32 to vector<2x64xf32>
    %225 = arith.addf %224, %223 : vector<2x64xf32>
    %226 = arith.divf %224, %225 : vector<2x64xf32>
    %227 = vector.extract_strided_slice %214 {offsets = [0, 256], sizes = [2, 64], strides = [1, 1]} : vector<2x512xf32> to vector<2x64xf32>
    %228 = math.tanh %227 : vector<2x64xf32>
    %229 = vector.extract_strided_slice %214 {offsets = [0, 384], sizes = [2, 64], strides = [1, 1]} : vector<2x512xf32> to vector<2x64xf32>
    %230 = arith.negf %229 : vector<2x64xf32>
    %231 = math.exp %230 : vector<2x64xf32>
    %cst_47 = arith.constant 1.000000e+00 : f32
    %232 = vector.broadcast %cst_47 : f32 to vector<2x64xf32>
    %233 = arith.addf %232, %231 : vector<2x64xf32>
    %234 = arith.divf %232, %233 : vector<2x64xf32>
    %235 = arith.mulf %226, %181 : vector<2x64xf32>
    %236 = arith.mulf %220, %228 : vector<2x64xf32>
    %237 = arith.addf %235, %236 : vector<2x64xf32>
    %238 = math.tanh %237 : vector<2x64xf32>
    %239 = arith.mulf %234, %238 : vector<2x64xf32>
    %cst_48 = arith.constant dense<0.000000e+00> : vector<2x1xf32>
    %240 = tpu.matmul %239, %5, %cst_48 {dimension_numbers = #tpu.dot_dimension_numbers<[1], [0], [0], [1], [0, 0, 1, 1], [], []>} : vector<2x64xf32>, vector<64x1xf32>, vector<2x1xf32> -> vector<2x1xf32>
    %cst_49 = arith.constant dense<0.000000e+00> : vector<2x512xf32>
    %241 = tpu.matmul %211, %1, %cst_49 {dimension_numbers = #tpu.dot_dimension_numbers<[1], [0], [0], [1], [0, 0, 1, 1], [], []>} : vector<2x32xf32>, vector<32x512xf32>, vector<2x512xf32> -> vector<2x512xf32>
    %242 = arith.addf %10, %241 : vector<2x512xf32>
    %243 = vector.extract_strided_slice %242 {offsets = [0, 0], sizes = [2, 32], strides = [1, 1]} : vector<2x512xf32> to vector<2x32xf32>
    %244 = arith.negf %243 : vector<2x32xf32>
    %245 = math.exp %244 : vector<2x32xf32>
    %cst_50 = arith.constant 1.000000e+00 : f32
    %246 = vector.broadcast %cst_50 : f32 to vector<2x32xf32>
    %247 = arith.addf %246, %245 : vector<2x32xf32>
    %248 = arith.divf %246, %247 : vector<2x32xf32>
    %249 = vector.extract_strided_slice %242 {offsets = [0, 128], sizes = [2, 32], strides = [1, 1]} : vector<2x512xf32> to vector<2x32xf32>
    %250 = arith.negf %249 : vector<2x32xf32>
    %251 = math.exp %250 : vector<2x32xf32>
    %cst_51 = arith.constant 1.000000e+00 : f32
    %252 = vector.broadcast %cst_51 : f32 to vector<2x32xf32>
    %253 = arith.addf %252, %251 : vector<2x32xf32>
    %254 = arith.divf %252, %253 : vector<2x32xf32>
    %255 = vector.extract_strided_slice %242 {offsets = [0, 256], sizes = [2, 32], strides = [1, 1]} : vector<2x512xf32> to vector<2x32xf32>
    %256 = math.tanh %255 : vector<2x32xf32>
    %257 = vector.extract_strided_slice %242 {offsets = [0, 384], sizes = [2, 32], strides = [1, 1]} : vector<2x512xf32> to vector<2x32xf32>
    %258 = arith.negf %257 : vector<2x32xf32>
    %259 = math.exp %258 : vector<2x32xf32>
    %cst_52 = arith.constant 1.000000e+00 : f32
    %260 = vector.broadcast %cst_52 : f32 to vector<2x32xf32>
    %261 = arith.addf %260, %259 : vector<2x32xf32>
    %262 = arith.divf %260, %261 : vector<2x32xf32>
    %263 = arith.mulf %254, %209 : vector<2x32xf32>
    %264 = arith.mulf %248, %256 : vector<2x32xf32>
    %265 = arith.addf %263, %264 : vector<2x32xf32>
    %266 = math.tanh %265 : vector<2x32xf32>
    %267 = arith.mulf %262, %266 : vector<2x32xf32>
    %268 = tpu.concatenate %267, %239 in 1 : vector<2x32xf32>, vector<2x64xf32> -> vector<2x96xf32>
    %cst_53 = arith.constant dense<0.000000e+00> : vector<2x512xf32>
    %269 = tpu.matmul %268, %3, %cst_53 {dimension_numbers = #tpu.dot_dimension_numbers<[1], [0], [0], [1], [0, 0, 1, 1], [], []>} : vector<2x96xf32>, vector<96x512xf32>, vector<2x512xf32> -> vector<2x512xf32>
    %270 = arith.addf %269, %12 : vector<2x512xf32>
    %271 = vector.extract_strided_slice %270 {offsets = [0, 0], sizes = [2, 64], strides = [1, 1]} : vector<2x512xf32> to vector<2x64xf32>
    %272 = arith.negf %271 : vector<2x64xf32>
    %273 = math.exp %272 : vector<2x64xf32>
    %cst_54 = arith.constant 1.000000e+00 : f32
    %274 = vector.broadcast %cst_54 : f32 to vector<2x64xf32>
    %275 = arith.addf %274, %273 : vector<2x64xf32>
    %276 = arith.divf %274, %275 : vector<2x64xf32>
    %277 = vector.extract_strided_slice %270 {offsets = [0, 128], sizes = [2, 64], strides = [1, 1]} : vector<2x512xf32> to vector<2x64xf32>
    %278 = arith.negf %277 : vector<2x64xf32>
    %279 = math.exp %278 : vector<2x64xf32>
    %cst_55 = arith.constant 1.000000e+00 : f32
    %280 = vector.broadcast %cst_55 : f32 to vector<2x64xf32>
    %281 = arith.addf %280, %279 : vector<2x64xf32>
    %282 = arith.divf %280, %281 : vector<2x64xf32>
    %283 = vector.extract_strided_slice %270 {offsets = [0, 256], sizes = [2, 64], strides = [1, 1]} : vector<2x512xf32> to vector<2x64xf32>
    %284 = math.tanh %283 : vector<2x64xf32>
    %285 = vector.extract_strided_slice %270 {offsets = [0, 384], sizes = [2, 64], strides = [1, 1]} : vector<2x512xf32> to vector<2x64xf32>
    %286 = arith.negf %285 : vector<2x64xf32>
    %287 = math.exp %286 : vector<2x64xf32>
    %cst_56 = arith.constant 1.000000e+00 : f32
    %288 = vector.broadcast %cst_56 : f32 to vector<2x64xf32>
    %289 = arith.addf %288, %287 : vector<2x64xf32>
    %290 = arith.divf %288, %289 : vector<2x64xf32>
    %291 = arith.mulf %282, %237 : vector<2x64xf32>
    %292 = arith.mulf %276, %284 : vector<2x64xf32>
    %293 = arith.addf %291, %292 : vector<2x64xf32>
    %294 = math.tanh %293 : vector<2x64xf32>
    %295 = arith.mulf %290, %294 : vector<2x64xf32>
    %cst_57 = arith.constant dense<0.000000e+00> : vector<2x1xf32>
    %296 = tpu.matmul %295, %5, %cst_57 {dimension_numbers = #tpu.dot_dimension_numbers<[1], [0], [0], [1], [0, 0, 1, 1], [], []>} : vector<2x64xf32>, vector<64x1xf32>, vector<2x1xf32> -> vector<2x1xf32>
    %cst_58 = arith.constant dense<0.000000e+00> : vector<2x512xf32>
    %297 = tpu.matmul %267, %1, %cst_58 {dimension_numbers = #tpu.dot_dimension_numbers<[1], [0], [0], [1], [0, 0, 1, 1], [], []>} : vector<2x32xf32>, vector<32x512xf32>, vector<2x512xf32> -> vector<2x512xf32>
    %298 = arith.addf %10, %297 : vector<2x512xf32>
    %299 = vector.extract_strided_slice %298 {offsets = [0, 0], sizes = [2, 32], strides = [1, 1]} : vector<2x512xf32> to vector<2x32xf32>
    %300 = arith.negf %299 : vector<2x32xf32>
    %301 = math.exp %300 : vector<2x32xf32>
    %cst_59 = arith.constant 1.000000e+00 : f32
    %302 = vector.broadcast %cst_59 : f32 to vector<2x32xf32>
    %303 = arith.addf %302, %301 : vector<2x32xf32>
    %304 = arith.divf %302, %303 : vector<2x32xf32>
    %305 = vector.extract_strided_slice %298 {offsets = [0, 128], sizes = [2, 32], strides = [1, 1]} : vector<2x512xf32> to vector<2x32xf32>
    %306 = arith.negf %305 : vector<2x32xf32>
    %307 = math.exp %306 : vector<2x32xf32>
    %cst_60 = arith.constant 1.000000e+00 : f32
    %308 = vector.broadcast %cst_60 : f32 to vector<2x32xf32>
    %309 = arith.addf %308, %307 : vector<2x32xf32>
    %310 = arith.divf %308, %309 : vector<2x32xf32>
    %311 = vector.extract_strided_slice %298 {offsets = [0, 256], sizes = [2, 32], strides = [1, 1]} : vector<2x512xf32> to vector<2x32xf32>
    %312 = math.tanh %311 : vector<2x32xf32>
    %313 = vector.extract_strided_slice %298 {offsets = [0, 384], sizes = [2, 32], strides = [1, 1]} : vector<2x512xf32> to vector<2x32xf32>
    %314 = arith.negf %313 : vector<2x32xf32>
    %315 = math.exp %314 : vector<2x32xf32>
    %cst_61 = arith.constant 1.000000e+00 : f32
    %316 = vector.broadcast %cst_61 : f32 to vector<2x32xf32>
    %317 = arith.addf %316, %315 : vector<2x32xf32>
    %318 = arith.divf %316, %317 : vector<2x32xf32>
    %319 = arith.mulf %310, %265 : vector<2x32xf32>
    %320 = arith.mulf %304, %312 : vector<2x32xf32>
    %321 = arith.addf %319, %320 : vector<2x32xf32>
    %322 = math.tanh %321 : vector<2x32xf32>
    %323 = arith.mulf %318, %322 : vector<2x32xf32>
    %324 = tpu.concatenate %323, %295 in 1 : vector<2x32xf32>, vector<2x64xf32> -> vector<2x96xf32>
    %cst_62 = arith.constant dense<0.000000e+00> : vector<2x512xf32>
    %325 = tpu.matmul %324, %3, %cst_62 {dimension_numbers = #tpu.dot_dimension_numbers<[1], [0], [0], [1], [0, 0, 1, 1], [], []>} : vector<2x96xf32>, vector<96x512xf32>, vector<2x512xf32> -> vector<2x512xf32>
    %326 = arith.addf %325, %12 : vector<2x512xf32>
    %327 = vector.extract_strided_slice %326 {offsets = [0, 0], sizes = [2, 64], strides = [1, 1]} : vector<2x512xf32> to vector<2x64xf32>
    %328 = arith.negf %327 : vector<2x64xf32>
    %329 = math.exp %328 : vector<2x64xf32>
    %cst_63 = arith.constant 1.000000e+00 : f32
    %330 = vector.broadcast %cst_63 : f32 to vector<2x64xf32>
    %331 = arith.addf %330, %329 : vector<2x64xf32>
    %332 = arith.divf %330, %331 : vector<2x64xf32>
    %333 = vector.extract_strided_slice %326 {offsets = [0, 128], sizes = [2, 64], strides = [1, 1]} : vector<2x512xf32> to vector<2x64xf32>
    %334 = arith.negf %333 : vector<2x64xf32>
    %335 = math.exp %334 : vector<2x64xf32>
    %cst_64 = arith.constant 1.000000e+00 : f32
    %336 = vector.broadcast %cst_64 : f32 to vector<2x64xf32>
    %337 = arith.addf %336, %335 : vector<2x64xf32>
    %338 = arith.divf %336, %337 : vector<2x64xf32>
    %339 = vector.extract_strided_slice %326 {offsets = [0, 256], sizes = [2, 64], strides = [1, 1]} : vector<2x512xf32> to vector<2x64xf32>
    %340 = math.tanh %339 : vector<2x64xf32>
    %341 = vector.extract_strided_slice %326 {offsets = [0, 384], sizes = [2, 64], strides = [1, 1]} : vector<2x512xf32> to vector<2x64xf32>
    %342 = arith.negf %341 : vector<2x64xf32>
    %343 = math.exp %342 : vector<2x64xf32>
    %cst_65 = arith.constant 1.000000e+00 : f32
    %344 = vector.broadcast %cst_65 : f32 to vector<2x64xf32>
    %345 = arith.addf %344, %343 : vector<2x64xf32>
    %346 = arith.divf %344, %345 : vector<2x64xf32>
    %347 = arith.mulf %338, %293 : vector<2x64xf32>
    %348 = arith.mulf %332, %340 : vector<2x64xf32>
    %349 = arith.addf %347, %348 : vector<2x64xf32>
    %350 = math.tanh %349 : vector<2x64xf32>
    %351 = arith.mulf %346, %350 : vector<2x64xf32>
    %cst_66 = arith.constant dense<0.000000e+00> : vector<2x1xf32>
    %352 = tpu.matmul %351, %5, %cst_66 {dimension_numbers = #tpu.dot_dimension_numbers<[1], [0], [0], [1], [0, 0, 1, 1], [], []>} : vector<2x64xf32>, vector<64x1xf32>, vector<2x1xf32> -> vector<2x1xf32>
    %cst_67 = arith.constant dense<0.000000e+00> : vector<2x512xf32>
    %353 = tpu.matmul %323, %1, %cst_67 {dimension_numbers = #tpu.dot_dimension_numbers<[1], [0], [0], [1], [0, 0, 1, 1], [], []>} : vector<2x32xf32>, vector<32x512xf32>, vector<2x512xf32> -> vector<2x512xf32>
    %354 = arith.addf %10, %353 : vector<2x512xf32>
    %355 = vector.extract_strided_slice %354 {offsets = [0, 0], sizes = [2, 32], strides = [1, 1]} : vector<2x512xf32> to vector<2x32xf32>
    %356 = arith.negf %355 : vector<2x32xf32>
    %357 = math.exp %356 : vector<2x32xf32>
    %cst_68 = arith.constant 1.000000e+00 : f32
    %358 = vector.broadcast %cst_68 : f32 to vector<2x32xf32>
    %359 = arith.addf %358, %357 : vector<2x32xf32>
    %360 = arith.divf %358, %359 : vector<2x32xf32>
    %361 = vector.extract_strided_slice %354 {offsets = [0, 128], sizes = [2, 32], strides = [1, 1]} : vector<2x512xf32> to vector<2x32xf32>
    %362 = arith.negf %361 : vector<2x32xf32>
    %363 = math.exp %362 : vector<2x32xf32>
    %cst_69 = arith.constant 1.000000e+00 : f32
    %364 = vector.broadcast %cst_69 : f32 to vector<2x32xf32>
    %365 = arith.addf %364, %363 : vector<2x32xf32>
    %366 = arith.divf %364, %365 : vector<2x32xf32>
    %367 = vector.extract_strided_slice %354 {offsets = [0, 256], sizes = [2, 32], strides = [1, 1]} : vector<2x512xf32> to vector<2x32xf32>
    %368 = math.tanh %367 : vector<2x32xf32>
    %369 = vector.extract_strided_slice %354 {offsets = [0, 384], sizes = [2, 32], strides = [1, 1]} : vector<2x512xf32> to vector<2x32xf32>
    %370 = arith.negf %369 : vector<2x32xf32>
    %371 = math.exp %370 : vector<2x32xf32>
    %cst_70 = arith.constant 1.000000e+00 : f32
    %372 = vector.broadcast %cst_70 : f32 to vector<2x32xf32>
    %373 = arith.addf %372, %371 : vector<2x32xf32>
    %374 = arith.divf %372, %373 : vector<2x32xf32>
    %375 = arith.mulf %366, %321 : vector<2x32xf32>
    %376 = arith.mulf %360, %368 : vector<2x32xf32>
    %377 = arith.addf %375, %376 : vector<2x32xf32>
    %378 = math.tanh %377 : vector<2x32xf32>
    %379 = arith.mulf %374, %378 : vector<2x32xf32>
    %380 = tpu.concatenate %379, %351 in 1 : vector<2x32xf32>, vector<2x64xf32> -> vector<2x96xf32>
    %cst_71 = arith.constant dense<0.000000e+00> : vector<2x512xf32>
    %381 = tpu.matmul %380, %3, %cst_71 {dimension_numbers = #tpu.dot_dimension_numbers<[1], [0], [0], [1], [0, 0, 1, 1], [], []>} : vector<2x96xf32>, vector<96x512xf32>, vector<2x512xf32> -> vector<2x512xf32>
    %382 = arith.addf %381, %12 : vector<2x512xf32>
    %383 = vector.extract_strided_slice %382 {offsets = [0, 0], sizes = [2, 64], strides = [1, 1]} : vector<2x512xf32> to vector<2x64xf32>
    %384 = arith.negf %383 : vector<2x64xf32>
    %385 = math.exp %384 : vector<2x64xf32>
    %cst_72 = arith.constant 1.000000e+00 : f32
    %386 = vector.broadcast %cst_72 : f32 to vector<2x64xf32>
    %387 = arith.addf %386, %385 : vector<2x64xf32>
    %388 = arith.divf %386, %387 : vector<2x64xf32>
    %389 = vector.extract_strided_slice %382 {offsets = [0, 128], sizes = [2, 64], strides = [1, 1]} : vector<2x512xf32> to vector<2x64xf32>
    %390 = arith.negf %389 : vector<2x64xf32>
    %391 = math.exp %390 : vector<2x64xf32>
    %cst_73 = arith.constant 1.000000e+00 : f32
    %392 = vector.broadcast %cst_73 : f32 to vector<2x64xf32>
    %393 = arith.addf %392, %391 : vector<2x64xf32>
    %394 = arith.divf %392, %393 : vector<2x64xf32>
    %395 = vector.extract_strided_slice %382 {offsets = [0, 256], sizes = [2, 64], strides = [1, 1]} : vector<2x512xf32> to vector<2x64xf32>
    %396 = math.tanh %395 : vector<2x64xf32>
    %397 = vector.extract_strided_slice %382 {offsets = [0, 384], sizes = [2, 64], strides = [1, 1]} : vector<2x512xf32> to vector<2x64xf32>
    %398 = arith.negf %397 : vector<2x64xf32>
    %399 = math.exp %398 : vector<2x64xf32>
    %cst_74 = arith.constant 1.000000e+00 : f32
    %400 = vector.broadcast %cst_74 : f32 to vector<2x64xf32>
    %401 = arith.addf %400, %399 : vector<2x64xf32>
    %402 = arith.divf %400, %401 : vector<2x64xf32>
    %403 = arith.mulf %394, %349 : vector<2x64xf32>
    %404 = arith.mulf %388, %396 : vector<2x64xf32>
    %405 = arith.addf %403, %404 : vector<2x64xf32>
    %406 = math.tanh %405 : vector<2x64xf32>
    %407 = arith.mulf %402, %406 : vector<2x64xf32>
    %cst_75 = arith.constant dense<0.000000e+00> : vector<2x1xf32>
    %408 = tpu.matmul %407, %5, %cst_75 {dimension_numbers = #tpu.dot_dimension_numbers<[1], [0], [0], [1], [0, 0, 1, 1], [], []>} : vector<2x64xf32>, vector<64x1xf32>, vector<2x1xf32> -> vector<2x1xf32>
    %cst_76 = arith.constant dense<0.000000e+00> : vector<2x512xf32>
    %409 = tpu.matmul %379, %1, %cst_76 {dimension_numbers = #tpu.dot_dimension_numbers<[1], [0], [0], [1], [0, 0, 1, 1], [], []>} : vector<2x32xf32>, vector<32x512xf32>, vector<2x512xf32> -> vector<2x512xf32>
    %410 = arith.addf %10, %409 : vector<2x512xf32>
    %411 = vector.extract_strided_slice %410 {offsets = [0, 0], sizes = [2, 32], strides = [1, 1]} : vector<2x512xf32> to vector<2x32xf32>
    %412 = arith.negf %411 : vector<2x32xf32>
    %413 = math.exp %412 : vector<2x32xf32>
    %cst_77 = arith.constant 1.000000e+00 : f32
    %414 = vector.broadcast %cst_77 : f32 to vector<2x32xf32>
    %415 = arith.addf %414, %413 : vector<2x32xf32>
    %416 = arith.divf %414, %415 : vector<2x32xf32>
    %417 = vector.extract_strided_slice %410 {offsets = [0, 128], sizes = [2, 32], strides = [1, 1]} : vector<2x512xf32> to vector<2x32xf32>
    %418 = arith.negf %417 : vector<2x32xf32>
    %419 = math.exp %418 : vector<2x32xf32>
    %cst_78 = arith.constant 1.000000e+00 : f32
    %420 = vector.broadcast %cst_78 : f32 to vector<2x32xf32>
    %421 = arith.addf %420, %419 : vector<2x32xf32>
    %422 = arith.divf %420, %421 : vector<2x32xf32>
    %423 = vector.extract_strided_slice %410 {offsets = [0, 256], sizes = [2, 32], strides = [1, 1]} : vector<2x512xf32> to vector<2x32xf32>
    %424 = math.tanh %423 : vector<2x32xf32>
    %425 = vector.extract_strided_slice %410 {offsets = [0, 384], sizes = [2, 32], strides = [1, 1]} : vector<2x512xf32> to vector<2x32xf32>
    %426 = arith.negf %425 : vector<2x32xf32>
    %427 = math.exp %426 : vector<2x32xf32>
    %cst_79 = arith.constant 1.000000e+00 : f32
    %428 = vector.broadcast %cst_79 : f32 to vector<2x32xf32>
    %429 = arith.addf %428, %427 : vector<2x32xf32>
    %430 = arith.divf %428, %429 : vector<2x32xf32>
    %431 = arith.mulf %422, %377 : vector<2x32xf32>
    %432 = arith.mulf %416, %424 : vector<2x32xf32>
    %433 = arith.addf %431, %432 : vector<2x32xf32>
    %434 = math.tanh %433 : vector<2x32xf32>
    %435 = arith.mulf %430, %434 : vector<2x32xf32>
    %436 = tpu.concatenate %435, %407 in 1 : vector<2x32xf32>, vector<2x64xf32> -> vector<2x96xf32>
    %cst_80 = arith.constant dense<0.000000e+00> : vector<2x512xf32>
    %437 = tpu.matmul %436, %3, %cst_80 {dimension_numbers = #tpu.dot_dimension_numbers<[1], [0], [0], [1], [0, 0, 1, 1], [], []>} : vector<2x96xf32>, vector<96x512xf32>, vector<2x512xf32> -> vector<2x512xf32>
    %438 = arith.addf %437, %12 : vector<2x512xf32>
    %439 = vector.extract_strided_slice %438 {offsets = [0, 0], sizes = [2, 64], strides = [1, 1]} : vector<2x512xf32> to vector<2x64xf32>
    %440 = arith.negf %439 : vector<2x64xf32>
    %441 = math.exp %440 : vector<2x64xf32>
    %cst_81 = arith.constant 1.000000e+00 : f32
    %442 = vector.broadcast %cst_81 : f32 to vector<2x64xf32>
    %443 = arith.addf %442, %441 : vector<2x64xf32>
    %444 = arith.divf %442, %443 : vector<2x64xf32>
    %445 = vector.extract_strided_slice %438 {offsets = [0, 128], sizes = [2, 64], strides = [1, 1]} : vector<2x512xf32> to vector<2x64xf32>
    %446 = arith.negf %445 : vector<2x64xf32>
    %447 = math.exp %446 : vector<2x64xf32>
    %cst_82 = arith.constant 1.000000e+00 : f32
    %448 = vector.broadcast %cst_82 : f32 to vector<2x64xf32>
    %449 = arith.addf %448, %447 : vector<2x64xf32>
    %450 = arith.divf %448, %449 : vector<2x64xf32>
    %451 = vector.extract_strided_slice %438 {offsets = [0, 256], sizes = [2, 64], strides = [1, 1]} : vector<2x512xf32> to vector<2x64xf32>
    %452 = math.tanh %451 : vector<2x64xf32>
    %453 = vector.extract_strided_slice %438 {offsets = [0, 384], sizes = [2, 64], strides = [1, 1]} : vector<2x512xf32> to vector<2x64xf32>
    %454 = arith.negf %453 : vector<2x64xf32>
    %455 = math.exp %454 : vector<2x64xf32>
    %cst_83 = arith.constant 1.000000e+00 : f32
    %456 = vector.broadcast %cst_83 : f32 to vector<2x64xf32>
    %457 = arith.addf %456, %455 : vector<2x64xf32>
    %458 = arith.divf %456, %457 : vector<2x64xf32>
    %459 = arith.mulf %450, %405 : vector<2x64xf32>
    %460 = arith.mulf %444, %452 : vector<2x64xf32>
    %461 = arith.addf %459, %460 : vector<2x64xf32>
    %462 = math.tanh %461 : vector<2x64xf32>
    %463 = arith.mulf %458, %462 : vector<2x64xf32>
    %cst_84 = arith.constant dense<0.000000e+00> : vector<2x1xf32>
    %464 = tpu.matmul %463, %5, %cst_84 {dimension_numbers = #tpu.dot_dimension_numbers<[1], [0], [0], [1], [0, 0, 1, 1], [], []>} : vector<2x64xf32>, vector<64x1xf32>, vector<2x1xf32> -> vector<2x1xf32>
    %465 = tpu.concatenate %72, %128, %184, %240, %296, %352, %408, %464 in 1 : vector<2x1xf32>, vector<2x1xf32>, vector<2x1xf32>, vector<2x1xf32>, vector<2x1xf32>, vector<2x1xf32>, vector<2x1xf32>, vector<2x1xf32> -> vector<2x8xf32>
    %466 = vector.broadcast %6 : vector<1x8xf32> to vector<2x8xf32>
    %467 = arith.addf %465, %466 : vector<2x8xf32>
    %c0_85 = arith.constant 0 : index
    %c0_86 = arith.constant 0 : index
    %468 = vector.load %arg3[%c0_85, %c0_86] : memref<2x8xf32, #tpu.memory_space<vmem>>, vector<2x8xf32>
    tpu.vector_store %arg3[%c0_85, %c0_86], %467 {strides = array<i32>} : memref<2x8xf32, #tpu.memory_space<vmem>>, vector<2x8xf32>,
    return
  }
  func.func @transform_0(%arg0: i32) -> (i32, i32) {
    %c0_i32 = arith.constant 0 : i32
    %c0_i32_0 = arith.constant 0 : i32
    return %arg0, %c0_i32 : i32, i32
  }
  func.func @transform_1(%arg0: i32) -> (i32, i32) {
    %c0_i32 = arith.constant 0 : i32
    %c0_i32_0 = arith.constant 0 : i32
    %c0_i32_1 = arith.constant 0 : i32
    return %c0_i32, %c0_i32_0 : i32, i32
  }
  func.func @transform_2(%arg0: i32) -> (i32, i32) {
    %c0_i32 = arith.constant 0 : i32
    %c0_i32_0 = arith.constant 0 : i32
    return %arg0, %c0_i32 : i32, i32
  }
}

</mosaic_0001>

<llo_original>
// kernel: decoder_forward.1
$region0: #{decoder_forward.1}
  #allocation0 [shape = 'u32[]', space=smem, size = 0x4, offset = 0x4, fixed_abs, tag = 'smem constant byte address 0x4 - core index']
  #allocation1 [shape = 'u32[72,128]{1,0:T(1,128)}', space=vmem, size = 0x9000, scoped, tag = 'internal scratch']
  %s0 = inlined_call_operand.hbm [shape: f32[2,32], index: 0, kind: input, shape index: {}]
  %s1 = inlined_call_operand.hbm [shape: f32[248,512], index: 1, kind: input, shape index: {}]
  %s2 = inlined_call_operand.hbm [shape: f32[2,8], index: 2, kind: output, shape index: {}]
  %s3 = sld [smem:[#allocation0]]
  $region26: #{decoder_forward.1} parent=0
    _
  %s5 = ssub.s32 1, %s3
  %s6 = scalar_select 0, %s5, %s3
  $region1: #{decoder_forward.1} parent=0
    #allocation2 [shape = 'u8[1024]{0}', space=vmem, size = 0x400, scoped, tag = 'input window, operand 0, single buffered']
    #allocation3 [shape = 's32[1]{0}', space=sflag, size = 0x4, scoped, tag = 'scoped memory for decoder_forward.1']
    #allocation4 [shape = 's32[1]{0}', space=sflag, size = 0x4, scoped, tag = 'scoped memory for decoder_forward.1']
    #allocation5 [shape = 'u8[507904]{0}', space=vmem, size = 0x7c000, scoped, tag = 'input window, operand 1, single buffered']
    #allocation6 [shape = 's32[1]{0}', space=sflag, size = 0x4, scoped, tag = 'scoped memory for decoder_forward.1']
    #allocation7 [shape = 'u8[1024]{0}', space=vmem, size = 0x400, scoped, tag = 'output window, operand 0, single buffered']
    %7 = vsyncpa [#allocation3], 0
    %8 = vsyncpa [#allocation6], 0
    %9 = vsyncpa [#allocation4], 0
    // Predicated region
    $region2: #{decoder_forward.1} parent=1 // pred_check
      _
    $region3: #{decoder_forward.1} parent=1 // pred_check_branch
      %11 = sbr.rel (0) target = $region5
    $region4: #{decoder_forward.1} parent=1 // pred_region
      %13 = vsyncadd [#allocation3], 0
      %s15 = sshll.u32 %s0, 4
      %s16 = int_to_ptr.hbm [resolvable:$true] %s15
      %s17 = sshll.u32 [#allocation2], 4
      %s18 = int_to_ptr.vmem [resolvable:$true] %s17
      %20 = dma.hbm_to_vmem [thread:$0]  %s16, 32, %s18, [#allocation3]
    $region5: #{decoder_forward.1} parent=1 // pred_fallthru
      _
    // Predicated region
    $region6: #{decoder_forward.1} parent=1 // pred_check
      _
    $region7: #{decoder_forward.1} parent=1 // pred_check_branch
      %22 = sbr.rel (0) target = $region9
    $region8: #{decoder_forward.1} parent=1 // pred_region
      %24 = vsyncadd [#allocation6], 0
      %s25 = sshll.u32 %s1, 4
      %s26 = int_to_ptr.hbm [resolvable:$true] %s25
      %s27 = sshll.u32 [#allocation5], 4
      %s28 = int_to_ptr.vmem [resolvable:$true] %s27
      %33 = dma.hbm_to_vmem [thread:$0]  %s26, 15872, %s28, [#allocation6], 512, 512, 32
    $region9: #{decoder_forward.1} parent=1 // pred_fallthru
      _
    // Predicated region
    $region10: #{decoder_forward.1} parent=1 // pred_check
      _
    $region11: #{decoder_forward.1} parent=1 // pred_check_branch
      %35 = sbr.rel (0) target = $region13
    $region12: #{decoder_forward.1} parent=1 // pred_region
      %37 = dma.done [#allocation3], 32
    $region13: #{decoder_forward.1} parent=1 // pred_fallthru
      _
    // Predicated region
    $region14: #{decoder_forward.1} parent=1 // pred_check
      _
    $region15: #{decoder_forward.1} parent=1 // pred_check_branch
      %39 = sbr.rel (0) target = $region17
    $region16: #{decoder_forward.1} parent=1 // pred_region
      %41 = dma.done [#allocation6], 15872
    $region17: #{decoder_forward.1} parent=1 // pred_fallthru
      _
    %v42 = vld [vmem:[#allocation5] sm:$0xff]
    %v43 = vld [vmem:[#allocation5 + $0x8] sm:$0xff]
    %v44 = vld [vmem:[#allocation5 + $0x10] sm:$0xff]
    %v45 = vld [vmem:[#allocation5 + $0x18] sm:$0xff]
    %v46 = vld [vmem:[#allocation5 + $0x20] sm:$0xff]
    %v47 = vld [vmem:[#allocation5 + $0x28] sm:$0xff]
    %v48 = vld [vmem:[#allocation5 + $0x30] sm:$0xff]
    %v49 = vld [vmem:[#allocation5 + $0x38] sm:$0xff]
    %v50 = vld [vmem:[#allocation5 + $0x40] sm:$0xff]
    %v51 = vld [vmem:[#allocation5 + $0x48] sm:$0xff]
    %v52 = vld [vmem:[#allocation5 + $0x50] sm:$0xff]
    %v53 = vld [vmem:[#allocation5 + $0x58] sm:$0xff]
    %v54 = vld [vmem:[#allocation5 + $0x60] sm:$0xff]
    %v55 = vld [vmem:[#allocation5 + $0x68] sm:$0xff]
    %v56 = vld [vmem:[#allocation5 + $0x70] sm:$0xff]
    %v57 = vld [vmem:[#allocation5 + $0x78] sm:$0xff]
    %v58 = vld [vmem:[#allocation5 + $0x80] sm:$0xff]
    %v59 = vld [vmem:[#allocation5 + $0x88] sm:$0xff]
    %v60 = vld [vmem:[#allocation5 + $0x90] sm:$0xff]
    %v61 = vld [vmem:[#allocation5 + $0x98] sm:$0xff]
    %v62 = vld [vmem:[#allocation5 + $0xa0] sm:$0xff]
    %v63 = vld [vmem:[#allocation5 + $0xa8] sm:$0xff]
    %v64 = vld [vmem:[#allocation5 + $0xb0] sm:$0xff]
    %v65 = vld [vmem:[#allocation5 + $0xb8] sm:$0xff]
    %v66 = vld [vmem:[#allocation5 + $0xc0] sm:$0xff]
    %v67 = vld [vmem:[#allocation5 + $0xc8] sm:$0xff]
    %v68 = vld [vmem:[#allocation5 + $0xd0] sm:$0xff]
    %v69 = vld [vmem:[#allocation5 + $0xd8] sm:$0xff]
    %v70 = vld [vmem:[#allocation5 + $0xe0] sm:$0xff]
    %v71 = vld [vmem:[#allocation5 + $0xe8] sm:$0xff]
    %v72 = vld [vmem:[#allocation5 + $0xf0] sm:$0xff]
    %v73 = vld [vmem:[#allocation5 + $0xf8] sm:$0xff]
    %s74 = scalar_lea.vmem [#allocation5], 256
    %v75 = vld [vmem:[%s74] ss:$8 sm:$0xf]
    %v76 = vld [vmem:[#allocation5 + $0x120] sm:$0xff]
    %v77 = vld [vmem:[#allocation5 + $0x128] sm:$0xff]
    %v78 = vld [vmem:[#allocation5 + $0x130] sm:$0xff]
    %v79 = vld [vmem:[#allocation5 + $0x138] sm:$0xff]
    %v80 = vld [vmem:[#allocation5 + $0x140] sm:$0xff]
    %v81 = vld [vmem:[#allocation5 + $0x148] sm:$0xff]
    %v82 = vld [vmem:[#allocation5 + $0x150] sm:$0xff]
    %v83 = vld [vmem:[#allocation5 + $0x158] sm:$0xff]
    %v84 = vld [vmem:[#allocation5 + $0x160] sm:$0xff]
    %v85 = vld [vmem:[#allocation5 + $0x168] sm:$0xff]
    %v86 = vld [vmem:[#allocation5 + $0x170] sm:$0xff]
    %v87 = vld [vmem:[#allocation5 + $0x178] sm:$0xff]
    %v88 = vld [vmem:[#allocation5 + $0x180] sm:$0xff]
    %v89 = vld [vmem:[#allocation5 + $0x188] sm:$0xff]
    %v90 = vld [vmem:[#allocation5 + $0x190] sm:$0xff]
    %v91 = vld [vmem:[#allocation5 + $0x198] sm:$0xff]
    %v92 = vld [vmem:[#allocation5 + $0x1a0] sm:$0xff]
    %v93 = vld [vmem:[#allocation5 + $0x1a8] sm:$0xff]
    %v94 = vld [vmem:[#allocation5 + $0x1b0] sm:$0xff]
    %v95 = vld [vmem:[#allocation5 + $0x1b8] sm:$0xff]
    %v96 = vld [vmem:[#allocation5 + $0x1c0] sm:$0xff]
    %v97 = vld [vmem:[#allocation5 + $0x1c8] sm:$0xff]
    %v98 = vld [vmem:[#allocation5 + $0x1d0] sm:$0xff]
    %v99 = vld [vmem:[#allocation5 + $0x1d8] sm:$0xff]
    %v100 = vld [vmem:[#allocation5 + $0x1e0] sm:$0xff]
    %v101 = vld [vmem:[#allocation5 + $0x1e8] sm:$0xff]
    %v102 = vld [vmem:[#allocation5 + $0x1f0] sm:$0xff]
    %v103 = vld [vmem:[#allocation5 + $0x1f8] sm:$0xff]
    %v104 = vld [vmem:[#allocation5 + $0x200] sm:$0xff]
    %v105 = vld [vmem:[#allocation5 + $0x208] sm:$0xff]
    %v106 = vld [vmem:[#allocation5 + $0x210] sm:$0xff]
    %v107 = vld [vmem:[#allocation5 + $0x218] sm:$0xff]
    %v108 = vld [vmem:[#allocation5 + $0x220] sm:$0xff]
    %v109 = vld [vmem:[#allocation5 + $0x228] sm:$0xff]
    %v110 = vld [vmem:[#allocation5 + $0x230] sm:$0xff]
    %v111 = vld [vmem:[#allocation5 + $0x238] sm:$0xff]
    %v112 = vld [vmem:[#allocation5 + $0x240] sm:$0xff]
    %v113 = vld [vmem:[#allocation5 + $0x248] sm:$0xff]
    %v114 = vld [vmem:[#allocation5 + $0x250] sm:$0xff]
    %v115 = vld [vmem:[#allocation5 + $0x258] sm:$0xff]
    %v116 = vld [vmem:[#allocation5 + $0x260] sm:$0xff]
    %v117 = vld [vmem:[#allocation5 + $0x268] sm:$0xff]
    %v118 = vld [vmem:[#allocation5 + $0x270] sm:$0xff]
    %v119 = vld [vmem:[#allocation5 + $0x278] sm:$0xff]
    %v120 = vld [vmem:[#allocation5 + $0x280] sm:$0xff]
    %v121 = vld [vmem:[#allocation5 + $0x288] sm:$0xff]
    %v122 = vld [vmem:[#allocation5 + $0x290] sm:$0xff]
    %v123 = vld [vmem:[#allocation5 + $0x298] sm:$0xff]
    %s124 = scalar_lea.vmem [#allocation5], 672
    %v125 = vld [vmem:[%s124] ss:$8 sm:$0xf]
    %v126 = vld [vmem:[#allocation5 + $0x2c0] sm:$0xff]
    %v127 = vld [vmem:[#allocation5 + $0x2e0] sm:$0xff]
    %v128 = vld [vmem:[#allocation5 + $0x300] sm:$0xff]
    %v129 = vld [vmem:[#allocation5 + $0x320] sm:$0xff]
    %v130 = vld [vmem:[#allocation5 + $0x340] sm:$0xff]
    %v131 = vld [vmem:[#allocation5 + $0x360] sm:$0xff]
    %v132 = vld [vmem:[#allocation5 + $0x380] sm:$0xff]
    %v133 = vld [vmem:[#allocation5 + $0x3a0] sm:$0xff]
    %v134 = vld [vmem:[#allocation5 + $0x3c0] ss:$0 sm:$0xff]
    %v135 = vld [vmem:[#allocation2] sm:$0x3]
    %v137 = vperm.slane %v75, 0
    %v138 = vperm.slane %v75, 1
    %v139 = vperm.slane %v75, 2
    %v140 = vperm.slane %v75, 3
    %vm145 = vcmask 261120
    %v147 = vsel %vm145, %v135, 0
    %149 = vmatpush.msra.mxu0 0.0
    %150 = vmatpush.msra.mxu0 0.0
    %151 = vmatpush.msra.mxu0 0.0
    %152 = vmatpush.msra.mxu0 0.0
    %153 = vmatpush.msra.mxu0 0.0
    %154 = vmatpush.msra.mxu0 0.0
    %155 = vmatpush.msra.mxu0 0.0
    %156 = vmatpush.msra.mxu0 0.0
    %157 = vmatpush.msra.mxu0 0.0
    %158 = vmatpush.msra.mxu0 0.0
    %159 = vmatpush.msra.mxu0 0.0
    %160 = vmatpush.msra.mxu0 0.0
    %161 = vmatpush.msra.mxu0 %v54
    %162 = vmatpush.msra.mxu0 %v50
    %163 = vmatpush.msra.mxu0 %v46
    %164 = vmatpush.msra.mxu0 %v42
    %165 = vmatmul.f32.gmra.mxu0 %v147
    %v166 = vpop.f32.mrf.mxu0
    %v167 = vadd.f32 %v137, %v166
    %168 = vdwg.mxu0
    %169 = vmatpush.msra.mxu0 0.0
    %170 = vmatpush.msra.mxu0 0.0
    %171 = vmatpush.msra.mxu0 0.0
    %172 = vmatpush.msra.mxu0 0.0
    %173 = vmatpush.msra.mxu0 0.0
    %174 = vmatpush.msra.mxu0 0.0
    %175 = vmatpush.msra.mxu0 0.0
    %176 = vmatpush.msra.mxu0 0.0
    %177 = vmatpush.msra.mxu0 0.0
    %178 = vmatpush.msra.mxu0 0.0
    %179 = vmatpush.msra.mxu0 0.0
    %180 = vmatpush.msra.mxu0 0.0
    %181 = vmatpush.msra.mxu0 %v55
    %182 = vmatpush.msra.mxu0 %v51
    %183 = vmatpush.msra.mxu0 %v47
    %184 = vmatpush.msra.mxu0 %v43
    %185 = vmatmul.f32.gmra.mxu0 %v147
    %v186 = vpop.f32.mrf.mxu0
    %v187 = vadd.f32 %v138, %v186
    %188 = vdwg.mxu0
    %189 = vmatpush.msra.mxu0 0.0
    %190 = vmatpush.msra.mxu0 0.0
    %191 = vmatpush.msra.mxu0 0.0
    %192 = vmatpush.msra.mxu0 0.0
    %193 = vmatpush.msra.mxu0 0.0
    %194 = vmatpush.msra.mxu0 0.0
    %195 = vmatpush.msra.mxu0 0.0
    %196 = vmatpush.msra.mxu0 0.0
    %197 = vmatpush.msra.mxu0 0.0
    %198 = vmatpush.msra.mxu0 0.0
    %199 = vmatpush.msra.mxu0 0.0
    %200 = vmatpush.msra.mxu0 0.0
    %201 = vmatpush.msra.mxu0 %v56
    %202 = vmatpush.msra.mxu0 %v52
    %203 = vmatpush.msra.mxu0 %v48
    %204 = vmatpush.msra.mxu0 %v44
    %205 = vmatmul.f32.gmra.mxu0 %v147
    %v206 = vpop.f32.mrf.mxu0
    %v207 = vadd.f32 %v139, %v206
    %208 = vdwg.mxu0
    %209 = vmatpush.msra.mxu0 0.0
    %210 = vmatpush.msra.mxu0 0.0
    %211 = vmatpush.msra.mxu0 0.0
    %212 = vmatpush.msra.mxu0 0.0
    %213 = vmatpush.msra.mxu0 0.0
    %214 = vmatpush.msra.mxu0 0.0
    %215 = vmatpush.msra.mxu0 0.0
    %216 = vmatpush.msra.mxu0 0.0
    %217 = vmatpush.msra.mxu0 0.0
    %218 = vmatpush.msra.mxu0 0.0
    %219 = vmatpush.msra.mxu0 0.0
    %220 = vmatpush.msra.mxu0 0.0
    %221 = vmatpush.msra.mxu0 %v57
    %222 = vmatpush.msra.mxu0 %v53
    %223 = vmatpush.msra.mxu0 %v49
    %224 = vmatpush.msra.mxu0 %v45
    %225 = vmatmul.f32.gmra.mxu0 %v147
    %v226 = vpop.f32.mrf.mxu0
    %v227 = vadd.f32 %v140, %v226
    %228 = vdwg.mxu0
    %v230 = vperm.slane %v125, 0
    %v231 = vperm.slane %v125, 1
    %v232 = vperm.slane %v125, 2
    %v233 = vperm.slane %v125, 3
    %v239 = vsel %vm145, 0.0, 0
    %241 = vmatpush.msra.mxu0 0.0
    %242 = vmatpush.msra.mxu0 0.0
    %243 = vmatpush.msra.mxu0 0.0
    %244 = vmatpush.msra.mxu0 0.0
    %245 = vmatpush.msra.mxu0 0.0
    %246 = vmatpush.msra.mxu0 0.0
    %247 = vmatpush.msra.mxu0 0.0
    %248 = vmatpush.msra.mxu0 0.0
    %249 = vmatpush.msra.mxu0 0.0
    %250 = vmatpush.msra.mxu0 0.0
    %251 = vmatpush.msra.mxu0 0.0
    %252 = vmatpush.msra.mxu0 0.0
    %253 = vmatpush.msra.mxu0 %v70
    %254 = vmatpush.msra.mxu0 %v66
    %255 = vmatpush.msra.mxu0 %v62
    %256 = vmatpush.msra.mxu0 %v58
    %257 = vmatmul.f32.gmra.mxu0 %v239
    %v258 = vpop.f32.mrf.mxu0
    %v259 = vadd.f32 0.0, %v258
    %260 = vdwg.mxu0
    %261 = vmatpush.msra.mxu0 0.0
    %262 = vmatpush.msra.mxu0 0.0
    %263 = vmatpush.msra.mxu0 0.0
    %264 = vmatpush.msra.mxu0 0.0
    %265 = vmatpush.msra.mxu0 0.0
    %266 = vmatpush.msra.mxu0 0.0
    %267 = vmatpush.msra.mxu0 0.0
    %268 = vmatpush.msra.mxu0 0.0
    %269 = vmatpush.msra.mxu0 0.0
    %270 = vmatpush.msra.mxu0 0.0
    %271 = vmatpush.msra.mxu0 0.0
    %272 = vmatpush.msra.mxu0 0.0
    %273 = vmatpush.msra.mxu0 %v71
    %274 = vmatpush.msra.mxu0 %v67
    %275 = vmatpush.msra.mxu0 %v63
    %276 = vmatpush.msra.mxu0 %v59
    %277 = vmatmul.f32.gmra.mxu0 %v239
    %v278 = vpop.f32.mrf.mxu0
    %v279 = vadd.f32 0.0, %v278
    %280 = vdwg.mxu0
    %281 = vmatpush.msra.mxu0 0.0
    %282 = vmatpush.msra.mxu0 0.0
    %283 = vmatpush.msra.mxu0 0.0
    %284 = vmatpush.msra.mxu0 0.0
    %285 = vmatpush.msra.mxu0 0.0
    %286 = vmatpush.msra.mxu0 0.0
    %287 = vmatpush.msra.mxu0 0.0
    %288 = vmatpush.msra.mxu0 0.0
    %289 = vmatpush.msra.mxu0 0.0
    %290 = vmatpush.msra.mxu0 0.0
    %291 = vmatpush.msra.mxu0 0.0
    %292 = vmatpush.msra.mxu0 0.0
    %293 = vmatpush.msra.mxu0 %v72
    %294 = vmatpush.msra.mxu0 %v68
    %295 = vmatpush.msra.mxu0 %v64
    %296 = vmatpush.msra.mxu0 %v60
    %297 = vmatmul.f32.gmra.mxu0 %v239
    %v298 = vpop.f32.mrf.mxu0
    %v299 = vadd.f32 0.0, %v298
    %300 = vdwg.mxu0
    %301 = vmatpush.msra.mxu0 0.0
    %302 = vmatpush.msra.mxu0 0.0
    %303 = vmatpush.msra.mxu0 0.0
    %304 = vmatpush.msra.mxu0 0.0
    %305 = vmatpush.msra.mxu0 0.0
    %306 = vmatpush.msra.mxu0 0.0
    %307 = vmatpush.msra.mxu0 0.0
    %308 = vmatpush.msra.mxu0 0.0
    %309 = vmatpush.msra.mxu0 0.0
    %310 = vmatpush.msra.mxu0 0.0
    %311 = vmatpush.msra.mxu0 0.0
    %312 = vmatpush.msra.mxu0 0.0
    %313 = vmatpush.msra.mxu0 %v73
    %314 = vmatpush.msra.mxu0 %v69
    %315 = vmatpush.msra.mxu0 %v65
    %316 = vmatpush.msra.mxu0 %v61
    %317 = vmatmul.f32.gmra.mxu0 %v239
    %v318 = vpop.f32.mrf.mxu0
    %v319 = vadd.f32 0.0, %v318
    %320 = vdwg.mxu0
    %v321 = vadd.f32 %v167, %v259
    %v322 = vadd.f32 %v187, %v279
    %v323 = vadd.f32 %v207, %v299
    %v324 = vadd.f32 %v227, %v319
    %v325 = vxor.u32 %v321, 2147483648
    %v326 = vmul.f32 %v325, 1.442695
    %v327 = vpow.pop %v326
    %v328 = vadd.f32 %v327, 1.0
    %v329 = vrcp.pop %v328
    %v330 = vmul.f32 %v328, %v329
    %v331 = vsub.f32 1.0, %v330
    %v332 = vmul.f32 %v329, %v331
    %v333 = vadd.f32 %v329, %v332
    %vm334 = vweird.f32 %v328
    %vm335 = vweird.f32 %v329
    %vm336 = vmor %vm334, %vm335
    %v337 = vsel %vm336, %v329, %v333
    %v338 = vand.u32 2147483647, %v328
    %vm339 = vcmp.eq.f32.partialorder %v338, 8.507059e+37
    %v340 = vand.u32 %v328, 2147483648
    %v341 = vor.u32 1.1754944e-38, %v340
    %v342 = vsel %vm339, %v341, %v337
    %v343 = vmul.f32 1.0, %v342
    %v344 = vxor.u32 %v322, 2147483648
    %v345 = vmul.f32 %v344, 1.442695
    %v346 = vpow.pop %v345
    %v347 = vadd.f32 %v346, 1.0
    %v348 = vrcp.pop %v347
    %v349 = vmul.f32 %v347, %v348
    %v350 = vsub.f32 1.0, %v349
    %v351 = vmul.f32 %v348, %v350
    %v352 = vadd.f32 %v348, %v351
    %vm353 = vweird.f32 %v347
    %vm354 = vweird.f32 %v348
    %vm355 = vmor %vm353, %vm354
    %v356 = vsel %vm355, %v348, %v352
    %v357 = vand.u32 2147483647, %v347
    %vm358 = vcmp.eq.f32.partialorder %v357, 8.507059e+37
    %v359 = vand.u32 %v347, 2147483648
    %v360 = vor.u32 1.1754944e-38, %v359
    %v361 = vsel %vm358, %v360, %v356
    %v362 = vmul.f32 1.0, %v361
    %v363 = vtanh.pop %v323
    %v364 = vxor.u32 %v324, 2147483648
    %v365 = vmul.f32 %v364, 1.442695
    %v366 = vpow.pop %v365
    %v367 = vadd.f32 %v366, 1.0
    %v368 = vrcp.pop %v367
    %v369 = vmul.f32 %v367, %v368
    %v370 = vsub.f32 1.0, %v369
    %v371 = vmul.f32 %v368, %v370
    %v372 = vadd.f32 %v368, %v371
    %vm373 = vweird.f32 %v367
    %vm374 = vweird.f32 %v368
    %vm375 = vmor %vm373, %vm374
    %v376 = vsel %vm375, %v368, %v372
    %v377 = vand.u32 2147483647, %v367
    %vm378 = vcmp.eq.f32.partialorder %v377, 8.507059e+37
    %v379 = vand.u32 %v367, 2147483648
    %v380 = vor.u32 1.1754944e-38, %v379
    %v381 = vsel %vm378, %v380, %v376
    %v382 = vmul.f32 1.0, %v381
    %v383 = vmul.f32 %v362, 0.0
    %v384 = vmul.f32 %v343, %v363
    %v385 = vadd.f32 %v383, %v384
    %v386 = vtanh.pop %v385
    %v387 = vmul.f32 %v382, %v386
    %v388 = vsel %vm145, %v387, 0.0
    %vm389 = vcmask 785408
    %v391 = vsel %vm389, %v388, 0
    %393 = vmatpush.msra.mxu0 0.0
    %394 = vmatpush.msra.mxu0 0.0
    %395 = vmatpush.msra.mxu0 0.0
    %396 = vmatpush.msra.mxu0 0.0
    %397 = vmatpush.msra.mxu0 %v120
    %398 = vmatpush.msra.mxu0 %v116
    %399 = vmatpush.msra.mxu0 %v112
    %400 = vmatpush.msra.mxu0 %v108
    %401 = vmatpush.msra.mxu0 %v104
    %402 = vmatpush.msra.mxu0 %v100
    %403 = vmatpush.msra.mxu0 %v96
    %404 = vmatpush.msra.mxu0 %v92
    %405 = vmatpush.msra.mxu0 %v88
    %406 = vmatpush.msra.mxu0 %v84
    %407 = vmatpush.msra.mxu0 %v80
    %408 = vmatpush.msra.mxu0 %v76
    %409 = vmatmul.f32.gmra.mxu0 %v391
    %v410 = vpop.f32.mrf.mxu0
    %v411 = vadd.f32 %v230, %v410
    %412 = vdwg.mxu0
    %413 = vmatpush.msra.mxu0 0.0
    %414 = vmatpush.msra.mxu0 0.0
    %415 = vmatpush.msra.mxu0 0.0
    %416 = vmatpush.msra.mxu0 0.0
    %417 = vmatpush.msra.mxu0 %v121
    %418 = vmatpush.msra.mxu0 %v117
    %419 = vmatpush.msra.mxu0 %v113
    %420 = vmatpush.msra.mxu0 %v109
    %421 = vmatpush.msra.mxu0 %v105
    %422 = vmatpush.msra.mxu0 %v101
    %423 = vmatpush.msra.mxu0 %v97
    %424 = vmatpush.msra.mxu0 %v93
    %425 = vmatpush.msra.mxu0 %v89
    %426 = vmatpush.msra.mxu0 %v85
    %427 = vmatpush.msra.mxu0 %v81
    %428 = vmatpush.msra.mxu0 %v77
    %429 = vmatmul.f32.gmra.mxu0 %v391
    %v430 = vpop.f32.mrf.mxu0
    %v431 = vadd.f32 %v231, %v430
    %432 = vdwg.mxu0
    %433 = vmatpush.msra.mxu0 0.0
    %434 = vmatpush.msra.mxu0 0.0
    %435 = vmatpush.msra.mxu0 0.0
    %436 = vmatpush.msra.mxu0 0.0
    %437 = vmatpush.msra.mxu0 %v122
    %438 = vmatpush.msra.mxu0 %v118
    %439 = vmatpush.msra.mxu0 %v114
    %440 = vmatpush.msra.mxu0 %v110
    %441 = vmatpush.msra.mxu0 %v106
    %442 = vmatpush.msra.mxu0 %v102
    %443 = vmatpush.msra.mxu0 %v98
    %444 = vmatpush.msra.mxu0 %v94
    %445 = vmatpush.msra.mxu0 %v90
    %446 = vmatpush.msra.mxu0 %v86
    %447 = vmatpush.msra.mxu0 %v82
    %448 = vmatpush.msra.mxu0 %v78
    %449 = vmatmul.f32.gmra.mxu0 %v391
    %v450 = vpop.f32.mrf.mxu0
    %v451 = vadd.f32 %v232, %v450
    %452 = vdwg.mxu0
    %453 = vmatpush.msra.mxu0 0.0
    %454 = vmatpush.msra.mxu0 0.0
    %455 = vmatpush.msra.mxu0 0.0
    %456 = vmatpush.msra.mxu0 0.0
    %457 = vmatpush.msra.mxu0 %v123
    %458 = vmatpush.msra.mxu0 %v119
    %459 = vmatpush.msra.mxu0 %v115
    %460 = vmatpush.msra.mxu0 %v111
    %461 = vmatpush.msra.mxu0 %v107
    %462 = vmatpush.msra.mxu0 %v103
    %463 = vmatpush.msra.mxu0 %v99
    %464 = vmatpush.msra.mxu0 %v95
    %465 = vmatpush.msra.mxu0 %v91
    %466 = vmatpush.msra.mxu0 %v87
    %467 = vmatpush.msra.mxu0 %v83
    %468 = vmatpush.msra.mxu0 %v79
    %469 = vmatmul.f32.gmra.mxu0 %v391
    %v470 = vpop.f32.mrf.mxu0
    %v471 = vadd.f32 %v233, %v470
    %472 = vdwg.mxu0
    %v473 = vxor.u32 %v411, 2147483648
    %v474 = vmul.f32 %v473, 1.442695
    %v475 = vpow.pop %v474
    %v476 = vadd.f32 %v475, 1.0
    %v477 = vrcp.pop %v476
    %v478 = vmul.f32 %v476, %v477
    %v479 = vsub.f32 1.0, %v478
    %v480 = vmul.f32 %v477, %v479
    %v481 = vadd.f32 %v477, %v480
    %vm482 = vweird.f32 %v476
    %vm483 = vweird.f32 %v477
    %vm484 = vmor %vm482, %vm483
    %v485 = vsel %vm484, %v477, %v481
    %v486 = vand.u32 2147483647, %v476
    %vm487 = vcmp.eq.f32.partialorder %v486, 8.507059e+37
    %v488 = vand.u32 %v476, 2147483648
    %v489 = vor.u32 1.1754944e-38, %v488
    %v490 = vsel %vm487, %v489, %v485
    %v491 = vmul.f32 1.0, %v490
    %v492 = vxor.u32 %v431, 2147483648
    %v493 = vmul.f32 %v492, 1.442695
    %v494 = vpow.pop %v493
    %v495 = vadd.f32 %v494, 1.0
    %v496 = vrcp.pop %v495
    %v497 = vmul.f32 %v495, %v496
    %v498 = vsub.f32 1.0, %v497
    %v499 = vmul.f32 %v496, %v498
    %v500 = vadd.f32 %v496, %v499
    %vm501 = vweird.f32 %v495
    %vm502 = vweird.f32 %v496
    %vm503 = vmor %vm501, %vm502
    %v504 = vsel %vm503, %v496, %v500
    %v505 = vand.u32 2147483647, %v495
    %vm506 = vcmp.eq.f32.partialorder %v505, 8.507059e+37
    %v507 = vand.u32 %v495, 2147483648
    %v508 = vor.u32 1.1754944e-38, %v507
    %v509 = vsel %vm506, %v508, %v504
    %v510 = vmul.f32 1.0, %v509
    %v511 = vtanh.pop %v451
    %v512 = vxor.u32 %v471, 2147483648
    %v513 = vmul.f32 %v512, 1.442695
    %v514 = vpow.pop %v513
    %v515 = vadd.f32 %v514, 1.0
    %v516 = vrcp.pop %v515
    %v517 = vmul.f32 %v515, %v516
    %v518 = vsub.f32 1.0, %v517
    %v519 = vmul.f32 %v516, %v518
    %v520 = vadd.f32 %v516, %v519
    %vm521 = vweird.f32 %v515
    %vm522 = vweird.f32 %v516
    %vm523 = vmor %vm521, %vm522
    %v524 = vsel %vm523, %v516, %v520
    %v525 = vand.u32 2147483647, %v515
    %vm526 = vcmp.eq.f32.partialorder %v525, 8.507059e+37
    %v527 = vand.u32 %v515, 2147483648
    %v528 = vor.u32 1.1754944e-38, %v527
    %v529 = vsel %vm526, %v528, %v524
    %v530 = vmul.f32 1.0, %v529
    %v531 = vmul.f32 %v510, 0.0
    %v532 = vmul.f32 %v491, %v511
    %v533 = vadd.f32 %v531, %v532
    %v534 = vtanh.pop %v533
    %v535 = vmul.f32 %v530, %v534
    %vm536 = vcmask 523264
    %v538 = vsel %vm536, %v535, 0
    %540 = vmatpush.msra.mxu0 0.0
    %541 = vmatpush.msra.mxu0 0.0
    %542 = vmatpush.msra.mxu0 0.0
    %543 = vmatpush.msra.mxu0 0.0
    %544 = vmatpush.msra.mxu0 0.0
    %545 = vmatpush.msra.mxu0 0.0
    %546 = vmatpush.msra.mxu0 0.0
    %547 = vmatpush.msra.mxu0 0.0
    %548 = vmatpush.msra.mxu0 %v133
    %549 = vmatpush.msra.mxu0 %v132
    %550 = vmatpush.msra.mxu0 %v131
    %551 = vmatpush.msra.mxu0 %v130
    %552 = vmatpush.msra.mxu0 %v129
    %553 = vmatpush.msra.mxu0 %v128
    %554 = vmatpush.msra.mxu0 %v127
    %555 = vmatpush.msra.mxu0 %v126
    %556 = vmatmul.f32.gmra.mxu0 %v538
    %v557 = vpop.f32.mrf.mxu0
    %v558 = vadd.f32 0.0, %v557
    %559 = vdwg.mxu0
    %v561 = vsel %vm145, %v387, 0
    %563 = vmatpush.msra.mxu0 0.0
    %564 = vmatpush.msra.mxu0 0.0
    %565 = vmatpush.msra.mxu0 0.0
    %566 = vmatpush.msra.mxu0 0.0
    %567 = vmatpush.msra.mxu0 0.0
    %568 = vmatpush.msra.mxu0 0.0
    %569 = vmatpush.msra.mxu0 0.0
    %570 = vmatpush.msra.mxu0 0.0
    %571 = vmatpush.msra.mxu0 0.0
    %572 = vmatpush.msra.mxu0 0.0
    %573 = vmatpush.msra.mxu0 0.0
    %574 = vmatpush.msra.mxu0 0.0
    %575 = vmatpush.msra.mxu0 %v70
    %576 = vmatpush.msra.mxu0 %v66
    %577 = vmatpush.msra.mxu0 %v62
    %578 = vmatpush.msra.mxu0 %v58
    %579 = vmatmul.f32.gmra.mxu0 %v561
    %v580 = vpop.f32.mrf.mxu0
    %v581 = vadd.f32 0.0, %v580
    %582 = vdwg.mxu0
    %583 = vmatpush.msra.mxu0 0.0
    %584 = vmatpush.msra.mxu0 0.0
    %585 = vmatpush.msra.mxu0 0.0
    %586 = vmatpush.msra.mxu0 0.0
    %587 = vmatpush.msra.mxu0 0.0
    %588 = vmatpush.msra.mxu0 0.0
    %589 = vmatpush.msra.mxu0 0.0
    %590 = vmatpush.msra.mxu0 0.0
    %591 = vmatpush.msra.mxu0 0.0
    %592 = vmatpush.msra.mxu0 0.0
    %593 = vmatpush.msra.mxu0 0.0
    %594 = vmatpush.msra.mxu0 0.0
    %595 = vmatpush.msra.mxu0 %v71
    %596 = vmatpush.msra.mxu0 %v67
    %597 = vmatpush.msra.mxu0 %v63
    %598 = vmatpush.msra.mxu0 %v59
    %599 = vmatmul.f32.gmra.mxu0 %v561
    %v600 = vpop.f32.mrf.mxu0
    %v601 = vadd.f32 0.0, %v600
    %602 = vdwg.mxu0
    %603 = vmatpush.msra.mxu0 0.0
    %604 = vmatpush.msra.mxu0 0.0
    %605 = vmatpush.msra.mxu0 0.0
    %606 = vmatpush.msra.mxu0 0.0
    %607 = vmatpush.msra.mxu0 0.0
    %608 = vmatpush.msra.mxu0 0.0
    %609 = vmatpush.msra.mxu0 0.0
    %610 = vmatpush.msra.mxu0 0.0
    %611 = vmatpush.msra.mxu0 0.0
    %612 = vmatpush.msra.mxu0 0.0
    %613 = vmatpush.msra.mxu0 0.0
    %614 = vmatpush.msra.mxu0 0.0
    %615 = vmatpush.msra.mxu0 %v72
    %616 = vmatpush.msra.mxu0 %v68
    %617 = vmatpush.msra.mxu0 %v64
    %618 = vmatpush.msra.mxu0 %v60
    %619 = vmatmul.f32.gmra.mxu0 %v561
    %v620 = vpop.f32.mrf.mxu0
    %v621 = vadd.f32 0.0, %v620
    %622 = vdwg.mxu0
    %623 = vmatpush.msra.mxu0 0.0
    %624 = vmatpush.msra.mxu0 0.0
    %625 = vmatpush.msra.mxu0 0.0
    %626 = vmatpush.msra.mxu0 0.0
    %627 = vmatpush.msra.mxu0 0.0
    %628 = vmatpush.msra.mxu0 0.0
    %629 = vmatpush.msra.mxu0 0.0
    %630 = vmatpush.msra.mxu0 0.0
    %631 = vmatpush.msra.mxu0 0.0
    %632 = vmatpush.msra.mxu0 0.0
    %633 = vmatpush.msra.mxu0 0.0
    %634 = vmatpush.msra.mxu0 0.0
    %635 = vmatpush.msra.mxu0 %v73
    %636 = vmatpush.msra.mxu0 %v69
    %637 = vmatpush.msra.mxu0 %v65
    %638 = vmatpush.msra.mxu0 %v61
    %639 = vmatmul.f32.gmra.mxu0 %v561
    %v640 = vpop.f32.mrf.mxu0
    %v641 = vadd.f32 0.0, %v640
    %642 = vdwg.mxu0
    %v643 = vadd.f32 %v167, %v581
    %v644 = vadd.f32 %v187, %v601
    %v645 = vadd.f32 %v207, %v621
    %v646 = vadd.f32 %v227, %v641
    %v647 = vxor.u32 %v643, 2147483648
    %v648 = vmul.f32 %v647, 1.442695
    %v649 = vpow.pop %v648
    %v650 = vadd.f32 %v649, 1.0
    %v651 = vrcp.pop %v650
    %v652 = vmul.f32 %v650, %v651
    %v653 = vsub.f32 1.0, %v652
    %v654 = vmul.f32 %v651, %v653
    %v655 = vadd.f32 %v651, %v654
    %vm656 = vweird.f32 %v650
    %vm657 = vweird.f32 %v651
    %vm658 = vmor %vm656, %vm657
    %v659 = vsel %vm658, %v651, %v655
    %v660 = vand.u32 2147483647, %v650
    %vm661 = vcmp.eq.f32.partialorder %v660, 8.507059e+37
    %v662 = vand.u32 %v650, 2147483648
    %v663 = vor.u32 1.1754944e-38, %v662
    %v664 = vsel %vm661, %v663, %v659
    %v665 = vmul.f32 1.0, %v664
    %v666 = vxor.u32 %v644, 2147483648
    %v667 = vmul.f32 %v666, 1.442695
    %v668 = vpow.pop %v667
    %v669 = vadd.f32 %v668, 1.0
    %v670 = vrcp.pop %v669
    %v671 = vmul.f32 %v669, %v670
    %v672 = vsub.f32 1.0, %v671
    %v673 = vmul.f32 %v670, %v672
    %v674 = vadd.f32 %v670, %v673
    %vm675 = vweird.f32 %v669
    %vm676 = vweird.f32 %v670
    %vm677 = vmor %vm675, %vm676
    %v678 = vsel %vm677, %v670, %v674
    %v679 = vand.u32 2147483647, %v669
    %vm680 = vcmp.eq.f32.partialorder %v679, 8.507059e+37
    %v681 = vand.u32 %v669, 2147483648
    %v682 = vor.u32 1.1754944e-38, %v681
    %v683 = vsel %vm680, %v682, %v678
    %v684 = vmul.f32 1.0, %v683
    %v685 = vtanh.pop %v645
    %v686 = vxor.u32 %v646, 2147483648
    %v687 = vmul.f32 %v686, 1.442695
    %v688 = vpow.pop %v687
    %v689 = vadd.f32 %v688, 1.0
    %v690 = vrcp.pop %v689
    %v691 = vmul.f32 %v689, %v690
    %v692 = vsub.f32 1.0, %v691
    %v693 = vmul.f32 %v690, %v692
    %v694 = vadd.f32 %v690, %v693
    %vm695 = vweird.f32 %v689
    %vm696 = vweird.f32 %v690
    %vm697 = vmor %vm695, %vm696
    %v698 = vsel %vm697, %v690, %v694
    %v699 = vand.u32 2147483647, %v689
    %vm700 = vcmp.eq.f32.partialorder %v699, 8.507059e+37
    %v701 = vand.u32 %v689, 2147483648
    %v702 = vor.u32 1.1754944e-38, %v701
    %v703 = vsel %vm700, %v702, %v698
    %v704 = vmul.f32 1.0, %v703
    %v705 = vmul.f32 %v684, %v385
    %v706 = vmul.f32 %v665, %v685
    %v707 = vadd.f32 %v705, %v706
    %v708 = vtanh.pop %v707
    %v709 = vmul.f32 %v704, %v708
    %710 = vrot.lane.b32.xlu0 %v535, 32
    %v711 = vpop.permute.xlu0 %710
    %v713 = vsel %vm145, %v709, %v711
    %v715 = vsel %vm389, %v713, 0
    %717 = vmatpush.msra.mxu0 0.0
    %718 = vmatpush.msra.mxu0 0.0
    %719 = vmatpush.msra.mxu0 0.0
    %720 = vmatpush.msra.mxu0 0.0
    %721 = vmatpush.msra.mxu0 %v120
    %722 = vmatpush.msra.mxu0 %v116
    %723 = vmatpush.msra.mxu0 %v112
    %724 = vmatpush.msra.mxu0 %v108
    %725 = vmatpush.msra.mxu0 %v104
    %726 = vmatpush.msra.mxu0 %v100
    %727 = vmatpush.msra.mxu0 %v96
    %728 = vmatpush.msra.mxu0 %v92
    %729 = vmatpush.msra.mxu0 %v88
    %730 = vmatpush.msra.mxu0 %v84
    %731 = vmatpush.msra.mxu0 %v80
    %732 = vmatpush.msra.mxu0 %v76
    %733 = vmatmul.f32.gmra.mxu0 %v715
    %v734 = vpop.f32.mrf.mxu0
    %v735 = vadd.f32 %v230, %v734
    %736 = vdwg.mxu0
    %737 = vmatpush.msra.mxu0 0.0
    %738 = vmatpush.msra.mxu0 0.0
    %739 = vmatpush.msra.mxu0 0.0
    %740 = vmatpush.msra.mxu0 0.0
    %741 = vmatpush.msra.mxu0 %v121
    %742 = vmatpush.msra.mxu0 %v117
    %743 = vmatpush.msra.mxu0 %v113
    %744 = vmatpush.msra.mxu0 %v109
    %745 = vmatpush.msra.mxu0 %v105
    %746 = vmatpush.msra.mxu0 %v101
    %747 = vmatpush.msra.mxu0 %v97
    %748 = vmatpush.msra.mxu0 %v93
    %749 = vmatpush.msra.mxu0 %v89
    %750 = vmatpush.msra.mxu0 %v85
    %751 = vmatpush.msra.mxu0 %v81
    %752 = vmatpush.msra.mxu0 %v77
    %753 = vmatmul.f32.gmra.mxu0 %v715
    %v754 = vpop.f32.mrf.mxu0
    %v755 = vadd.f32 %v231, %v754
    %756 = vdwg.mxu0
    %757 = vmatpush.msra.mxu0 0.0
    %758 = vmatpush.msra.mxu0 0.0
    %759 = vmatpush.msra.mxu0 0.0
    %760 = vmatpush.msra.mxu0 0.0
    %761 = vmatpush.msra.mxu0 %v122
    %762 = vmatpush.msra.mxu0 %v118
    %763 = vmatpush.msra.mxu0 %v114
    %764 = vmatpush.msra.mxu0 %v110
    %765 = vmatpush.msra.mxu0 %v106
    %766 = vmatpush.msra.mxu0 %v102
    %767 = vmatpush.msra.mxu0 %v98
    %768 = vmatpush.msra.mxu0 %v94
    %769 = vmatpush.msra.mxu0 %v90
    %770 = vmatpush.msra.mxu0 %v86
    %771 = vmatpush.msra.mxu0 %v82
    %772 = vmatpush.msra.mxu0 %v78
    %773 = vmatmul.f32.gmra.mxu0 %v715
    %v774 = vpop.f32.mrf.mxu0
    %v775 = vadd.f32 %v232, %v774
    %776 = vdwg.mxu0
    %777 = vmatpush.msra.mxu0 0.0
    %778 = vmatpush.msra.mxu0 0.0
    %779 = vmatpush.msra.mxu0 0.0
    %780 = vmatpush.msra.mxu0 0.0
    %781 = vmatpush.msra.mxu0 %v123
    %782 = vmatpush.msra.mxu0 %v119
    %783 = vmatpush.msra.mxu0 %v115
    %784 = vmatpush.msra.mxu0 %v111
    %785 = vmatpush.msra.mxu0 %v107
    %786 = vmatpush.msra.mxu0 %v103
    %787 = vmatpush.msra.mxu0 %v99
    %788 = vmatpush.msra.mxu0 %v95
    %789 = vmatpush.msra.mxu0 %v91
    %790 = vmatpush.msra.mxu0 %v87
    %791 = vmatpush.msra.mxu0 %v83
    %792 = vmatpush.msra.mxu0 %v79
    %793 = vmatmul.f32.gmra.mxu0 %v715
    %v794 = vpop.f32.mrf.mxu0
    %v795 = vadd.f32 %v233, %v794
    %796 = vdwg.mxu0
    %v797 = vxor.u32 %v735, 2147483648
    %v798 = vmul.f32 %v797, 1.442695
    %v799 = vpow.pop %v798
    %v800 = vadd.f32 %v799, 1.0
    %v801 = vrcp.pop %v800
    %v802 = vmul.f32 %v800, %v801
    %v803 = vsub.f32 1.0, %v802
    %v804 = vmul.f32 %v801, %v803
    %v805 = vadd.f32 %v801, %v804
    %vm806 = vweird.f32 %v800
    %vm807 = vweird.f32 %v801
    %vm808 = vmor %vm806, %vm807
    %v809 = vsel %vm808, %v801, %v805
    %v810 = vand.u32 2147483647, %v800
    %vm811 = vcmp.eq.f32.partialorder %v810, 8.507059e+37
    %v812 = vand.u32 %v800, 2147483648
    %v813 = vor.u32 1.1754944e-38, %v812
    %v814 = vsel %vm811, %v813, %v809
    %v815 = vmul.f32 1.0, %v814
    %v816 = vxor.u32 %v755, 2147483648
    %v817 = vmul.f32 %v816, 1.442695
    %v818 = vpow.pop %v817
    %v819 = vadd.f32 %v818, 1.0
    %v820 = vrcp.pop %v819
    %v821 = vmul.f32 %v819, %v820
    %v822 = vsub.f32 1.0, %v821
    %v823 = vmul.f32 %v820, %v822
    %v824 = vadd.f32 %v820, %v823
    %vm825 = vweird.f32 %v819
    %vm826 = vweird.f32 %v820
    %vm827 = vmor %vm825, %vm826
    %v828 = vsel %vm827, %v820, %v824
    %v829 = vand.u32 2147483647, %v819
    %vm830 = vcmp.eq.f32.partialorder %v829, 8.507059e+37
    %v831 = vand.u32 %v819, 2147483648
    %v832 = vor.u32 1.1754944e-38, %v831
    %v833 = vsel %vm830, %v832, %v828
    %v834 = vmul.f32 1.0, %v833
    %v835 = vtanh.pop %v775
    %v836 = vxor.u32 %v795, 2147483648
    %v837 = vmul.f32 %v836, 1.442695
    %v838 = vpow.pop %v837
    %v839 = vadd.f32 %v838, 1.0
    %v840 = vrcp.pop %v839
    %v841 = vmul.f32 %v839, %v840
    %v842 = vsub.f32 1.0, %v841
    %v843 = vmul.f32 %v840, %v842
    %v844 = vadd.f32 %v840, %v843
    %vm845 = vweird.f32 %v839
    %vm846 = vweird.f32 %v840
    %vm847 = vmor %vm845, %vm846
    %v848 = vsel %vm847, %v840, %v844
    %v849 = vand.u32 2147483647, %v839
    %vm850 = vcmp.eq.f32.partialorder %v849, 8.507059e+37
    %v851 = vand.u32 %v839, 2147483648
    %v852 = vor.u32 1.1754944e-38, %v851
    %v853 = vsel %vm850, %v852, %v848
    %v854 = vmul.f32 1.0, %v853
    %v855 = vmul.f32 %v834, %v533
    %v856 = vmul.f32 %v815, %v835
    %v857 = vadd.f32 %v855, %v856
    %v858 = vtanh.pop %v857
    %v859 = vmul.f32 %v854, %v858
    %v861 = vsel %vm536, %v859, 0
    %863 = vmatpush.msra.mxu0 0.0
    %864 = vmatpush.msra.mxu0 0.0
    %865 = vmatpush.msra.mxu0 0.0
    %866 = vmatpush.msra.mxu0 0.0
    %867 = vmatpush.msra.mxu0 0.0
    %868 = vmatpush.msra.mxu0 0.0
    %869 = vmatpush.msra.mxu0 0.0
    %870 = vmatpush.msra.mxu0 0.0
    %871 = vmatpush.msra.mxu0 %v133
    %872 = vmatpush.msra.mxu0 %v132
    %873 = vmatpush.msra.mxu0 %v131
    %874 = vmatpush.msra.mxu0 %v130
    %875 = vmatpush.msra.mxu0 %v129
    %876 = vmatpush.msra.mxu0 %v128
    %877 = vmatpush.msra.mxu0 %v127
    %878 = vmatpush.msra.mxu0 %v126
    %879 = vmatmul.f32.gmra.mxu0 %v861
    %v880 = vpop.f32.mrf.mxu0
    %v881 = vadd.f32 0.0, %v880
    %882 = vdwg.mxu0
    %v884 = vsel %vm145, %v709, 0
    %886 = vmatpush.msra.mxu0 0.0
    %887 = vmatpush.msra.mxu0 0.0
    %888 = vmatpush.msra.mxu0 0.0
    %889 = vmatpush.msra.mxu0 0.0
    %890 = vmatpush.msra.mxu0 0.0
    %891 = vmatpush.msra.mxu0 0.0
    %892 = vmatpush.msra.mxu0 0.0
    %893 = vmatpush.msra.mxu0 0.0
    %894 = vmatpush.msra.mxu0 0.0
    %895 = vmatpush.msra.mxu0 0.0
    %896 = vmatpush.msra.mxu0 0.0
    %897 = vmatpush.msra.mxu0 0.0
    %898 = vmatpush.msra.mxu0 %v70
    %899 = vmatpush.msra.mxu0 %v66
    %900 = vmatpush.msra.mxu0 %v62
    %901 = vmatpush.msra.mxu0 %v58
    %902 = vmatmul.f32.gmra.mxu0 %v884
    %v903 = vpop.f32.mrf.mxu0
    %v904 = vadd.f32 0.0, %v903
    %905 = vdwg.mxu0
    %906 = vmatpush.msra.mxu0 0.0
    %907 = vmatpush.msra.mxu0 0.0
    %908 = vmatpush.msra.mxu0 0.0
    %909 = vmatpush.msra.mxu0 0.0
    %910 = vmatpush.msra.mxu0 0.0
    %911 = vmatpush.msra.mxu0 0.0
    %912 = vmatpush.msra.mxu0 0.0
    %913 = vmatpush.msra.mxu0 0.0
    %914 = vmatpush.msra.mxu0 0.0
    %915 = vmatpush.msra.mxu0 0.0
    %916 = vmatpush.msra.mxu0 0.0
    %917 = vmatpush.msra.mxu0 0.0
    %918 = vmatpush.msra.mxu0 %v71
    %919 = vmatpush.msra.mxu0 %v67
    %920 = vmatpush.msra.mxu0 %v63
    %921 = vmatpush.msra.mxu0 %v59
    %922 = vmatmul.f32.gmra.mxu0 %v884
    %v923 = vpop.f32.mrf.mxu0
    %v924 = vadd.f32 0.0, %v923
    %925 = vdwg.mxu0
    %926 = vmatpush.msra.mxu0 0.0
    %927 = vmatpush.msra.mxu0 0.0
    %928 = vmatpush.msra.mxu0 0.0
    %929 = vmatpush.msra.mxu0 0.0
    %930 = vmatpush.msra.mxu0 0.0
    %931 = vmatpush.msra.mxu0 0.0
    %932 = vmatpush.msra.mxu0 0.0
    %933 = vmatpush.msra.mxu0 0.0
    %934 = vmatpush.msra.mxu0 0.0
    %935 = vmatpush.msra.mxu0 0.0
    %936 = vmatpush.msra.mxu0 0.0
    %937 = vmatpush.msra.mxu0 0.0
    %938 = vmatpush.msra.mxu0 %v72
    %939 = vmatpush.msra.mxu0 %v68
    %940 = vmatpush.msra.mxu0 %v64
    %941 = vmatpush.msra.mxu0 %v60
    %942 = vmatmul.f32.gmra.mxu0 %v884
    %v943 = vpop.f32.mrf.mxu0
    %v944 = vadd.f32 0.0, %v943
    %945 = vdwg.mxu0
    %946 = vmatpush.msra.mxu0 0.0
    %947 = vmatpush.msra.mxu0 0.0
    %948 = vmatpush.msra.mxu0 0.0
    %949 = vmatpush.msra.mxu0 0.0
    %950 = vmatpush.msra.mxu0 0.0
    %951 = vmatpush.msra.mxu0 0.0
    %952 = vmatpush.msra.mxu0 0.0
    %953 = vmatpush.msra.mxu0 0.0
    %954 = vmatpush.msra.mxu0 0.0
    %955 = vmatpush.msra.mxu0 0.0
    %956 = vmatpush.msra.mxu0 0.0
    %957 = vmatpush.msra.mxu0 0.0
    %958 = vmatpush.msra.mxu0 %v73
    %959 = vmatpush.msra.mxu0 %v69
    %960 = vmatpush.msra.mxu0 %v65
    %961 = vmatpush.msra.mxu0 %v61
    %962 = vmatmul.f32.gmra.mxu0 %v884
    %v963 = vpop.f32.mrf.mxu0
    %v964 = vadd.f32 0.0, %v963
    %965 = vdwg.mxu0
    %v966 = vadd.f32 %v167, %v904
    %v967 = vadd.f32 %v187, %v924
    %v968 = vadd.f32 %v207, %v944
    %v969 = vadd.f32 %v227, %v964
    %v970 = vxor.u32 %v966, 2147483648
    %v971 = vmul.f32 %v970, 1.442695
    %v972 = vpow.pop %v971
    %v973 = vadd.f32 %v972, 1.0
    %v974 = vrcp.pop %v973
    %v975 = vmul.f32 %v973, %v974
    %v976 = vsub.f32 1.0, %v975
    %v977 = vmul.f32 %v974, %v976
    %v978 = vadd.f32 %v974, %v977
    %vm979 = vweird.f32 %v973
    %vm980 = vweird.f32 %v974
    %vm981 = vmor %vm979, %vm980
    %v982 = vsel %vm981, %v974, %v978
    %v983 = vand.u32 2147483647, %v973
    %vm984 = vcmp.eq.f32.partialorder %v983, 8.507059e+37
    %v985 = vand.u32 %v973, 2147483648
    %v986 = vor.u32 1.1754944e-38, %v985
    %v987 = vsel %vm984, %v986, %v982
    %v988 = vmul.f32 1.0, %v987
    %v989 = vxor.u32 %v967, 2147483648
    %v990 = vmul.f32 %v989, 1.442695
    %v991 = vpow.pop %v990
    %v992 = vadd.f32 %v991, 1.0
    %v993 = vrcp.pop %v992
    %v994 = vmul.f32 %v992, %v993
    %v995 = vsub.f32 1.0, %v994
    %v996 = vmul.f32 %v993, %v995
    %v997 = vadd.f32 %v993, %v996
    %vm998 = vweird.f32 %v992
    %vm999 = vweird.f32 %v993
    %vm1000 = vmor %vm998, %vm999
    %v1001 = vsel %vm1000, %v993, %v997
    %v1002 = vand.u32 2147483647, %v992
    %vm1003 = vcmp.eq.f32.partialorder %v1002, 8.507059e+37
    %v1004 = vand.u32 %v992, 2147483648
    %v1005 = vor.u32 1.1754944e-38, %v1004
    %v1006 = vsel %vm1003, %v1005, %v1001
    %v1007 = vmul.f32 1.0, %v1006
    %v1008 = vtanh.pop %v968
    %v1009 = vxor.u32 %v969, 2147483648
    %v1010 = vmul.f32 %v1009, 1.442695
    %v1011 = vpow.pop %v1010
    %v1012 = vadd.f32 %v1011, 1.0
    %v1013 = vrcp.pop %v1012
    %v1014 = vmul.f32 %v1012, %v1013
    %v1015 = vsub.f32 1.0, %v1014
    %v1016 = vmul.f32 %v1013, %v1015
    %v1017 = vadd.f32 %v1013, %v1016
    %vm1018 = vweird.f32 %v1012
    %vm1019 = vweird.f32 %v1013
    %vm1020 = vmor %vm1018, %vm1019
    %v1021 = vsel %vm1020, %v1013, %v1017
    %v1022 = vand.u32 2147483647, %v1012
    %vm1023 = vcmp.eq.f32.partialorder %v1022, 8.507059e+37
    %v1024 = vand.u32 %v1012, 2147483648
    %v1025 = vor.u32 1.1754944e-38, %v1024
    %v1026 = vsel %vm1023, %v1025, %v1021
    %v1027 = vmul.f32 1.0, %v1026
    %v1028 = vmul.f32 %v1007, %v707
    %v1029 = vmul.f32 %v988, %v1008
    %v1030 = vadd.f32 %v1028, %v1029
    %v1031 = vtanh.pop %v1030
    %v1032 = vmul.f32 %v1027, %v1031
    %1033 = vrot.lane.b32.xlu0 %v859, 32
    %v1034 = vpop.permute.xlu0 %1033
    %v1036 = vsel %vm145, %v1032, %v1034
    %v1038 = vsel %vm389, %v1036, 0
    %1040 = vmatpush.msra.mxu0 0.0
    %1041 = vmatpush.msra.mxu0 0.0
    %1042 = vmatpush.msra.mxu0 0.0
    %1043 = vmatpush.msra.mxu0 0.0
    %1044 = vmatpush.msra.mxu0 %v120
    %1045 = vmatpush.msra.mxu0 %v116
    %1046 = vmatpush.msra.mxu0 %v112
    %1047 = vmatpush.msra.mxu0 %v108
    %1048 = vmatpush.msra.mxu0 %v104
    %1049 = vmatpush.msra.mxu0 %v100
    %1050 = vmatpush.msra.mxu0 %v96
    %1051 = vmatpush.msra.mxu0 %v92
    %1052 = vmatpush.msra.mxu0 %v88
    %1053 = vmatpush.msra.mxu0 %v84
    %1054 = vmatpush.msra.mxu0 %v80
    %1055 = vmatpush.msra.mxu0 %v76
    %1056 = vmatmul.f32.gmra.mxu0 %v1038
    %v1057 = vpop.f32.mrf.mxu0
    %v1058 = vadd.f32 %v230, %v1057
    %1059 = vdwg.mxu0
    %1060 = vmatpush.msra.mxu0 0.0
    %1061 = vmatpush.msra.mxu0 0.0
    %1062 = vmatpush.msra.mxu0 0.0
    %1063 = vmatpush.msra.mxu0 0.0
    %1064 = vmatpush.msra.mxu0 %v121
    %1065 = vmatpush.msra.mxu0 %v117
    %1066 = vmatpush.msra.mxu0 %v113
    %1067 = vmatpush.msra.mxu0 %v109
    %1068 = vmatpush.msra.mxu0 %v105
    %1069 = vmatpush.msra.mxu0 %v101
    %1070 = vmatpush.msra.mxu0 %v97
    %1071 = vmatpush.msra.mxu0 %v93
    %1072 = vmatpush.msra.mxu0 %v89
    %1073 = vmatpush.msra.mxu0 %v85
    %1074 = vmatpush.msra.mxu0 %v81
    %1075 = vmatpush.msra.mxu0 %v77
    %1076 = vmatmul.f32.gmra.mxu0 %v1038
    %v1077 = vpop.f32.mrf.mxu0
    %v1078 = vadd.f32 %v231, %v1077
    %1079 = vdwg.mxu0
    %1080 = vmatpush.msra.mxu0 0.0
    %1081 = vmatpush.msra.mxu0 0.0
    %1082 = vmatpush.msra.mxu0 0.0
    %1083 = vmatpush.msra.mxu0 0.0
    %1084 = vmatpush.msra.mxu0 %v122
    %1085 = vmatpush.msra.mxu0 %v118
    %1086 = vmatpush.msra.mxu0 %v114
    %1087 = vmatpush.msra.mxu0 %v110
    %1088 = vmatpush.msra.mxu0 %v106
    %1089 = vmatpush.msra.mxu0 %v102
    %1090 = vmatpush.msra.mxu0 %v98
    %1091 = vmatpush.msra.mxu0 %v94
    %1092 = vmatpush.msra.mxu0 %v90
    %1093 = vmatpush.msra.mxu0 %v86
    %1094 = vmatpush.msra.mxu0 %v82
    %1095 = vmatpush.msra.mxu0 %v78
    %1096 = vmatmul.f32.gmra.mxu0 %v1038
    %v1097 = vpop.f32.mrf.mxu0
    %v1098 = vadd.f32 %v232, %v1097
    %1099 = vdwg.mxu0
    %1100 = vmatpush.msra.mxu0 0.0
    %1101 = vmatpush.msra.mxu0 0.0
    %1102 = vmatpush.msra.mxu0 0.0
    %1103 = vmatpush.msra.mxu0 0.0
    %1104 = vmatpush.msra.mxu0 %v123
    %1105 = vmatpush.msra.mxu0 %v119
    %1106 = vmatpush.msra.mxu0 %v115
    %1107 = vmatpush.msra.mxu0 %v111
    %1108 = vmatpush.msra.mxu0 %v107
    %1109 = vmatpush.msra.mxu0 %v103
    %1110 = vmatpush.msra.mxu0 %v99
    %1111 = vmatpush.msra.mxu0 %v95
    %1112 = vmatpush.msra.mxu0 %v91
    %1113 = vmatpush.msra.mxu0 %v87
    %1114 = vmatpush.msra.mxu0 %v83
    %1115 = vmatpush.msra.mxu0 %v79
    %1116 = vmatmul.f32.gmra.mxu0 %v1038
    %v1117 = vpop.f32.mrf.mxu0
    %v1118 = vadd.f32 %v233, %v1117
    %1119 = vdwg.mxu0
    %v1120 = vxor.u32 %v1058, 2147483648
    %v1121 = vmul.f32 %v1120, 1.442695
    %v1122 = vpow.pop %v1121
    %v1123 = vadd.f32 %v1122, 1.0
    %v1124 = vrcp.pop %v1123
    %v1125 = vmul.f32 %v1123, %v1124
    %v1126 = vsub.f32 1.0, %v1125
    %v1127 = vmul.f32 %v1124, %v1126
    %v1128 = vadd.f32 %v1124, %v1127
    %vm1129 = vweird.f32 %v1123
    %vm1130 = vweird.f32 %v1124
    %vm1131 = vmor %vm1129, %vm1130
    %v1132 = vsel %vm1131, %v1124, %v1128
    %v1133 = vand.u32 2147483647, %v1123
    %vm1134 = vcmp.eq.f32.partialorder %v1133, 8.507059e+37
    %v1135 = vand.u32 %v1123, 2147483648
    %v1136 = vor.u32 1.1754944e-38, %v1135
    %v1137 = vsel %vm1134, %v1136, %v1132
    %v1138 = vmul.f32 1.0, %v1137
    %v1139 = vxor.u32 %v1078, 2147483648
    %v1140 = vmul.f32 %v1139, 1.442695
    %v1141 = vpow.pop %v1140
    %v1142 = vadd.f32 %v1141, 1.0
    %v1143 = vrcp.pop %v1142
    %v1144 = vmul.f32 %v1142, %v1143
    %v1145 = vsub.f32 1.0, %v1144
    %v1146 = vmul.f32 %v1143, %v1145
    %v1147 = vadd.f32 %v1143, %v1146
    %vm1148 = vweird.f32 %v1142
    %vm1149 = vweird.f32 %v1143
    %vm1150 = vmor %vm1148, %vm1149
    %v1151 = vsel %vm1150, %v1143, %v1147
    %v1152 = vand.u32 2147483647, %v1142
    %vm1153 = vcmp.eq.f32.partialorder %v1152, 8.507059e+37
    %v1154 = vand.u32 %v1142, 2147483648
    %v1155 = vor.u32 1.1754944e-38, %v1154
    %v1156 = vsel %vm1153, %v1155, %v1151
    %v1157 = vmul.f32 1.0, %v1156
    %v1158 = vtanh.pop %v1098
    %v1159 = vxor.u32 %v1118, 2147483648
    %v1160 = vmul.f32 %v1159, 1.442695
    %v1161 = vpow.pop %v1160
    %v1162 = vadd.f32 %v1161, 1.0
    %v1163 = vrcp.pop %v1162
    %v1164 = vmul.f32 %v1162, %v1163
    %v1165 = vsub.f32 1.0, %v1164
    %v1166 = vmul.f32 %v1163, %v1165
    %v1167 = vadd.f32 %v1163, %v1166
    %vm1168 = vweird.f32 %v1162
    %vm1169 = vweird.f32 %v1163
    %vm1170 = vmor %vm1168, %vm1169
    %v1171 = vsel %vm1170, %v1163, %v1167
    %v1172 = vand.u32 2147483647, %v1162
    %vm1173 = vcmp.eq.f32.partialorder %v1172, 8.507059e+37
    %v1174 = vand.u32 %v1162, 2147483648
    %v1175 = vor.u32 1.1754944e-38, %v1174
    %v1176 = vsel %vm1173, %v1175, %v1171
    %v1177 = vmul.f32 1.0, %v1176
    %v1178 = vmul.f32 %v1157, %v857
    %v1179 = vmul.f32 %v1138, %v1158
    %v1180 = vadd.f32 %v1178, %v1179
    %v1181 = vtanh.pop %v1180
    %v1182 = vmul.f32 %v1177, %v1181
    %v1184 = vsel %vm536, %v1182, 0
    %1186 = vmatpush.msra.mxu0 0.0
    %1187 = vmatpush.msra.mxu0 0.0
    %1188 = vmatpush.msra.mxu0 0.0
    %1189 = vmatpush.msra.mxu0 0.0
    %1190 = vmatpush.msra.mxu0 0.0
    %1191 = vmatpush.msra.mxu0 0.0
    %1192 = vmatpush.msra.mxu0 0.0
    %1193 = vmatpush.msra.mxu0 0.0
    %1194 = vmatpush.msra.mxu0 %v133
    %1195 = vmatpush.msra.mxu0 %v132
    %1196 = vmatpush.msra.mxu0 %v131
    %1197 = vmatpush.msra.mxu0 %v130
    %1198 = vmatpush.msra.mxu0 %v129
    %1199 = vmatpush.msra.mxu0 %v128
    %1200 = vmatpush.msra.mxu0 %v127
    %1201 = vmatpush.msra.mxu0 %v126
    %1202 = vmatmul.f32.gmra.mxu0 %v1184
    %v1203 = vpop.f32.mrf.mxu0
    %v1204 = vadd.f32 0.0, %v1203
    %1205 = vdwg.mxu0
    %v1207 = vsel %vm145, %v1032, 0
    %1209 = vmatpush.msra.mxu0 0.0
    %1210 = vmatpush.msra.mxu0 0.0
    %1211 = vmatpush.msra.mxu0 0.0
    %1212 = vmatpush.msra.mxu0 0.0
    %1213 = vmatpush.msra.mxu0 0.0
    %1214 = vmatpush.msra.mxu0 0.0
    %1215 = vmatpush.msra.mxu0 0.0
    %1216 = vmatpush.msra.mxu0 0.0
    %1217 = vmatpush.msra.mxu0 0.0
    %1218 = vmatpush.msra.mxu0 0.0
    %1219 = vmatpush.msra.mxu0 0.0
    %1220 = vmatpush.msra.mxu0 0.0
    %1221 = vmatpush.msra.mxu0 %v70
    %1222 = vmatpush.msra.mxu0 %v66
    %1223 = vmatpush.msra.mxu0 %v62
    %1224 = vmatpush.msra.mxu0 %v58
    %1225 = vmatmul.f32.gmra.mxu0 %v1207
    %v1226 = vpop.f32.mrf.mxu0
    %v1227 = vadd.f32 0.0, %v1226
    %1228 = vdwg.mxu0
    %1229 = vmatpush.msra.mxu0 0.0
    %1230 = vmatpush.msra.mxu0 0.0
    %1231 = vmatpush.msra.mxu0 0.0
    %1232 = vmatpush.msra.mxu0 0.0
    %1233 = vmatpush.msra.mxu0 0.0
    %1234 = vmatpush.msra.mxu0 0.0
    %1235 = vmatpush.msra.mxu0 0.0
    %1236 = vmatpush.msra.mxu0 0.0
    %1237 = vmatpush.msra.mxu0 0.0
    %1238 = vmatpush.msra.mxu0 0.0
    %1239 = vmatpush.msra.mxu0 0.0
    %1240 = vmatpush.msra.mxu0 0.0
    %1241 = vmatpush.msra.mxu0 %v71
    %1242 = vmatpush.msra.mxu0 %v67
    %1243 = vmatpush.msra.mxu0 %v63
    %1244 = vmatpush.msra.mxu0 %v59
    %1245 = vmatmul.f32.gmra.mxu0 %v1207
    %v1246 = vpop.f32.mrf.mxu0
    %v1247 = vadd.f32 0.0, %v1246
    %1248 = vdwg.mxu0
    %1249 = vmatpush.msra.mxu0 0.0
    %1250 = vmatpush.msra.mxu0 0.0
    %1251 = vmatpush.msra.mxu0 0.0
    %1252 = vmatpush.msra.mxu0 0.0
    %1253 = vmatpush.msra.mxu0 0.0
    %1254 = vmatpush.msra.mxu0 0.0
    %1255 = vmatpush.msra.mxu0 0.0
    %1256 = vmatpush.msra.mxu0 0.0
    %1257 = vmatpush.msra.mxu0 0.0
    %1258 = vmatpush.msra.mxu0 0.0
    %1259 = vmatpush.msra.mxu0 0.0
    %1260 = vmatpush.msra.mxu0 0.0
    %1261 = vmatpush.msra.mxu0 %v72
    %1262 = vmatpush.msra.mxu0 %v68
    %1263 = vmatpush.msra.mxu0 %v64
    %1264 = vmatpush.msra.mxu0 %v60
    %1265 = vmatmul.f32.gmra.mxu0 %v1207
    %v1266 = vpop.f32.mrf.mxu0
    %v1267 = vadd.f32 0.0, %v1266
    %1268 = vdwg.mxu0
    %1269 = vmatpush.msra.mxu0 0.0
    %1270 = vmatpush.msra.mxu0 0.0
    %1271 = vmatpush.msra.mxu0 0.0
    %1272 = vmatpush.msra.mxu0 0.0
    %1273 = vmatpush.msra.mxu0 0.0
    %1274 = vmatpush.msra.mxu0 0.0
    %1275 = vmatpush.msra.mxu0 0.0
    %1276 = vmatpush.msra.mxu0 0.0
    %1277 = vmatpush.msra.mxu0 0.0
    %1278 = vmatpush.msra.mxu0 0.0
    %1279 = vmatpush.msra.mxu0 0.0
    %1280 = vmatpush.msra.mxu0 0.0
    %1281 = vmatpush.msra.mxu0 %v73
    %1282 = vmatpush.msra.mxu0 %v69
    %1283 = vmatpush.msra.mxu0 %v65
    %1284 = vmatpush.msra.mxu0 %v61
    %1285 = vmatmul.f32.gmra.mxu0 %v1207
    %v1286 = vpop.f32.mrf.mxu0
    %v1287 = vadd.f32 0.0, %v1286
    %1288 = vdwg.mxu0
    %v1289 = vadd.f32 %v167, %v1227
    %v1290 = vadd.f32 %v187, %v1247
    %v1291 = vadd.f32 %v207, %v1267
    %v1292 = vadd.f32 %v227, %v1287
    %v1293 = vxor.u32 %v1289, 2147483648
    %v1294 = vmul.f32 %v1293, 1.442695
    %v1295 = vpow.pop %v1294
    %v1296 = vadd.f32 %v1295, 1.0
    %v1297 = vrcp.pop %v1296
    %v1298 = vmul.f32 %v1296, %v1297
    %v1299 = vsub.f32 1.0, %v1298
    %v1300 = vmul.f32 %v1297, %v1299
    %v1301 = vadd.f32 %v1297, %v1300
    %vm1302 = vweird.f32 %v1296
    %vm1303 = vweird.f32 %v1297
    %vm1304 = vmor %vm1302, %vm1303
    %v1305 = vsel %vm1304, %v1297, %v1301
    %v1306 = vand.u32 2147483647, %v1296
    %vm1307 = vcmp.eq.f32.partialorder %v1306, 8.507059e+37
    %v1308 = vand.u32 %v1296, 2147483648
    %v1309 = vor.u32 1.1754944e-38, %v1308
    %v1310 = vsel %vm1307, %v1309, %v1305
    %v1311 = vmul.f32 1.0, %v1310
    %v1312 = vxor.u32 %v1290, 2147483648
    %v1313 = vmul.f32 %v1312, 1.442695
    %v1314 = vpow.pop %v1313
    %v1315 = vadd.f32 %v1314, 1.0
    %v1316 = vrcp.pop %v1315
    %v1317 = vmul.f32 %v1315, %v1316
    %v1318 = vsub.f32 1.0, %v1317
    %v1319 = vmul.f32 %v1316, %v1318
    %v1320 = vadd.f32 %v1316, %v1319
    %vm1321 = vweird.f32 %v1315
    %vm1322 = vweird.f32 %v1316
    %vm1323 = vmor %vm1321, %vm1322
    %v1324 = vsel %vm1323, %v1316, %v1320
    %v1325 = vand.u32 2147483647, %v1315
    %vm1326 = vcmp.eq.f32.partialorder %v1325, 8.507059e+37
    %v1327 = vand.u32 %v1315, 2147483648
    %v1328 = vor.u32 1.1754944e-38, %v1327
    %v1329 = vsel %vm1326, %v1328, %v1324
    %v1330 = vmul.f32 1.0, %v1329
    %v1331 = vtanh.pop %v1291
    %v1332 = vxor.u32 %v1292, 2147483648
    %v1333 = vmul.f32 %v1332, 1.442695
    %v1334 = vpow.pop %v1333
    %v1335 = vadd.f32 %v1334, 1.0
    %v1336 = vrcp.pop %v1335
    %v1337 = vmul.f32 %v1335, %v1336
    %v1338 = vsub.f32 1.0, %v1337
    %v1339 = vmul.f32 %v1336, %v1338
    %v1340 = vadd.f32 %v1336, %v1339
    %vm1341 = vweird.f32 %v1335
    %vm1342 = vweird.f32 %v1336
    %vm1343 = vmor %vm1341, %vm1342
    %v1344 = vsel %vm1343, %v1336, %v1340
    %v1345 = vand.u32 2147483647, %v1335
    %vm1346 = vcmp.eq.f32.partialorder %v1345, 8.507059e+37
    %v1347 = vand.u32 %v1335, 2147483648
    %v1348 = vor.u32 1.1754944e-38, %v1347
    %v1349 = vsel %vm1346, %v1348, %v1344
    %v1350 = vmul.f32 1.0, %v1349
    %v1351 = vmul.f32 %v1330, %v1030
    %v1352 = vmul.f32 %v1311, %v1331
    %v1353 = vadd.f32 %v1351, %v1352
    %v1354 = vtanh.pop %v1353
    %v1355 = vmul.f32 %v1350, %v1354
    %1356 = vrot.lane.b32.xlu0 %v1182, 32
    %v1357 = vpop.permute.xlu0 %1356
    %v1359 = vsel %vm145, %v1355, %v1357
    %v1361 = vsel %vm389, %v1359, 0
    %1363 = vmatpush.msra.mxu0 0.0
    %1364 = vmatpush.msra.mxu0 0.0
    %1365 = vmatpush.msra.mxu0 0.0
    %1366 = vmatpush.msra.mxu0 0.0
    %1367 = vmatpush.msra.mxu0 %v120
    %1368 = vmatpush.msra.mxu0 %v116
    %1369 = vmatpush.msra.mxu0 %v112
    %1370 = vmatpush.msra.mxu0 %v108
    %1371 = vmatpush.msra.mxu0 %v104
    %1372 = vmatpush.msra.mxu0 %v100
    %1373 = vmatpush.msra.mxu0 %v96
    %1374 = vmatpush.msra.mxu0 %v92
    %1375 = vmatpush.msra.mxu0 %v88
    %1376 = vmatpush.msra.mxu0 %v84
    %1377 = vmatpush.msra.mxu0 %v80
    %1378 = vmatpush.msra.mxu0 %v76
    %1379 = vmatmul.f32.gmra.mxu0 %v1361
    %v1380 = vpop.f32.mrf.mxu0
    %v1381 = vadd.f32 %v230, %v1380
    %1382 = vdwg.mxu0
    %1383 = vmatpush.msra.mxu0 0.0
    %1384 = vmatpush.msra.mxu0 0.0
    %1385 = vmatpush.msra.mxu0 0.0
    %1386 = vmatpush.msra.mxu0 0.0
    %1387 = vmatpush.msra.mxu0 %v121
    %1388 = vmatpush.msra.mxu0 %v117
    %1389 = vmatpush.msra.mxu0 %v113
    %1390 = vmatpush.msra.mxu0 %v109
    %1391 = vmatpush.msra.mxu0 %v105
    %1392 = vmatpush.msra.mxu0 %v101
    %1393 = vmatpush.msra.mxu0 %v97
    %1394 = vmatpush.msra.mxu0 %v93
    %1395 = vmatpush.msra.mxu0 %v89
    %1396 = vmatpush.msra.mxu0 %v85
    %1397 = vmatpush.msra.mxu0 %v81
    %1398 = vmatpush.msra.mxu0 %v77
    %1399 = vmatmul.f32.gmra.mxu0 %v1361
    %v1400 = vpop.f32.mrf.mxu0
    %v1401 = vadd.f32 %v231, %v1400
    %1402 = vdwg.mxu0
    %1403 = vmatpush.msra.mxu0 0.0
    %1404 = vmatpush.msra.mxu0 0.0
    %1405 = vmatpush.msra.mxu0 0.0
    %1406 = vmatpush.msra.mxu0 0.0
    %1407 = vmatpush.msra.mxu0 %v122
    %1408 = vmatpush.msra.mxu0 %v118
    %1409 = vmatpush.msra.mxu0 %v114
    %1410 = vmatpush.msra.mxu0 %v110
    %1411 = vmatpush.msra.mxu0 %v106
    %1412 = vmatpush.msra.mxu0 %v102
    %1413 = vmatpush.msra.mxu0 %v98
    %1414 = vmatpush.msra.mxu0 %v94
    %1415 = vmatpush.msra.mxu0 %v90
    %1416 = vmatpush.msra.mxu0 %v86
    %1417 = vmatpush.msra.mxu0 %v82
    %1418 = vmatpush.msra.mxu0 %v78
    %1419 = vmatmul.f32.gmra.mxu0 %v1361
    %v1420 = vpop.f32.mrf.mxu0
    %v1421 = vadd.f32 %v232, %v1420
    %1422 = vdwg.mxu0
    %1423 = vmatpush.msra.mxu0 0.0
    %1424 = vmatpush.msra.mxu0 0.0
    %1425 = vmatpush.msra.mxu0 0.0
    %1426 = vmatpush.msra.mxu0 0.0
    %1427 = vmatpush.msra.mxu0 %v123
    %1428 = vmatpush.msra.mxu0 %v119
    %1429 = vmatpush.msra.mxu0 %v115
    %1430 = vmatpush.msra.mxu0 %v111
    %1431 = vmatpush.msra.mxu0 %v107
    %1432 = vmatpush.msra.mxu0 %v103
    %1433 = vmatpush.msra.mxu0 %v99
    %1434 = vmatpush.msra.mxu0 %v95
    %1435 = vmatpush.msra.mxu0 %v91
    %1436 = vmatpush.msra.mxu0 %v87
    %1437 = vmatpush.msra.mxu0 %v83
    %1438 = vmatpush.msra.mxu0 %v79
    %1439 = vmatmul.f32.gmra.mxu0 %v1361
    %v1440 = vpop.f32.mrf.mxu0
    %v1441 = vadd.f32 %v233, %v1440
    %1442 = vdwg.mxu0
    %v1443 = vxor.u32 %v1381, 2147483648
    %v1444 = vmul.f32 %v1443, 1.442695
    %v1445 = vpow.pop %v1444
    %v1446 = vadd.f32 %v1445, 1.0
    %v1447 = vrcp.pop %v1446
    %v1448 = vmul.f32 %v1446, %v1447
    %v1449 = vsub.f32 1.0, %v1448
    %v1450 = vmul.f32 %v1447, %v1449
    %v1451 = vadd.f32 %v1447, %v1450
    %vm1452 = vweird.f32 %v1446
    %vm1453 = vweird.f32 %v1447
    %vm1454 = vmor %vm1452, %vm1453
    %v1455 = vsel %vm1454, %v1447, %v1451
    %v1456 = vand.u32 2147483647, %v1446
    %vm1457 = vcmp.eq.f32.partialorder %v1456, 8.507059e+37
    %v1458 = vand.u32 %v1446, 2147483648
    %v1459 = vor.u32 1.1754944e-38, %v1458
    %v1460 = vsel %vm1457, %v1459, %v1455
    %v1461 = vmul.f32 1.0, %v1460
    %v1462 = vxor.u32 %v1401, 2147483648
    %v1463 = vmul.f32 %v1462, 1.442695
    %v1464 = vpow.pop %v1463
    %v1465 = vadd.f32 %v1464, 1.0
    %v1466 = vrcp.pop %v1465
    %v1467 = vmul.f32 %v1465, %v1466
    %v1468 = vsub.f32 1.0, %v1467
    %v1469 = vmul.f32 %v1466, %v1468
    %v1470 = vadd.f32 %v1466, %v1469
    %vm1471 = vweird.f32 %v1465
    %vm1472 = vweird.f32 %v1466
    %vm1473 = vmor %vm1471, %vm1472
    %v1474 = vsel %vm1473, %v1466, %v1470
    %v1475 = vand.u32 2147483647, %v1465
    %vm1476 = vcmp.eq.f32.partialorder %v1475, 8.507059e+37
    %v1477 = vand.u32 %v1465, 2147483648
    %v1478 = vor.u32 1.1754944e-38, %v1477
    %v1479 = vsel %vm1476, %v1478, %v1474
    %v1480 = vmul.f32 1.0, %v1479
    %v1481 = vtanh.pop %v1421
    %v1482 = vxor.u32 %v1441, 2147483648
    %v1483 = vmul.f32 %v1482, 1.442695
    %v1484 = vpow.pop %v1483
    %v1485 = vadd.f32 %v1484, 1.0
    %v1486 = vrcp.pop %v1485
    %v1487 = vmul.f32 %v1485, %v1486
    %v1488 = vsub.f32 1.0, %v1487
    %v1489 = vmul.f32 %v1486, %v1488
    %v1490 = vadd.f32 %v1486, %v1489
    %vm1491 = vweird.f32 %v1485
    %vm1492 = vweird.f32 %v1486
    %vm1493 = vmor %vm1491, %vm1492
    %v1494 = vsel %vm1493, %v1486, %v1490
    %v1495 = vand.u32 2147483647, %v1485
    %vm1496 = vcmp.eq.f32.partialorder %v1495, 8.507059e+37
    %v1497 = vand.u32 %v1485, 2147483648
    %v1498 = vor.u32 1.1754944e-38, %v1497
    %v1499 = vsel %vm1496, %v1498, %v1494
    %v1500 = vmul.f32 1.0, %v1499
    %v1501 = vmul.f32 %v1480, %v1180
    %v1502 = vmul.f32 %v1461, %v1481
    %v1503 = vadd.f32 %v1501, %v1502
    %v1504 = vtanh.pop %v1503
    %v1505 = vmul.f32 %v1500, %v1504
    %v1507 = vsel %vm536, %v1505, 0
    %1509 = vmatpush.msra.mxu0 0.0
    %1510 = vmatpush.msra.mxu0 0.0
    %1511 = vmatpush.msra.mxu0 0.0
    %1512 = vmatpush.msra.mxu0 0.0
    %1513 = vmatpush.msra.mxu0 0.0
    %1514 = vmatpush.msra.mxu0 0.0
    %1515 = vmatpush.msra.mxu0 0.0
    %1516 = vmatpush.msra.mxu0 0.0
    %1517 = vmatpush.msra.mxu0 %v133
    %1518 = vmatpush.msra.mxu0 %v132
    %1519 = vmatpush.msra.mxu0 %v131
    %1520 = vmatpush.msra.mxu0 %v130
    %1521 = vmatpush.msra.mxu0 %v129
    %1522 = vmatpush.msra.mxu0 %v128
    %1523 = vmatpush.msra.mxu0 %v127
    %1524 = vmatpush.msra.mxu0 %v126
    %1525 = vmatmul.f32.gmra.mxu0 %v1507
    %v1526 = vpop.f32.mrf.mxu0
    %v1527 = vadd.f32 0.0, %v1526
    %1528 = vdwg.mxu0
    %v1530 = vsel %vm145, %v1355, 0
    %1532 = vmatpush.msra.mxu0 0.0
    %1533 = vmatpush.msra.mxu0 0.0
    %1534 = vmatpush.msra.mxu0 0.0
    %1535 = vmatpush.msra.mxu0 0.0
    %1536 = vmatpush.msra.mxu0 0.0
    %1537 = vmatpush.msra.mxu0 0.0
    %1538 = vmatpush.msra.mxu0 0.0
    %1539 = vmatpush.msra.mxu0 0.0
    %1540 = vmatpush.msra.mxu0 0.0
    %1541 = vmatpush.msra.mxu0 0.0
    %1542 = vmatpush.msra.mxu0 0.0
    %1543 = vmatpush.msra.mxu0 0.0
    %1544 = vmatpush.msra.mxu0 %v70
    %1545 = vmatpush.msra.mxu0 %v66
    %1546 = vmatpush.msra.mxu0 %v62
    %1547 = vmatpush.msra.mxu0 %v58
    %1548 = vmatmul.f32.gmra.mxu0 %v1530
    %v1549 = vpop.f32.mrf.mxu0
    %v1550 = vadd.f32 0.0, %v1549
    %1551 = vdwg.mxu0
    %1552 = vmatpush.msra.mxu0 0.0
    %1553 = vmatpush.msra.mxu0 0.0
    %1554 = vmatpush.msra.mxu0 0.0
    %1555 = vmatpush.msra.mxu0 0.0
    %1556 = vmatpush.msra.mxu0 0.0
    %1557 = vmatpush.msra.mxu0 0.0
    %1558 = vmatpush.msra.mxu0 0.0
    %1559 = vmatpush.msra.mxu0 0.0
    %1560 = vmatpush.msra.mxu0 0.0
    %1561 = vmatpush.msra.mxu0 0.0
    %1562 = vmatpush.msra.mxu0 0.0
    %1563 = vmatpush.msra.mxu0 0.0
    %1564 = vmatpush.msra.mxu0 %v71
    %1565 = vmatpush.msra.mxu0 %v67
    %1566 = vmatpush.msra.mxu0 %v63
    %1567 = vmatpush.msra.mxu0 %v59
    %1568 = vmatmul.f32.gmra.mxu0 %v1530
    %v1569 = vpop.f32.mrf.mxu0
    %v1570 = vadd.f32 0.0, %v1569
    %1571 = vdwg.mxu0
    %1572 = vmatpush.msra.mxu0 0.0
    %1573 = vmatpush.msra.mxu0 0.0
    %1574 = vmatpush.msra.mxu0 0.0
    %1575 = vmatpush.msra.mxu0 0.0
    %1576 = vmatpush.msra.mxu0 0.0
    %1577 = vmatpush.msra.mxu0 0.0
    %1578 = vmatpush.msra.mxu0 0.0
    %1579 = vmatpush.msra.mxu0 0.0
    %1580 = vmatpush.msra.mxu0 0.0
    %1581 = vmatpush.msra.mxu0 0.0
    %1582 = vmatpush.msra.mxu0 0.0
    %1583 = vmatpush.msra.mxu0 0.0
    %1584 = vmatpush.msra.mxu0 %v72
    %1585 = vmatpush.msra.mxu0 %v68
    %1586 = vmatpush.msra.mxu0 %v64
    %1587 = vmatpush.msra.mxu0 %v60
    %1588 = vmatmul.f32.gmra.mxu0 %v1530
    %v1589 = vpop.f32.mrf.mxu0
    %v1590 = vadd.f32 0.0, %v1589
    %1591 = vdwg.mxu0
    %1592 = vmatpush.msra.mxu0 0.0
    %1593 = vmatpush.msra.mxu0 0.0
    %1594 = vmatpush.msra.mxu0 0.0
    %1595 = vmatpush.msra.mxu0 0.0
    %1596 = vmatpush.msra.mxu0 0.0
    %1597 = vmatpush.msra.mxu0 0.0
    %1598 = vmatpush.msra.mxu0 0.0
    %1599 = vmatpush.msra.mxu0 0.0
    %1600 = vmatpush.msra.mxu0 0.0
    %1601 = vmatpush.msra.mxu0 0.0
    %1602 = vmatpush.msra.mxu0 0.0
    %1603 = vmatpush.msra.mxu0 0.0
    %1604 = vmatpush.msra.mxu0 %v73
    %1605 = vmatpush.msra.mxu0 %v69
    %1606 = vmatpush.msra.mxu0 %v65
    %1607 = vmatpush.msra.mxu0 %v61
    %1608 = vmatmul.f32.gmra.mxu0 %v1530
    %v1609 = vpop.f32.mrf.mxu0
    %v1610 = vadd.f32 0.0, %v1609
    %1611 = vdwg.mxu0
    %v1612 = vadd.f32 %v167, %v1550
    %v1613 = vadd.f32 %v187, %v1570
    %v1614 = vadd.f32 %v207, %v1590
    %v1615 = vadd.f32 %v227, %v1610
    %v1616 = vxor.u32 %v1612, 2147483648
    %v1617 = vmul.f32 %v1616, 1.442695
    %v1618 = vpow.pop %v1617
    %v1619 = vadd.f32 %v1618, 1.0
    %v1620 = vrcp.pop %v1619
    %v1621 = vmul.f32 %v1619, %v1620
    %v1622 = vsub.f32 1.0, %v1621
    %v1623 = vmul.f32 %v1620, %v1622
    %v1624 = vadd.f32 %v1620, %v1623
    %vm1625 = vweird.f32 %v1619
    %vm1626 = vweird.f32 %v1620
    %vm1627 = vmor %vm1625, %vm1626
    %v1628 = vsel %vm1627, %v1620, %v1624
    %v1629 = vand.u32 2147483647, %v1619
    %vm1630 = vcmp.eq.f32.partialorder %v1629, 8.507059e+37
    %v1631 = vand.u32 %v1619, 2147483648
    %v1632 = vor.u32 1.1754944e-38, %v1631
    %v1633 = vsel %vm1630, %v1632, %v1628
    %v1634 = vmul.f32 1.0, %v1633
    %v1635 = vxor.u32 %v1613, 2147483648
    %v1636 = vmul.f32 %v1635, 1.442695
    %v1637 = vpow.pop %v1636
    %v1638 = vadd.f32 %v1637, 1.0
    %v1639 = vrcp.pop %v1638
    %v1640 = vmul.f32 %v1638, %v1639
    %v1641 = vsub.f32 1.0, %v1640
    %v1642 = vmul.f32 %v1639, %v1641
    %v1643 = vadd.f32 %v1639, %v1642
    %vm1644 = vweird.f32 %v1638
    %vm1645 = vweird.f32 %v1639
    %vm1646 = vmor %vm1644, %vm1645
    %v1647 = vsel %vm1646, %v1639, %v1643
    %v1648 = vand.u32 2147483647, %v1638
    %vm1649 = vcmp.eq.f32.partialorder %v1648, 8.507059e+37
    %v1650 = vand.u32 %v1638, 2147483648
    %v1651 = vor.u32 1.1754944e-38, %v1650
    %v1652 = vsel %vm1649, %v1651, %v1647
    %v1653 = vmul.f32 1.0, %v1652
    %v1654 = vtanh.pop %v1614
    %v1655 = vxor.u32 %v1615, 2147483648
    %v1656 = vmul.f32 %v1655, 1.442695
    %v1657 = vpow.pop %v1656
    %v1658 = vadd.f32 %v1657, 1.0
    %v1659 = vrcp.pop %v1658
    %v1660 = vmul.f32 %v1658, %v1659
    %v1661 = vsub.f32 1.0, %v1660
    %v1662 = vmul.f32 %v1659, %v1661
    %v1663 = vadd.f32 %v1659, %v1662
    %vm1664 = vweird.f32 %v1658
    %vm1665 = vweird.f32 %v1659
    %vm1666 = vmor %vm1664, %vm1665
    %v1667 = vsel %vm1666, %v1659, %v1663
    %v1668 = vand.u32 2147483647, %v1658
    %vm1669 = vcmp.eq.f32.partialorder %v1668, 8.507059e+37
    %v1670 = vand.u32 %v1658, 2147483648
    %v1671 = vor.u32 1.1754944e-38, %v1670
    %v1672 = vsel %vm1669, %v1671, %v1667
    %v1673 = vmul.f32 1.0, %v1672
    %v1674 = vmul.f32 %v1653, %v1353
    %v1675 = vmul.f32 %v1634, %v1654
    %v1676 = vadd.f32 %v1674, %v1675
    %v1677 = vtanh.pop %v1676
    %v1678 = vmul.f32 %v1673, %v1677
    %1679 = vrot.lane.b32.xlu0 %v1505, 32
    %v1680 = vpop.permute.xlu0 %1679
    %v1682 = vsel %vm145, %v1678, %v1680
    %v1684 = vsel %vm389, %v1682, 0
    %1686 = vmatpush.msra.mxu0 0.0
    %1687 = vmatpush.msra.mxu0 0.0
    %1688 = vmatpush.msra.mxu0 0.0
    %1689 = vmatpush.msra.mxu0 0.0
    %1690 = vmatpush.msra.mxu0 %v120
    %1691 = vmatpush.msra.mxu0 %v116
    %1692 = vmatpush.msra.mxu0 %v112
    %1693 = vmatpush.msra.mxu0 %v108
    %1694 = vmatpush.msra.mxu0 %v104
    %1695 = vmatpush.msra.mxu0 %v100
    %1696 = vmatpush.msra.mxu0 %v96
    %1697 = vmatpush.msra.mxu0 %v92
    %1698 = vmatpush.msra.mxu0 %v88
    %1699 = vmatpush.msra.mxu0 %v84
    %1700 = vmatpush.msra.mxu0 %v80
    %1701 = vmatpush.msra.mxu0 %v76
    %1702 = vmatmul.f32.gmra.mxu0 %v1684
    %v1703 = vpop.f32.mrf.mxu0
    %v1704 = vadd.f32 %v230, %v1703
    %1705 = vdwg.mxu0
    %1706 = vmatpush.msra.mxu0 0.0
    %1707 = vmatpush.msra.mxu0 0.0
    %1708 = vmatpush.msra.mxu0 0.0
    %1709 = vmatpush.msra.mxu0 0.0
    %1710 = vmatpush.msra.mxu0 %v121
    %1711 = vmatpush.msra.mxu0 %v117
    %1712 = vmatpush.msra.mxu0 %v113
    %1713 = vmatpush.msra.mxu0 %v109
    %1714 = vmatpush.msra.mxu0 %v105
    %1715 = vmatpush.msra.mxu0 %v101
    %1716 = vmatpush.msra.mxu0 %v97
    %1717 = vmatpush.msra.mxu0 %v93
    %1718 = vmatpush.msra.mxu0 %v89
    %1719 = vmatpush.msra.mxu0 %v85
    %1720 = vmatpush.msra.mxu0 %v81
    %1721 = vmatpush.msra.mxu0 %v77
    %1722 = vmatmul.f32.gmra.mxu0 %v1684
    %v1723 = vpop.f32.mrf.mxu0
    %v1724 = vadd.f32 %v231, %v1723
    %1725 = vdwg.mxu0
    %1726 = vmatpush.msra.mxu0 0.0
    %1727 = vmatpush.msra.mxu0 0.0
    %1728 = vmatpush.msra.mxu0 0.0
    %1729 = vmatpush.msra.mxu0 0.0
    %1730 = vmatpush.msra.mxu0 %v122
    %1731 = vmatpush.msra.mxu0 %v118
    %1732 = vmatpush.msra.mxu0 %v114
    %1733 = vmatpush.msra.mxu0 %v110
    %1734 = vmatpush.msra.mxu0 %v106
    %1735 = vmatpush.msra.mxu0 %v102
    %1736 = vmatpush.msra.mxu0 %v98
    %1737 = vmatpush.msra.mxu0 %v94
    %1738 = vmatpush.msra.mxu0 %v90
    %1739 = vmatpush.msra.mxu0 %v86
    %1740 = vmatpush.msra.mxu0 %v82
    %1741 = vmatpush.msra.mxu0 %v78
    %1742 = vmatmul.f32.gmra.mxu0 %v1684
    %v1743 = vpop.f32.mrf.mxu0
    %v1744 = vadd.f32 %v232, %v1743
    %1745 = vdwg.mxu0
    %1746 = vmatpush.msra.mxu0 0.0
    %1747 = vmatpush.msra.mxu0 0.0
    %1748 = vmatpush.msra.mxu0 0.0
    %1749 = vmatpush.msra.mxu0 0.0
    %1750 = vmatpush.msra.mxu0 %v123
    %1751 = vmatpush.msra.mxu0 %v119
    %1752 = vmatpush.msra.mxu0 %v115
    %1753 = vmatpush.msra.mxu0 %v111
    %1754 = vmatpush.msra.mxu0 %v107
    %1755 = vmatpush.msra.mxu0 %v103
    %1756 = vmatpush.msra.mxu0 %v99
    %1757 = vmatpush.msra.mxu0 %v95
    %1758 = vmatpush.msra.mxu0 %v91
    %1759 = vmatpush.msra.mxu0 %v87
    %1760 = vmatpush.msra.mxu0 %v83
    %1761 = vmatpush.msra.mxu0 %v79
    %1762 = vmatmul.f32.gmra.mxu0 %v1684
    %v1763 = vpop.f32.mrf.mxu0
    %v1764 = vadd.f32 %v233, %v1763
    %1765 = vdwg.mxu0
    %v1766 = vxor.u32 %v1704, 2147483648
    %v1767 = vmul.f32 %v1766, 1.442695
    %v1768 = vpow.pop %v1767
    %v1769 = vadd.f32 %v1768, 1.0
    %v1770 = vrcp.pop %v1769
    %v1771 = vmul.f32 %v1769, %v1770
    %v1772 = vsub.f32 1.0, %v1771
    %v1773 = vmul.f32 %v1770, %v1772
    %v1774 = vadd.f32 %v1770, %v1773
    %vm1775 = vweird.f32 %v1769
    %vm1776 = vweird.f32 %v1770
    %vm1777 = vmor %vm1775, %vm1776
    %v1778 = vsel %vm1777, %v1770, %v1774
    %v1779 = vand.u32 2147483647, %v1769
    %vm1780 = vcmp.eq.f32.partialorder %v1779, 8.507059e+37
    %v1781 = vand.u32 %v1769, 2147483648
    %v1782 = vor.u32 1.1754944e-38, %v1781
    %v1783 = vsel %vm1780, %v1782, %v1778
    %v1784 = vmul.f32 1.0, %v1783
    %v1785 = vxor.u32 %v1724, 2147483648
    %v1786 = vmul.f32 %v1785, 1.442695
    %v1787 = vpow.pop %v1786
    %v1788 = vadd.f32 %v1787, 1.0
    %v1789 = vrcp.pop %v1788
    %v1790 = vmul.f32 %v1788, %v1789
    %v1791 = vsub.f32 1.0, %v1790
    %v1792 = vmul.f32 %v1789, %v1791
    %v1793 = vadd.f32 %v1789, %v1792
    %vm1794 = vweird.f32 %v1788
    %vm1795 = vweird.f32 %v1789
    %vm1796 = vmor %vm1794, %vm1795
    %v1797 = vsel %vm1796, %v1789, %v1793
    %v1798 = vand.u32 2147483647, %v1788
    %vm1799 = vcmp.eq.f32.partialorder %v1798, 8.507059e+37
    %v1800 = vand.u32 %v1788, 2147483648
    %v1801 = vor.u32 1.1754944e-38, %v1800
    %v1802 = vsel %vm1799, %v1801, %v1797
    %v1803 = vmul.f32 1.0, %v1802
    %v1804 = vtanh.pop %v1744
    %v1805 = vxor.u32 %v1764, 2147483648
    %v1806 = vmul.f32 %v1805, 1.442695
    %v1807 = vpow.pop %v1806
    %v1808 = vadd.f32 %v1807, 1.0
    %v1809 = vrcp.pop %v1808
    %v1810 = vmul.f32 %v1808, %v1809
    %v1811 = vsub.f32 1.0, %v1810
    %v1812 = vmul.f32 %v1809, %v1811
    %v1813 = vadd.f32 %v1809, %v1812
    %vm1814 = vweird.f32 %v1808
    %vm1815 = vweird.f32 %v1809
    %vm1816 = vmor %vm1814, %vm1815
    %v1817 = vsel %vm1816, %v1809, %v1813
    %v1818 = vand.u32 2147483647, %v1808
    %vm1819 = vcmp.eq.f32.partialorder %v1818, 8.507059e+37
    %v1820 = vand.u32 %v1808, 2147483648
    %v1821 = vor.u32 1.1754944e-38, %v1820
    %v1822 = vsel %vm1819, %v1821, %v1817
    %v1823 = vmul.f32 1.0, %v1822
    %v1824 = vmul.f32 %v1803, %v1503
    %v1825 = vmul.f32 %v1784, %v1804
    %v1826 = vadd.f32 %v1824, %v1825
    %v1827 = vtanh.pop %v1826
    %v1828 = vmul.f32 %v1823, %v1827
    %v1830 = vsel %vm536, %v1828, 0
    %1832 = vmatpush.msra.mxu0 0.0
    %1833 = vmatpush.msra.mxu0 0.0
    %1834 = vmatpush.msra.mxu0 0.0
    %1835 = vmatpush.msra.mxu0 0.0
    %1836 = vmatpush.msra.mxu0 0.0
    %1837 = vmatpush.msra.mxu0 0.0
    %1838 = vmatpush.msra.mxu0 0.0
    %1839 = vmatpush.msra.mxu0 0.0
    %1840 = vmatpush.msra.mxu0 %v133
    %1841 = vmatpush.msra.mxu0 %v132
    %1842 = vmatpush.msra.mxu0 %v131
    %1843 = vmatpush.msra.mxu0 %v130
    %1844 = vmatpush.msra.mxu0 %v129
    %1845 = vmatpush.msra.mxu0 %v128
    %1846 = vmatpush.msra.mxu0 %v127
    %1847 = vmatpush.msra.mxu0 %v126
    %1848 = vmatmul.f32.gmra.mxu0 %v1830
    %v1849 = vpop.f32.mrf.mxu0
    %v1850 = vadd.f32 0.0, %v1849
    %1851 = vdwg.mxu0
    %v1853 = vsel %vm145, %v1678, 0
    %1855 = vmatpush.msra.mxu0 0.0
    %1856 = vmatpush.msra.mxu0 0.0
    %1857 = vmatpush.msra.mxu0 0.0
    %1858 = vmatpush.msra.mxu0 0.0
    %1859 = vmatpush.msra.mxu0 0.0
    %1860 = vmatpush.msra.mxu0 0.0
    %1861 = vmatpush.msra.mxu0 0.0
    %1862 = vmatpush.msra.mxu0 0.0
    %1863 = vmatpush.msra.mxu0 0.0
    %1864 = vmatpush.msra.mxu0 0.0
    %1865 = vmatpush.msra.mxu0 0.0
    %1866 = vmatpush.msra.mxu0 0.0
    %1867 = vmatpush.msra.mxu0 %v70
    %1868 = vmatpush.msra.mxu0 %v66
    %1869 = vmatpush.msra.mxu0 %v62
    %1870 = vmatpush.msra.mxu0 %v58
    %1871 = vmatmul.f32.gmra.mxu0 %v1853
    %v1872 = vpop.f32.mrf.mxu0
    %v1873 = vadd.f32 0.0, %v1872
    %1874 = vdwg.mxu0
    %1875 = vmatpush.msra.mxu0 0.0
    %1876 = vmatpush.msra.mxu0 0.0
    %1877 = vmatpush.msra.mxu0 0.0
    %1878 = vmatpush.msra.mxu0 0.0
    %1879 = vmatpush.msra.mxu0 0.0
    %1880 = vmatpush.msra.mxu0 0.0
    %1881 = vmatpush.msra.mxu0 0.0
    %1882 = vmatpush.msra.mxu0 0.0
    %1883 = vmatpush.msra.mxu0 0.0
    %1884 = vmatpush.msra.mxu0 0.0
    %1885 = vmatpush.msra.mxu0 0.0
    %1886 = vmatpush.msra.mxu0 0.0
    %1887 = vmatpush.msra.mxu0 %v71
    %1888 = vmatpush.msra.mxu0 %v67
    %1889 = vmatpush.msra.mxu0 %v63
    %1890 = vmatpush.msra.mxu0 %v59
    %1891 = vmatmul.f32.gmra.mxu0 %v1853
    %v1892 = vpop.f32.mrf.mxu0
    %v1893 = vadd.f32 0.0, %v1892
    %1894 = vdwg.mxu0
    %1895 = vmatpush.msra.mxu0 0.0
    %1896 = vmatpush.msra.mxu0 0.0
    %1897 = vmatpush.msra.mxu0 0.0
    %1898 = vmatpush.msra.mxu0 0.0
    %1899 = vmatpush.msra.mxu0 0.0
    %1900 = vmatpush.msra.mxu0 0.0
    %1901 = vmatpush.msra.mxu0 0.0
    %1902 = vmatpush.msra.mxu0 0.0
    %1903 = vmatpush.msra.mxu0 0.0
    %1904 = vmatpush.msra.mxu0 0.0
    %1905 = vmatpush.msra.mxu0 0.0
    %1906 = vmatpush.msra.mxu0 0.0
    %1907 = vmatpush.msra.mxu0 %v72
    %1908 = vmatpush.msra.mxu0 %v68
    %1909 = vmatpush.msra.mxu0 %v64
    %1910 = vmatpush.msra.mxu0 %v60
    %1911 = vmatmul.f32.gmra.mxu0 %v1853
    %v1912 = vpop.f32.mrf.mxu0
    %v1913 = vadd.f32 0.0, %v1912
    %1914 = vdwg.mxu0
    %1915 = vmatpush.msra.mxu0 0.0
    %1916 = vmatpush.msra.mxu0 0.0
    %1917 = vmatpush.msra.mxu0 0.0
    %1918 = vmatpush.msra.mxu0 0.0
    %1919 = vmatpush.msra.mxu0 0.0
    %1920 = vmatpush.msra.mxu0 0.0
    %1921 = vmatpush.msra.mxu0 0.0
    %1922 = vmatpush.msra.mxu0 0.0
    %1923 = vmatpush.msra.mxu0 0.0
    %1924 = vmatpush.msra.mxu0 0.0
    %1925 = vmatpush.msra.mxu0 0.0
    %1926 = vmatpush.msra.mxu0 0.0
    %1927 = vmatpush.msra.mxu0 %v73
    %1928 = vmatpush.msra.mxu0 %v69
    %1929 = vmatpush.msra.mxu0 %v65
    %1930 = vmatpush.msra.mxu0 %v61
    %1931 = vmatmul.f32.gmra.mxu0 %v1853
    %v1932 = vpop.f32.mrf.mxu0
    %v1933 = vadd.f32 0.0, %v1932
    %1934 = vdwg.mxu0
    %v1935 = vadd.f32 %v167, %v1873
    %v1936 = vadd.f32 %v187, %v1893
    %v1937 = vadd.f32 %v207, %v1913
    %v1938 = vadd.f32 %v227, %v1933
    %v1939 = vxor.u32 %v1935, 2147483648
    %v1940 = vmul.f32 %v1939, 1.442695
    %v1941 = vpow.pop %v1940
    %v1942 = vadd.f32 %v1941, 1.0
    %v1943 = vrcp.pop %v1942
    %v1944 = vmul.f32 %v1942, %v1943
    %v1945 = vsub.f32 1.0, %v1944
    %v1946 = vmul.f32 %v1943, %v1945
    %v1947 = vadd.f32 %v1943, %v1946
    %vm1948 = vweird.f32 %v1942
    %vm1949 = vweird.f32 %v1943
    %vm1950 = vmor %vm1948, %vm1949
    %v1951 = vsel %vm1950, %v1943, %v1947
    %v1952 = vand.u32 2147483647, %v1942
    %vm1953 = vcmp.eq.f32.partialorder %v1952, 8.507059e+37
    %v1954 = vand.u32 %v1942, 2147483648
    %v1955 = vor.u32 1.1754944e-38, %v1954
    %v1956 = vsel %vm1953, %v1955, %v1951
    %v1957 = vmul.f32 1.0, %v1956
    %v1958 = vxor.u32 %v1936, 2147483648
    %v1959 = vmul.f32 %v1958, 1.442695
    %v1960 = vpow.pop %v1959
    %v1961 = vadd.f32 %v1960, 1.0
    %v1962 = vrcp.pop %v1961
    %v1963 = vmul.f32 %v1961, %v1962
    %v1964 = vsub.f32 1.0, %v1963
    %v1965 = vmul.f32 %v1962, %v1964
    %v1966 = vadd.f32 %v1962, %v1965
    %vm1967 = vweird.f32 %v1961
    %vm1968 = vweird.f32 %v1962
    %vm1969 = vmor %vm1967, %vm1968
    %v1970 = vsel %vm1969, %v1962, %v1966
    %v1971 = vand.u32 2147483647, %v1961
    %vm1972 = vcmp.eq.f32.partialorder %v1971, 8.507059e+37
    %v1973 = vand.u32 %v1961, 2147483648
    %v1974 = vor.u32 1.1754944e-38, %v1973
    %v1975 = vsel %vm1972, %v1974, %v1970
    %v1976 = vmul.f32 1.0, %v1975
    %v1977 = vtanh.pop %v1937
    %v1978 = vxor.u32 %v1938, 2147483648
    %v1979 = vmul.f32 %v1978, 1.442695
    %v1980 = vpow.pop %v1979
    %v1981 = vadd.f32 %v1980, 1.0
    %v1982 = vrcp.pop %v1981
    %v1983 = vmul.f32 %v1981, %v1982
    %v1984 = vsub.f32 1.0, %v1983
    %v1985 = vmul.f32 %v1982, %v1984
    %v1986 = vadd.f32 %v1982, %v1985
    %vm1987 = vweird.f32 %v1981
    %vm1988 = vweird.f32 %v1982
    %vm1989 = vmor %vm1987, %vm1988
    %v1990 = vsel %vm1989, %v1982, %v1986
    %v1991 = vand.u32 2147483647, %v1981
    %vm1992 = vcmp.eq.f32.partialorder %v1991, 8.507059e+37
    %v1993 = vand.u32 %v1981, 2147483648
    %v1994 = vor.u32 1.1754944e-38, %v1993
    %v1995 = vsel %vm1992, %v1994, %v1990
    %v1996 = vmul.f32 1.0, %v1995
    %v1997 = vmul.f32 %v1976, %v1676
    %v1998 = vmul.f32 %v1957, %v1977
    %v1999 = vadd.f32 %v1997, %v1998
    %v2000 = vtanh.pop %v1999
    %v2001 = vmul.f32 %v1996, %v2000
    %2002 = vrot.lane.b32.xlu0 %v1828, 32
    %v2003 = vpop.permute.xlu0 %2002
    %v2005 = vsel %vm145, %v2001, %v2003
    %v2007 = vsel %vm389, %v2005, 0
    %2009 = vmatpush.msra.mxu0 0.0
    %2010 = vmatpush.msra.mxu0 0.0
    %2011 = vmatpush.msra.mxu0 0.0
    %2012 = vmatpush.msra.mxu0 0.0
    %2013 = vmatpush.msra.mxu0 %v120
    %2014 = vmatpush.msra.mxu0 %v116
    %2015 = vmatpush.msra.mxu0 %v112
    %2016 = vmatpush.msra.mxu0 %v108
    %2017 = vmatpush.msra.mxu0 %v104
    %2018 = vmatpush.msra.mxu0 %v100
    %2019 = vmatpush.msra.mxu0 %v96
    %2020 = vmatpush.msra.mxu0 %v92
    %2021 = vmatpush.msra.mxu0 %v88
    %2022 = vmatpush.msra.mxu0 %v84
    %2023 = vmatpush.msra.mxu0 %v80
    %2024 = vmatpush.msra.mxu0 %v76
    %2025 = vmatmul.f32.gmra.mxu0 %v2007
    %v2026 = vpop.f32.mrf.mxu0
    %v2027 = vadd.f32 %v230, %v2026
    %2028 = vdwg.mxu0
    %2029 = vmatpush.msra.mxu0 0.0
    %2030 = vmatpush.msra.mxu0 0.0
    %2031 = vmatpush.msra.mxu0 0.0
    %2032 = vmatpush.msra.mxu0 0.0
    %2033 = vmatpush.msra.mxu0 %v121
    %2034 = vmatpush.msra.mxu0 %v117
    %2035 = vmatpush.msra.mxu0 %v113
    %2036 = vmatpush.msra.mxu0 %v109
    %2037 = vmatpush.msra.mxu0 %v105
    %2038 = vmatpush.msra.mxu0 %v101
    %2039 = vmatpush.msra.mxu0 %v97
    %2040 = vmatpush.msra.mxu0 %v93
    %2041 = vmatpush.msra.mxu0 %v89
    %2042 = vmatpush.msra.mxu0 %v85
    %2043 = vmatpush.msra.mxu0 %v81
    %2044 = vmatpush.msra.mxu0 %v77
    %2045 = vmatmul.f32.gmra.mxu0 %v2007
    %v2046 = vpop.f32.mrf.mxu0
    %v2047 = vadd.f32 %v231, %v2046
    %2048 = vdwg.mxu0
    %2049 = vmatpush.msra.mxu0 0.0
    %2050 = vmatpush.msra.mxu0 0.0
    %2051 = vmatpush.msra.mxu0 0.0
    %2052 = vmatpush.msra.mxu0 0.0
    %2053 = vmatpush.msra.mxu0 %v122
    %2054 = vmatpush.msra.mxu0 %v118
    %2055 = vmatpush.msra.mxu0 %v114
    %2056 = vmatpush.msra.mxu0 %v110
    %2057 = vmatpush.msra.mxu0 %v106
    %2058 = vmatpush.msra.mxu0 %v102
    %2059 = vmatpush.msra.mxu0 %v98
    %2060 = vmatpush.msra.mxu0 %v94
    %2061 = vmatpush.msra.mxu0 %v90
    %2062 = vmatpush.msra.mxu0 %v86
    %2063 = vmatpush.msra.mxu0 %v82
    %2064 = vmatpush.msra.mxu0 %v78
    %2065 = vmatmul.f32.gmra.mxu0 %v2007
    %v2066 = vpop.f32.mrf.mxu0
    %v2067 = vadd.f32 %v232, %v2066
    %2068 = vdwg.mxu0
    %2069 = vmatpush.msra.mxu0 0.0
    %2070 = vmatpush.msra.mxu0 0.0
    %2071 = vmatpush.msra.mxu0 0.0
    %2072 = vmatpush.msra.mxu0 0.0
    %2073 = vmatpush.msra.mxu0 %v123
    %2074 = vmatpush.msra.mxu0 %v119
    %2075 = vmatpush.msra.mxu0 %v115
    %2076 = vmatpush.msra.mxu0 %v111
    %2077 = vmatpush.msra.mxu0 %v107
    %2078 = vmatpush.msra.mxu0 %v103
    %2079 = vmatpush.msra.mxu0 %v99
    %2080 = vmatpush.msra.mxu0 %v95
    %2081 = vmatpush.msra.mxu0 %v91
    %2082 = vmatpush.msra.mxu0 %v87
    %2083 = vmatpush.msra.mxu0 %v83
    %2084 = vmatpush.msra.mxu0 %v79
    %2085 = vmatmul.f32.gmra.mxu0 %v2007
    %v2086 = vpop.f32.mrf.mxu0
    %v2087 = vadd.f32 %v233, %v2086
    %2088 = vdwg.mxu0
    %v2089 = vxor.u32 %v2027, 2147483648
    %v2090 = vmul.f32 %v2089, 1.442695
    %v2091 = vpow.pop %v2090
    %v2092 = vadd.f32 %v2091, 1.0
    %v2093 = vrcp.pop %v2092
    %v2094 = vmul.f32 %v2092, %v2093
    %v2095 = vsub.f32 1.0, %v2094
    %v2096 = vmul.f32 %v2093, %v2095
    %v2097 = vadd.f32 %v2093, %v2096
    %vm2098 = vweird.f32 %v2092
    %vm2099 = vweird.f32 %v2093
    %vm2100 = vmor %vm2098, %vm2099
    %v2101 = vsel %vm2100, %v2093, %v2097
    %v2102 = vand.u32 2147483647, %v2092
    %vm2103 = vcmp.eq.f32.partialorder %v2102, 8.507059e+37
    %v2104 = vand.u32 %v2092, 2147483648
    %v2105 = vor.u32 1.1754944e-38, %v2104
    %v2106 = vsel %vm2103, %v2105, %v2101
    %v2107 = vmul.f32 1.0, %v2106
    %v2108 = vxor.u32 %v2047, 2147483648
    %v2109 = vmul.f32 %v2108, 1.442695
    %v2110 = vpow.pop %v2109
    %v2111 = vadd.f32 %v2110, 1.0
    %v2112 = vrcp.pop %v2111
    %v2113 = vmul.f32 %v2111, %v2112
    %v2114 = vsub.f32 1.0, %v2113
    %v2115 = vmul.f32 %v2112, %v2114
    %v2116 = vadd.f32 %v2112, %v2115
    %vm2117 = vweird.f32 %v2111
    %vm2118 = vweird.f32 %v2112
    %vm2119 = vmor %vm2117, %vm2118
    %v2120 = vsel %vm2119, %v2112, %v2116
    %v2121 = vand.u32 2147483647, %v2111
    %vm2122 = vcmp.eq.f32.partialorder %v2121, 8.507059e+37
    %v2123 = vand.u32 %v2111, 2147483648
    %v2124 = vor.u32 1.1754944e-38, %v2123
    %v2125 = vsel %vm2122, %v2124, %v2120
    %v2126 = vmul.f32 1.0, %v2125
    %v2127 = vtanh.pop %v2067
    %v2128 = vxor.u32 %v2087, 2147483648
    %v2129 = vmul.f32 %v2128, 1.442695
    %v2130 = vpow.pop %v2129
    %v2131 = vadd.f32 %v2130, 1.0
    %v2132 = vrcp.pop %v2131
    %v2133 = vmul.f32 %v2131, %v2132
    %v2134 = vsub.f32 1.0, %v2133
    %v2135 = vmul.f32 %v2132, %v2134
    %v2136 = vadd.f32 %v2132, %v2135
    %vm2137 = vweird.f32 %v2131
    %vm2138 = vweird.f32 %v2132
    %vm2139 = vmor %vm2137, %vm2138
    %v2140 = vsel %vm2139, %v2132, %v2136
    %v2141 = vand.u32 2147483647, %v2131
    %vm2142 = vcmp.eq.f32.partialorder %v2141, 8.507059e+37
    %v2143 = vand.u32 %v2131, 2147483648
    %v2144 = vor.u32 1.1754944e-38, %v2143
    %v2145 = vsel %vm2142, %v2144, %v2140
    %v2146 = vmul.f32 1.0, %v2145
    %v2147 = vmul.f32 %v2126, %v1826
    %v2148 = vmul.f32 %v2107, %v2127
    %v2149 = vadd.f32 %v2147, %v2148
    %v2150 = vtanh.pop %v2149
    %v2151 = vmul.f32 %v2146, %v2150
    %v2153 = vsel %vm536, %v2151, 0
    %2155 = vmatpush.msra.mxu0 0.0
    %2156 = vmatpush.msra.mxu0 0.0
    %2157 = vmatpush.msra.mxu0 0.0
    %2158 = vmatpush.msra.mxu0 0.0
    %2159 = vmatpush.msra.mxu0 0.0
    %2160 = vmatpush.msra.mxu0 0.0
    %2161 = vmatpush.msra.mxu0 0.0
    %2162 = vmatpush.msra.mxu0 0.0
    %2163 = vmatpush.msra.mxu0 %v133
    %2164 = vmatpush.msra.mxu0 %v132
    %2165 = vmatpush.msra.mxu0 %v131
    %2166 = vmatpush.msra.mxu0 %v130
    %2167 = vmatpush.msra.mxu0 %v129
    %2168 = vmatpush.msra.mxu0 %v128
    %2169 = vmatpush.msra.mxu0 %v127
    %2170 = vmatpush.msra.mxu0 %v126
    %2171 = vmatmul.f32.gmra.mxu0 %v2153
    %v2172 = vpop.f32.mrf.mxu0
    %v2173 = vadd.f32 0.0, %v2172
    %2174 = vdwg.mxu0
    %v2176 = vsel %vm145, %v2001, 0
    %2178 = vmatpush.msra.mxu0 0.0
    %2179 = vmatpush.msra.mxu0 0.0
    %2180 = vmatpush.msra.mxu0 0.0
    %2181 = vmatpush.msra.mxu0 0.0
    %2182 = vmatpush.msra.mxu0 0.0
    %2183 = vmatpush.msra.mxu0 0.0
    %2184 = vmatpush.msra.mxu0 0.0
    %2185 = vmatpush.msra.mxu0 0.0
    %2186 = vmatpush.msra.mxu0 0.0
    %2187 = vmatpush.msra.mxu0 0.0
    %2188 = vmatpush.msra.mxu0 0.0
    %2189 = vmatpush.msra.mxu0 0.0
    %2190 = vmatpush.msra.mxu0 %v70
    %2191 = vmatpush.msra.mxu0 %v66
    %2192 = vmatpush.msra.mxu0 %v62
    %2193 = vmatpush.msra.mxu0 %v58
    %2194 = vmatmul.f32.gmra.mxu0 %v2176
    %v2195 = vpop.f32.mrf.mxu0
    %v2196 = vadd.f32 0.0, %v2195
    %2197 = vdwg.mxu0
    %2198 = vmatpush.msra.mxu0 0.0
    %2199 = vmatpush.msra.mxu0 0.0
    %2200 = vmatpush.msra.mxu0 0.0
    %2201 = vmatpush.msra.mxu0 0.0
    %2202 = vmatpush.msra.mxu0 0.0
    %2203 = vmatpush.msra.mxu0 0.0
    %2204 = vmatpush.msra.mxu0 0.0
    %2205 = vmatpush.msra.mxu0 0.0
    %2206 = vmatpush.msra.mxu0 0.0
    %2207 = vmatpush.msra.mxu0 0.0
    %2208 = vmatpush.msra.mxu0 0.0
    %2209 = vmatpush.msra.mxu0 0.0
    %2210 = vmatpush.msra.mxu0 %v71
    %2211 = vmatpush.msra.mxu0 %v67
    %2212 = vmatpush.msra.mxu0 %v63
    %2213 = vmatpush.msra.mxu0 %v59
    %2214 = vmatmul.f32.gmra.mxu0 %v2176
    %v2215 = vpop.f32.mrf.mxu0
    %v2216 = vadd.f32 0.0, %v2215
    %2217 = vdwg.mxu0
    %2218 = vmatpush.msra.mxu0 0.0
    %2219 = vmatpush.msra.mxu0 0.0
    %2220 = vmatpush.msra.mxu0 0.0
    %2221 = vmatpush.msra.mxu0 0.0
    %2222 = vmatpush.msra.mxu0 0.0
    %2223 = vmatpush.msra.mxu0 0.0
    %2224 = vmatpush.msra.mxu0 0.0
    %2225 = vmatpush.msra.mxu0 0.0
    %2226 = vmatpush.msra.mxu0 0.0
    %2227 = vmatpush.msra.mxu0 0.0
    %2228 = vmatpush.msra.mxu0 0.0
    %2229 = vmatpush.msra.mxu0 0.0
    %2230 = vmatpush.msra.mxu0 %v72
    %2231 = vmatpush.msra.mxu0 %v68
    %2232 = vmatpush.msra.mxu0 %v64
    %2233 = vmatpush.msra.mxu0 %v60
    %2234 = vmatmul.f32.gmra.mxu0 %v2176
    %v2235 = vpop.f32.mrf.mxu0
    %v2236 = vadd.f32 0.0, %v2235
    %2237 = vdwg.mxu0
    %2238 = vmatpush.msra.mxu0 0.0
    %2239 = vmatpush.msra.mxu0 0.0
    %2240 = vmatpush.msra.mxu0 0.0
    %2241 = vmatpush.msra.mxu0 0.0
    %2242 = vmatpush.msra.mxu0 0.0
    %2243 = vmatpush.msra.mxu0 0.0
    %2244 = vmatpush.msra.mxu0 0.0
    %2245 = vmatpush.msra.mxu0 0.0
    %2246 = vmatpush.msra.mxu0 0.0
    %2247 = vmatpush.msra.mxu0 0.0
    %2248 = vmatpush.msra.mxu0 0.0
    %2249 = vmatpush.msra.mxu0 0.0
    %2250 = vmatpush.msra.mxu0 %v73
    %2251 = vmatpush.msra.mxu0 %v69
    %2252 = vmatpush.msra.mxu0 %v65
    %2253 = vmatpush.msra.mxu0 %v61
    %2254 = vmatmul.f32.gmra.mxu0 %v2176
    %v2255 = vpop.f32.mrf.mxu0
    %v2256 = vadd.f32 0.0, %v2255
    %2257 = vdwg.mxu0
    %v2258 = vadd.f32 %v167, %v2196
    %v2259 = vadd.f32 %v187, %v2216
    %v2260 = vadd.f32 %v207, %v2236
    %v2261 = vadd.f32 %v227, %v2256
    %v2262 = vxor.u32 %v2258, 2147483648
    %v2263 = vmul.f32 %v2262, 1.442695
    %v2264 = vpow.pop %v2263
    %v2265 = vadd.f32 %v2264, 1.0
    %v2266 = vrcp.pop %v2265
    %v2267 = vmul.f32 %v2265, %v2266
    %v2268 = vsub.f32 1.0, %v2267
    %v2269 = vmul.f32 %v2266, %v2268
    %v2270 = vadd.f32 %v2266, %v2269
    %vm2271 = vweird.f32 %v2265
    %vm2272 = vweird.f32 %v2266
    %vm2273 = vmor %vm2271, %vm2272
    %v2274 = vsel %vm2273, %v2266, %v2270
    %v2275 = vand.u32 2147483647, %v2265
    %vm2276 = vcmp.eq.f32.partialorder %v2275, 8.507059e+37
    %v2277 = vand.u32 %v2265, 2147483648
    %v2278 = vor.u32 1.1754944e-38, %v2277
    %v2279 = vsel %vm2276, %v2278, %v2274
    %v2280 = vmul.f32 1.0, %v2279
    %v2281 = vxor.u32 %v2259, 2147483648
    %v2282 = vmul.f32 %v2281, 1.442695
    %v2283 = vpow.pop %v2282
    %v2284 = vadd.f32 %v2283, 1.0
    %v2285 = vrcp.pop %v2284
    %v2286 = vmul.f32 %v2284, %v2285
    %v2287 = vsub.f32 1.0, %v2286
    %v2288 = vmul.f32 %v2285, %v2287
    %v2289 = vadd.f32 %v2285, %v2288
    %vm2290 = vweird.f32 %v2284
    %vm2291 = vweird.f32 %v2285
    %vm2292 = vmor %vm2290, %vm2291
    %v2293 = vsel %vm2292, %v2285, %v2289
    %v2294 = vand.u32 2147483647, %v2284
    %vm2295 = vcmp.eq.f32.partialorder %v2294, 8.507059e+37
    %v2296 = vand.u32 %v2284, 2147483648
    %v2297 = vor.u32 1.1754944e-38, %v2296
    %v2298 = vsel %vm2295, %v2297, %v2293
    %v2299 = vmul.f32 1.0, %v2298
    %v2300 = vtanh.pop %v2260
    %v2301 = vxor.u32 %v2261, 2147483648
    %v2302 = vmul.f32 %v2301, 1.442695
    %v2303 = vpow.pop %v2302
    %v2304 = vadd.f32 %v2303, 1.0
    %v2305 = vrcp.pop %v2304
    %v2306 = vmul.f32 %v2304, %v2305
    %v2307 = vsub.f32 1.0, %v2306
    %v2308 = vmul.f32 %v2305, %v2307
    %v2309 = vadd.f32 %v2305, %v2308
    %vm2310 = vweird.f32 %v2304
    %vm2311 = vweird.f32 %v2305
    %vm2312 = vmor %vm2310, %vm2311
    %v2313 = vsel %vm2312, %v2305, %v2309
    %v2314 = vand.u32 2147483647, %v2304
    %vm2315 = vcmp.eq.f32.partialorder %v2314, 8.507059e+37
    %v2316 = vand.u32 %v2304, 2147483648
    %v2317 = vor.u32 1.1754944e-38, %v2316
    %v2318 = vsel %vm2315, %v2317, %v2313
    %v2319 = vmul.f32 1.0, %v2318
    %v2320 = vmul.f32 %v2299, %v1999
    %v2321 = vmul.f32 %v2280, %v2300
    %v2322 = vadd.f32 %v2320, %v2321
    %v2323 = vtanh.pop %v2322
    %v2324 = vmul.f32 %v2319, %v2323
    %2325 = vrot.lane.b32.xlu0 %v2151, 32
    %v2326 = vpop.permute.xlu0 %2325
    %v2328 = vsel %vm145, %v2324, %v2326
    %v2330 = vsel %vm389, %v2328, 0
    %2332 = vmatpush.msra.mxu0 0.0
    %2333 = vmatpush.msra.mxu0 0.0
    %2334 = vmatpush.msra.mxu0 0.0
    %2335 = vmatpush.msra.mxu0 0.0
    %2336 = vmatpush.msra.mxu0 %v120
    %2337 = vmatpush.msra.mxu0 %v116
    %2338 = vmatpush.msra.mxu0 %v112
    %2339 = vmatpush.msra.mxu0 %v108
    %2340 = vmatpush.msra.mxu0 %v104
    %2341 = vmatpush.msra.mxu0 %v100
    %2342 = vmatpush.msra.mxu0 %v96
    %2343 = vmatpush.msra.mxu0 %v92
    %2344 = vmatpush.msra.mxu0 %v88
    %2345 = vmatpush.msra.mxu0 %v84
    %2346 = vmatpush.msra.mxu0 %v80
    %2347 = vmatpush.msra.mxu0 %v76
    %2348 = vmatmul.f32.gmra.mxu0 %v2330
    %v2349 = vpop.f32.mrf.mxu0
    %v2350 = vadd.f32 %v230, %v2349
    %2351 = vdwg.mxu0
    %2352 = vmatpush.msra.mxu0 0.0
    %2353 = vmatpush.msra.mxu0 0.0
    %2354 = vmatpush.msra.mxu0 0.0
    %2355 = vmatpush.msra.mxu0 0.0
    %2356 = vmatpush.msra.mxu0 %v121
    %2357 = vmatpush.msra.mxu0 %v117
    %2358 = vmatpush.msra.mxu0 %v113
    %2359 = vmatpush.msra.mxu0 %v109
    %2360 = vmatpush.msra.mxu0 %v105
    %2361 = vmatpush.msra.mxu0 %v101
    %2362 = vmatpush.msra.mxu0 %v97
    %2363 = vmatpush.msra.mxu0 %v93
    %2364 = vmatpush.msra.mxu0 %v89
    %2365 = vmatpush.msra.mxu0 %v85
    %2366 = vmatpush.msra.mxu0 %v81
    %2367 = vmatpush.msra.mxu0 %v77
    %2368 = vmatmul.f32.gmra.mxu0 %v2330
    %v2369 = vpop.f32.mrf.mxu0
    %v2370 = vadd.f32 %v231, %v2369
    %2371 = vdwg.mxu0
    %2372 = vmatpush.msra.mxu0 0.0
    %2373 = vmatpush.msra.mxu0 0.0
    %2374 = vmatpush.msra.mxu0 0.0
    %2375 = vmatpush.msra.mxu0 0.0
    %2376 = vmatpush.msra.mxu0 %v122
    %2377 = vmatpush.msra.mxu0 %v118
    %2378 = vmatpush.msra.mxu0 %v114
    %2379 = vmatpush.msra.mxu0 %v110
    %2380 = vmatpush.msra.mxu0 %v106
    %2381 = vmatpush.msra.mxu0 %v102
    %2382 = vmatpush.msra.mxu0 %v98
    %2383 = vmatpush.msra.mxu0 %v94
    %2384 = vmatpush.msra.mxu0 %v90
    %2385 = vmatpush.msra.mxu0 %v86
    %2386 = vmatpush.msra.mxu0 %v82
    %2387 = vmatpush.msra.mxu0 %v78
    %2388 = vmatmul.f32.gmra.mxu0 %v2330
    %v2389 = vpop.f32.mrf.mxu0
    %v2390 = vadd.f32 %v232, %v2389
    %2391 = vdwg.mxu0
    %2392 = vmatpush.msra.mxu0 0.0
    %2393 = vmatpush.msra.mxu0 0.0
    %2394 = vmatpush.msra.mxu0 0.0
    %2395 = vmatpush.msra.mxu0 0.0
    %2396 = vmatpush.msra.mxu0 %v123
    %2397 = vmatpush.msra.mxu0 %v119
    %2398 = vmatpush.msra.mxu0 %v115
    %2399 = vmatpush.msra.mxu0 %v111
    %2400 = vmatpush.msra.mxu0 %v107
    %2401 = vmatpush.msra.mxu0 %v103
    %2402 = vmatpush.msra.mxu0 %v99
    %2403 = vmatpush.msra.mxu0 %v95
    %2404 = vmatpush.msra.mxu0 %v91
    %2405 = vmatpush.msra.mxu0 %v87
    %2406 = vmatpush.msra.mxu0 %v83
    %2407 = vmatpush.msra.mxu0 %v79
    %2408 = vmatmul.f32.gmra.mxu0 %v2330
    %v2409 = vpop.f32.mrf.mxu0
    %v2410 = vadd.f32 %v233, %v2409
    %2411 = vdwg.mxu0
    %v2412 = vxor.u32 %v2350, 2147483648
    %v2413 = vmul.f32 %v2412, 1.442695
    %v2414 = vpow.pop %v2413
    %v2415 = vadd.f32 %v2414, 1.0
    %v2416 = vrcp.pop %v2415
    %v2417 = vmul.f32 %v2415, %v2416
    %v2418 = vsub.f32 1.0, %v2417
    %v2419 = vmul.f32 %v2416, %v2418
    %v2420 = vadd.f32 %v2416, %v2419
    %vm2421 = vweird.f32 %v2415
    %vm2422 = vweird.f32 %v2416
    %vm2423 = vmor %vm2421, %vm2422
    %v2424 = vsel %vm2423, %v2416, %v2420
    %v2425 = vand.u32 2147483647, %v2415
    %vm2426 = vcmp.eq.f32.partialorder %v2425, 8.507059e+37
    %v2427 = vand.u32 %v2415, 2147483648
    %v2428 = vor.u32 1.1754944e-38, %v2427
    %v2429 = vsel %vm2426, %v2428, %v2424
    %v2430 = vmul.f32 1.0, %v2429
    %v2431 = vxor.u32 %v2370, 2147483648
    %v2432 = vmul.f32 %v2431, 1.442695
    %v2433 = vpow.pop %v2432
    %v2434 = vadd.f32 %v2433, 1.0
    %v2435 = vrcp.pop %v2434
    %v2436 = vmul.f32 %v2434, %v2435
    %v2437 = vsub.f32 1.0, %v2436
    %v2438 = vmul.f32 %v2435, %v2437
    %v2439 = vadd.f32 %v2435, %v2438
    %vm2440 = vweird.f32 %v2434
    %vm2441 = vweird.f32 %v2435
    %vm2442 = vmor %vm2440, %vm2441
    %v2443 = vsel %vm2442, %v2435, %v2439
    %v2444 = vand.u32 2147483647, %v2434
    %vm2445 = vcmp.eq.f32.partialorder %v2444, 8.507059e+37
    %v2446 = vand.u32 %v2434, 2147483648
    %v2447 = vor.u32 1.1754944e-38, %v2446
    %v2448 = vsel %vm2445, %v2447, %v2443
    %v2449 = vmul.f32 1.0, %v2448
    %v2450 = vtanh.pop %v2390
    %v2451 = vxor.u32 %v2410, 2147483648
    %v2452 = vmul.f32 %v2451, 1.442695
    %v2453 = vpow.pop %v2452
    %v2454 = vadd.f32 %v2453, 1.0
    %v2455 = vrcp.pop %v2454
    %v2456 = vmul.f32 %v2454, %v2455
    %v2457 = vsub.f32 1.0, %v2456
    %v2458 = vmul.f32 %v2455, %v2457
    %v2459 = vadd.f32 %v2455, %v2458
    %vm2460 = vweird.f32 %v2454
    %vm2461 = vweird.f32 %v2455
    %vm2462 = vmor %vm2460, %vm2461
    %v2463 = vsel %vm2462, %v2455, %v2459
    %v2464 = vand.u32 2147483647, %v2454
    %vm2465 = vcmp.eq.f32.partialorder %v2464, 8.507059e+37
    %v2466 = vand.u32 %v2454, 2147483648
    %v2467 = vor.u32 1.1754944e-38, %v2466
    %v2468 = vsel %vm2465, %v2467, %v2463
    %v2469 = vmul.f32 1.0, %v2468
    %v2470 = vmul.f32 %v2449, %v2149
    %v2471 = vmul.f32 %v2430, %v2450
    %v2472 = vadd.f32 %v2470, %v2471
    %v2473 = vtanh.pop %v2472
    %v2474 = vmul.f32 %v2469, %v2473
    %v2476 = vsel %vm536, %v2474, 0
    %2478 = vmatpush.msra.mxu0 0.0
    %2479 = vmatpush.msra.mxu0 0.0
    %2480 = vmatpush.msra.mxu0 0.0
    %2481 = vmatpush.msra.mxu0 0.0
    %2482 = vmatpush.msra.mxu0 0.0
    %2483 = vmatpush.msra.mxu0 0.0
    %2484 = vmatpush.msra.mxu0 0.0
    %2485 = vmatpush.msra.mxu0 0.0
    %2486 = vmatpush.msra.mxu0 %v133
    %2487 = vmatpush.msra.mxu0 %v132
    %2488 = vmatpush.msra.mxu0 %v131
    %2489 = vmatpush.msra.mxu0 %v130
    %2490 = vmatpush.msra.mxu0 %v129
    %2491 = vmatpush.msra.mxu0 %v128
    %2492 = vmatpush.msra.mxu0 %v127
    %2493 = vmatpush.msra.mxu0 %v126
    %2494 = vmatmul.f32.gmra.mxu0 %v2476
    %v2495 = vpop.f32.mrf.mxu0
    %v2496 = vadd.f32 0.0, %v2495
    %2497 = vdwg.mxu0
    %v2499 = vsel %vm145, %v2324, 0
    %2501 = vmatpush.msra.mxu0 0.0
    %2502 = vmatpush.msra.mxu0 0.0
    %2503 = vmatpush.msra.mxu0 0.0
    %2504 = vmatpush.msra.mxu0 0.0
    %2505 = vmatpush.msra.mxu0 0.0
    %2506 = vmatpush.msra.mxu0 0.0
    %2507 = vmatpush.msra.mxu0 0.0
    %2508 = vmatpush.msra.mxu0 0.0
    %2509 = vmatpush.msra.mxu0 0.0
    %2510 = vmatpush.msra.mxu0 0.0
    %2511 = vmatpush.msra.mxu0 0.0
    %2512 = vmatpush.msra.mxu0 0.0
    %2513 = vmatpush.msra.mxu0 %v70
    %2514 = vmatpush.msra.mxu0 %v66
    %2515 = vmatpush.msra.mxu0 %v62
    %2516 = vmatpush.msra.mxu0 %v58
    %2517 = vmatmul.f32.gmra.mxu0 %v2499
    %v2518 = vpop.f32.mrf.mxu0
    %v2519 = vadd.f32 0.0, %v2518
    %2520 = vdwg.mxu0
    %2521 = vmatpush.msra.mxu0 0.0
    %2522 = vmatpush.msra.mxu0 0.0
    %2523 = vmatpush.msra.mxu0 0.0
    %2524 = vmatpush.msra.mxu0 0.0
    %2525 = vmatpush.msra.mxu0 0.0
    %2526 = vmatpush.msra.mxu0 0.0
    %2527 = vmatpush.msra.mxu0 0.0
    %2528 = vmatpush.msra.mxu0 0.0
    %2529 = vmatpush.msra.mxu0 0.0
    %2530 = vmatpush.msra.mxu0 0.0
    %2531 = vmatpush.msra.mxu0 0.0
    %2532 = vmatpush.msra.mxu0 0.0
    %2533 = vmatpush.msra.mxu0 %v71
    %2534 = vmatpush.msra.mxu0 %v67
    %2535 = vmatpush.msra.mxu0 %v63
    %2536 = vmatpush.msra.mxu0 %v59
    %2537 = vmatmul.f32.gmra.mxu0 %v2499
    %v2538 = vpop.f32.mrf.mxu0
    %v2539 = vadd.f32 0.0, %v2538
    %2540 = vdwg.mxu0
    %2541 = vmatpush.msra.mxu0 0.0
    %2542 = vmatpush.msra.mxu0 0.0
    %2543 = vmatpush.msra.mxu0 0.0
    %2544 = vmatpush.msra.mxu0 0.0
    %2545 = vmatpush.msra.mxu0 0.0
    %2546 = vmatpush.msra.mxu0 0.0
    %2547 = vmatpush.msra.mxu0 0.0
    %2548 = vmatpush.msra.mxu0 0.0
    %2549 = vmatpush.msra.mxu0 0.0
    %2550 = vmatpush.msra.mxu0 0.0
    %2551 = vmatpush.msra.mxu0 0.0
    %2552 = vmatpush.msra.mxu0 0.0
    %2553 = vmatpush.msra.mxu0 %v72
    %2554 = vmatpush.msra.mxu0 %v68
    %2555 = vmatpush.msra.mxu0 %v64
    %2556 = vmatpush.msra.mxu0 %v60
    %2557 = vmatmul.f32.gmra.mxu0 %v2499
    %v2558 = vpop.f32.mrf.mxu0
    %v2559 = vadd.f32 0.0, %v2558
    %2560 = vdwg.mxu0
    %2561 = vmatpush.msra.mxu0 0.0
    %2562 = vmatpush.msra.mxu0 0.0
    %2563 = vmatpush.msra.mxu0 0.0
    %2564 = vmatpush.msra.mxu0 0.0
    %2565 = vmatpush.msra.mxu0 0.0
    %2566 = vmatpush.msra.mxu0 0.0
    %2567 = vmatpush.msra.mxu0 0.0
    %2568 = vmatpush.msra.mxu0 0.0
    %2569 = vmatpush.msra.mxu0 0.0
    %2570 = vmatpush.msra.mxu0 0.0
    %2571 = vmatpush.msra.mxu0 0.0
    %2572 = vmatpush.msra.mxu0 0.0
    %2573 = vmatpush.msra.mxu0 %v73
    %2574 = vmatpush.msra.mxu0 %v69
    %2575 = vmatpush.msra.mxu0 %v65
    %2576 = vmatpush.msra.mxu0 %v61
    %2577 = vmatmul.f32.gmra.mxu0 %v2499
    %v2578 = vpop.f32.mrf.mxu0
    %v2579 = vadd.f32 0.0, %v2578
    %2580 = vdwg.mxu0
    %v2581 = vadd.f32 %v167, %v2519
    %v2582 = vadd.f32 %v187, %v2539
    %v2583 = vadd.f32 %v207, %v2559
    %v2584 = vadd.f32 %v227, %v2579
    %v2585 = vxor.u32 %v2581, 2147483648
    %v2586 = vmul.f32 %v2585, 1.442695
    %v2587 = vpow.pop %v2586
    %v2588 = vadd.f32 %v2587, 1.0
    %v2589 = vrcp.pop %v2588
    %v2590 = vmul.f32 %v2588, %v2589
    %v2591 = vsub.f32 1.0, %v2590
    %v2592 = vmul.f32 %v2589, %v2591
    %v2593 = vadd.f32 %v2589, %v2592
    %vm2594 = vweird.f32 %v2588
    %vm2595 = vweird.f32 %v2589
    %vm2596 = vmor %vm2594, %vm2595
    %v2597 = vsel %vm2596, %v2589, %v2593
    %v2598 = vand.u32 2147483647, %v2588
    %vm2599 = vcmp.eq.f32.partialorder %v2598, 8.507059e+37
    %v2600 = vand.u32 %v2588, 2147483648
    %v2601 = vor.u32 1.1754944e-38, %v2600
    %v2602 = vsel %vm2599, %v2601, %v2597
    %v2603 = vmul.f32 1.0, %v2602
    %v2604 = vxor.u32 %v2582, 2147483648
    %v2605 = vmul.f32 %v2604, 1.442695
    %v2606 = vpow.pop %v2605
    %v2607 = vadd.f32 %v2606, 1.0
    %v2608 = vrcp.pop %v2607
    %v2609 = vmul.f32 %v2607, %v2608
    %v2610 = vsub.f32 1.0, %v2609
    %v2611 = vmul.f32 %v2608, %v2610
    %v2612 = vadd.f32 %v2608, %v2611
    %vm2613 = vweird.f32 %v2607
    %vm2614 = vweird.f32 %v2608
    %vm2615 = vmor %vm2613, %vm2614
    %v2616 = vsel %vm2615, %v2608, %v2612
    %v2617 = vand.u32 2147483647, %v2607
    %vm2618 = vcmp.eq.f32.partialorder %v2617, 8.507059e+37
    %v2619 = vand.u32 %v2607, 2147483648
    %v2620 = vor.u32 1.1754944e-38, %v2619
    %v2621 = vsel %vm2618, %v2620, %v2616
    %v2622 = vmul.f32 1.0, %v2621
    %v2623 = vtanh.pop %v2583
    %v2624 = vxor.u32 %v2584, 2147483648
    %v2625 = vmul.f32 %v2624, 1.442695
    %v2626 = vpow.pop %v2625
    %v2627 = vadd.f32 %v2626, 1.0
    %v2628 = vrcp.pop %v2627
    %v2629 = vmul.f32 %v2627, %v2628
    %v2630 = vsub.f32 1.0, %v2629
    %v2631 = vmul.f32 %v2628, %v2630
    %v2632 = vadd.f32 %v2628, %v2631
    %vm2633 = vweird.f32 %v2627
    %vm2634 = vweird.f32 %v2628
    %vm2635 = vmor %vm2633, %vm2634
    %v2636 = vsel %vm2635, %v2628, %v2632
    %v2637 = vand.u32 2147483647, %v2627
    %vm2638 = vcmp.eq.f32.partialorder %v2637, 8.507059e+37
    %v2639 = vand.u32 %v2627, 2147483648
    %v2640 = vor.u32 1.1754944e-38, %v2639
    %v2641 = vsel %vm2638, %v2640, %v2636
    %v2642 = vmul.f32 1.0, %v2641
    %v2643 = vmul.f32 %v2622, %v2322
    %v2644 = vmul.f32 %v2603, %v2623
    %v2645 = vadd.f32 %v2643, %v2644
    %v2646 = vtanh.pop %v2645
    %v2647 = vmul.f32 %v2642, %v2646
    %2648 = vrot.lane.b32.xlu0 %v2474, 32
    %v2649 = vpop.permute.xlu0 %2648
    %v2651 = vsel %vm145, %v2647, %v2649
    %v2653 = vsel %vm389, %v2651, 0
    %2655 = vmatpush.msra.mxu0 0.0
    %2656 = vmatpush.msra.mxu0 0.0
    %2657 = vmatpush.msra.mxu0 0.0
    %2658 = vmatpush.msra.mxu0 0.0
    %2659 = vmatpush.msra.mxu0 %v120
    %2660 = vmatpush.msra.mxu0 %v116
    %2661 = vmatpush.msra.mxu0 %v112
    %2662 = vmatpush.msra.mxu0 %v108
    %2663 = vmatpush.msra.mxu0 %v104
    %2664 = vmatpush.msra.mxu0 %v100
    %2665 = vmatpush.msra.mxu0 %v96
    %2666 = vmatpush.msra.mxu0 %v92
    %2667 = vmatpush.msra.mxu0 %v88
    %2668 = vmatpush.msra.mxu0 %v84
    %2669 = vmatpush.msra.mxu0 %v80
    %2670 = vmatpush.msra.mxu0 %v76
    %2671 = vmatmul.f32.gmra.mxu0 %v2653
    %v2672 = vpop.f32.mrf.mxu0
    %v2673 = vadd.f32 %v230, %v2672
    %2674 = vdwg.mxu0
    %2675 = vmatpush.msra.mxu0 0.0
    %2676 = vmatpush.msra.mxu0 0.0
    %2677 = vmatpush.msra.mxu0 0.0
    %2678 = vmatpush.msra.mxu0 0.0
    %2679 = vmatpush.msra.mxu0 %v121
    %2680 = vmatpush.msra.mxu0 %v117
    %2681 = vmatpush.msra.mxu0 %v113
    %2682 = vmatpush.msra.mxu0 %v109
    %2683 = vmatpush.msra.mxu0 %v105
    %2684 = vmatpush.msra.mxu0 %v101
    %2685 = vmatpush.msra.mxu0 %v97
    %2686 = vmatpush.msra.mxu0 %v93
    %2687 = vmatpush.msra.mxu0 %v89
    %2688 = vmatpush.msra.mxu0 %v85
    %2689 = vmatpush.msra.mxu0 %v81
    %2690 = vmatpush.msra.mxu0 %v77
    %2691 = vmatmul.f32.gmra.mxu0 %v2653
    %v2692 = vpop.f32.mrf.mxu0
    %v2693 = vadd.f32 %v231, %v2692
    %2694 = vdwg.mxu0
    %2695 = vmatpush.msra.mxu0 0.0
    %2696 = vmatpush.msra.mxu0 0.0
    %2697 = vmatpush.msra.mxu0 0.0
    %2698 = vmatpush.msra.mxu0 0.0
    %2699 = vmatpush.msra.mxu0 %v122
    %2700 = vmatpush.msra.mxu0 %v118
    %2701 = vmatpush.msra.mxu0 %v114
    %2702 = vmatpush.msra.mxu0 %v110
    %2703 = vmatpush.msra.mxu0 %v106
    %2704 = vmatpush.msra.mxu0 %v102
    %2705 = vmatpush.msra.mxu0 %v98
    %2706 = vmatpush.msra.mxu0 %v94
    %2707 = vmatpush.msra.mxu0 %v90
    %2708 = vmatpush.msra.mxu0 %v86
    %2709 = vmatpush.msra.mxu0 %v82
    %2710 = vmatpush.msra.mxu0 %v78
    %2711 = vmatmul.f32.gmra.mxu0 %v2653
    %v2712 = vpop.f32.mrf.mxu0
    %v2713 = vadd.f32 %v232, %v2712
    %2714 = vdwg.mxu0
    %2715 = vmatpush.msra.mxu0 0.0
    %2716 = vmatpush.msra.mxu0 0.0
    %2717 = vmatpush.msra.mxu0 0.0
    %2718 = vmatpush.msra.mxu0 0.0
    %2719 = vmatpush.msra.mxu0 %v123
    %2720 = vmatpush.msra.mxu0 %v119
    %2721 = vmatpush.msra.mxu0 %v115
    %2722 = vmatpush.msra.mxu0 %v111
    %2723 = vmatpush.msra.mxu0 %v107
    %2724 = vmatpush.msra.mxu0 %v103
    %2725 = vmatpush.msra.mxu0 %v99
    %2726 = vmatpush.msra.mxu0 %v95
    %2727 = vmatpush.msra.mxu0 %v91
    %2728 = vmatpush.msra.mxu0 %v87
    %2729 = vmatpush.msra.mxu0 %v83
    %2730 = vmatpush.msra.mxu0 %v79
    %2731 = vmatmul.f32.gmra.mxu0 %v2653
    %v2732 = vpop.f32.mrf.mxu0
    %v2733 = vadd.f32 %v233, %v2732
    %2734 = vdwg.mxu0
    %v2735 = vxor.u32 %v2673, 2147483648
    %v2736 = vmul.f32 %v2735, 1.442695
    %v2737 = vpow.pop %v2736
    %v2738 = vadd.f32 %v2737, 1.0
    %v2739 = vrcp.pop %v2738
    %v2740 = vmul.f32 %v2738, %v2739
    %v2741 = vsub.f32 1.0, %v2740
    %v2742 = vmul.f32 %v2739, %v2741
    %v2743 = vadd.f32 %v2739, %v2742
    %vm2744 = vweird.f32 %v2738
    %vm2745 = vweird.f32 %v2739
    %vm2746 = vmor %vm2744, %vm2745
    %v2747 = vsel %vm2746, %v2739, %v2743
    %v2748 = vand.u32 2147483647, %v2738
    %vm2749 = vcmp.eq.f32.partialorder %v2748, 8.507059e+37
    %v2750 = vand.u32 %v2738, 2147483648
    %v2751 = vor.u32 1.1754944e-38, %v2750
    %v2752 = vsel %vm2749, %v2751, %v2747
    %v2753 = vmul.f32 1.0, %v2752
    %v2754 = vxor.u32 %v2693, 2147483648
    %v2755 = vmul.f32 %v2754, 1.442695
    %v2756 = vpow.pop %v2755
    %v2757 = vadd.f32 %v2756, 1.0
    %v2758 = vrcp.pop %v2757
    %v2759 = vmul.f32 %v2757, %v2758
    %v2760 = vsub.f32 1.0, %v2759
    %v2761 = vmul.f32 %v2758, %v2760
    %v2762 = vadd.f32 %v2758, %v2761
    %vm2763 = vweird.f32 %v2757
    %vm2764 = vweird.f32 %v2758
    %vm2765 = vmor %vm2763, %vm2764
    %v2766 = vsel %vm2765, %v2758, %v2762
    %v2767 = vand.u32 2147483647, %v2757
    %vm2768 = vcmp.eq.f32.partialorder %v2767, 8.507059e+37
    %v2769 = vand.u32 %v2757, 2147483648
    %v2770 = vor.u32 1.1754944e-38, %v2769
    %v2771 = vsel %vm2768, %v2770, %v2766
    %v2772 = vmul.f32 1.0, %v2771
    %v2773 = vtanh.pop %v2713
    %v2774 = vxor.u32 %v2733, 2147483648
    %v2775 = vmul.f32 %v2774, 1.442695
    %v2776 = vpow.pop %v2775
    %v2777 = vadd.f32 %v2776, 1.0
    %v2778 = vrcp.pop %v2777
    %v2779 = vmul.f32 %v2777, %v2778
    %v2780 = vsub.f32 1.0, %v2779
    %v2781 = vmul.f32 %v2778, %v2780
    %v2782 = vadd.f32 %v2778, %v2781
    %vm2783 = vweird.f32 %v2777
    %vm2784 = vweird.f32 %v2778
    %vm2785 = vmor %vm2783, %vm2784
    %v2786 = vsel %vm2785, %v2778, %v2782
    %v2787 = vand.u32 2147483647, %v2777
    %vm2788 = vcmp.eq.f32.partialorder %v2787, 8.507059e+37
    %v2789 = vand.u32 %v2777, 2147483648
    %v2790 = vor.u32 1.1754944e-38, %v2789
    %v2791 = vsel %vm2788, %v2790, %v2786
    %v2792 = vmul.f32 1.0, %v2791
    %v2793 = vmul.f32 %v2772, %v2472
    %v2794 = vmul.f32 %v2753, %v2773
    %v2795 = vadd.f32 %v2793, %v2794
    %v2796 = vtanh.pop %v2795
    %v2797 = vmul.f32 %v2792, %v2796
    %v2799 = vsel %vm536, %v2797, 0
    %2801 = vmatpush.msra.mxu0 0.0
    %2802 = vmatpush.msra.mxu0 0.0
    %2803 = vmatpush.msra.mxu0 0.0
    %2804 = vmatpush.msra.mxu0 0.0
    %2805 = vmatpush.msra.mxu0 0.0
    %2806 = vmatpush.msra.mxu0 0.0
    %2807 = vmatpush.msra.mxu0 0.0
    %2808 = vmatpush.msra.mxu0 0.0
    %2809 = vmatpush.msra.mxu0 %v133
    %2810 = vmatpush.msra.mxu0 %v132
    %2811 = vmatpush.msra.mxu0 %v131
    %2812 = vmatpush.msra.mxu0 %v130
    %2813 = vmatpush.msra.mxu0 %v129
    %2814 = vmatpush.msra.mxu0 %v128
    %2815 = vmatpush.msra.mxu0 %v127
    %2816 = vmatpush.msra.mxu0 %v126
    %2817 = vmatmul.f32.gmra.mxu0 %v2799
    %v2818 = vpop.f32.mrf.mxu0
    %v2819 = vadd.f32 0.0, %v2818
    %2820 = vdwg.mxu0
    %2822 = vrot.lane.b32.xlu0 %v881, 1
    %v2823 = vpop.permute.xlu0 %2822
    %2826 = vrot.lane.b32.xlu0 %v1204, 2
    %v2827 = vpop.permute.xlu0 %2826
    %2830 = vrot.lane.b32.xlu0 %v1527, 3
    %v2831 = vpop.permute.xlu0 %2830
    %2834 = vrot.lane.b32.xlu0 %v1850, 4
    %v2835 = vpop.permute.xlu0 %2834
    %2838 = vrot.lane.b32.xlu0 %v2173, 5
    %v2839 = vpop.permute.xlu0 %2838
    %2842 = vrot.lane.b32.xlu0 %v2496, 6
    %v2843 = vpop.permute.xlu0 %2842
    %2846 = vrot.lane.b32.xlu0 %v2819, 7
    %v2847 = vpop.permute.xlu0 %2846
    %vm2849 = vcmask 7168
    %v2850 = vsel %vm2849, %v558, %v2823
    %vm2851 = vcmask 15360
    %v2852 = vsel %vm2851, %v2850, %v2827
    %vm2853 = vcmask 23552
    %v2854 = vsel %vm2853, %v2852, %v2831
    %vm2855 = vcmask 31744
    %v2856 = vsel %vm2855, %v2854, %v2835
    %vm2857 = vcmask 39936
    %v2858 = vsel %vm2857, %v2856, %v2839
    %vm2859 = vcmask 48128
    %v2860 = vsel %vm2859, %v2858, %v2843
    %vm2861 = vcmask 56320
    %v2862 = vsel %vm2861, %v2860, %v2847
    %v2863 = vadd.f32 %v2862, %v134
    %vm2864 = vcmask 58368
    %2865 = vst.msk [vmem:[#allocation7] sm:$0x3] %vm2864, %v2863
    // Predicated region
    $region18: #{decoder_forward.1} parent=1 // pred_check
      _
    $region19: #{decoder_forward.1} parent=1 // pred_check_branch
      %2867 = sbr.rel (0) target = $region21
    $region20: #{decoder_forward.1} parent=1 // pred_region
      %2869 = vsyncadd [#allocation4], 0
      %s2871 = sshll.u32 [#allocation7], 4
      %s2872 = int_to_ptr.vmem [resolvable:$true] %s2871
      %s2873 = sshll.u32 %s2, 4
      %s2874 = int_to_ptr.hbm [resolvable:$true] %s2873
      %2876 = dma.vmem_to_hbm [thread:$0]  %s2872, 32, %s2874, [#allocation4]
    $region21: #{decoder_forward.1} parent=1 // pred_fallthru
      _
    // Predicated region
    $region22: #{decoder_forward.1} parent=1 // pred_check
      _
    $region23: #{decoder_forward.1} parent=1 // pred_check_branch
      %2878 = sbr.rel (0) target = $region25
    $region24: #{decoder_forward.1} parent=1 // pred_region
      %2880 = dma.done [#allocation4], 32
    $region25: #{decoder_forward.1} parent=1 // pred_fallthru
      _
    %2881 = vsyncpa [#allocation3], 1
    %2882 = vsyncpa [#allocation6], 1
    %2883 = vsyncpa [#allocation4], 1

</llo_original>
